<compile_context>
chip_gen: v7x
topology: tpu7x:2x2x1
jax: 0.10.0
libtpu: 0.0.40
codegen_flags: <defaults>
</compile_context>

<pallas_src>
import functools

import jax
import jax.numpy as jnp
import numpy as np
from jax.experimental import pallas as pl
from jax.experimental.pallas import tpu as pltpu

VMEM_SPEC = pl.BlockSpec(memory_space=pltpu.MemorySpace.VMEM)
NUM_CLASSES = 100


# ----------------------------- fused Pallas kernel --------------------------- #

def _lenet_kernel(x_ref, w1_ref, b1_ref, w2_ref, b2_ref,
                  wf1_ref, bf1_ref, wf2_ref, bf2_ref, wf3_ref, bf3_ref,
                  out_ref, p1_ref, p2_ref, f_ref):
    # Row layout: r = b*32 + h.  Input lanes: w*3 + ci (zero padded to 128).
    B = out_ref.shape[0]
    R2 = 32 * B          # conv2 / pool2 working rows
    R1 = R2 + 8          # conv1 / pool1 working rows

    # ---- conv1 + bias + ReLU: accumulate the 5 kh taps on the MXU ----------
    # Output lane layout: (ow % 2)*128 + c*16 + ow//2  (parity blocks for pool).
    acc = jnp.dot(x_ref[pl.ds(0, R1), :], w1_ref[0],
                  preferred_element_type=jnp.float32)
    for kh in range(1, 5):
        acc = acc + jnp.dot(x_ref[pl.ds(kh, R1), :], w1_ref[kh],
                            preferred_element_type=jnp.float32)
    y1 = jnp.maximum(acc + b1_ref[...], 0.0)                    # (R1, 256)

    # ---- maxpool #1 --------------------------------------------------------
    # W direction: elementwise max of the two 128-lane parity blocks.
    p1w = jnp.maximum(y1[:, 0:128], y1[:, 128:256])             # (R1, 128)
    p1_ref[pl.ds(0, R1), :] = p1w
    p1_ref[pl.ds(R1, 8), :] = jnp.zeros((8, 128), jnp.float32)  # clean tail

    # ---- conv2 + bias + ReLU ----------------------------------------------
    # H-direction pool of stage 1 is fused into the tap read (rows r, r+1);
    # pooled rows live at even raw rows, so tap kh reads offset 2*kh.
    # Output lane layout: (ow2 % 2)*128 + d*8 + ow2//2.
    acc2 = None
    for kh in range(5):
        tap = jnp.maximum(p1_ref[pl.ds(2 * kh, R2), :],
                          p1_ref[pl.ds(2 * kh + 1, R2), :])     # (R2, 128)
        d = jnp.dot(tap, w2_ref[kh], preferred_element_type=jnp.float32)
        acc2 = d if acc2 is None else acc2 + d
    y2 = jnp.maximum(acc2 + b2_ref[...], 0.0)                   # (R2, 256)

    # ---- maxpool #2 (W direction via parity blocks) ------------------------
    p2_ref[...] = jnp.maximum(y2[:, 0:128], y2[:, 128:256])     # (R2, 128)

    # ---- flatten: torch (C,H,W) order is baked into wf1 --------------------
    # H-direction pool of stage 2 is fused into the gather (rows r, r+2).
    for b in range(B):
        pieces = []
        for i2 in range(5):
            r = 32 * b + 4 * i2
            pieces.append(jnp.maximum(p2_ref[pl.ds(r, 1), :],
                                      p2_ref[pl.ds(r + 2, 1), :]))   # (1, 128)
        f_ref[pl.ds(b, 1), :] = jnp.concatenate(pieces, axis=1)      # (1, 640)
    f = f_ref[pl.ds(0, B), :]                                        # (B, 640)

    # ---- fc1 -> relu -> fc2 -> relu -> fc3 (fc3 N padded to 128) -----------
    h = jnp.maximum(jnp.dot(f, wf1_ref[...], preferred_element_type=jnp.float32)
                    + bf1_ref[...], 0.0)
    h = jnp.maximum(jnp.dot(h, wf2_ref[...], preferred_element_type=jnp.float32)
                    + bf2_ref[...], 0.0)
    out_ref[...] = (jnp.dot(h, wf3_ref[...], preferred_element_type=jnp.float32)
                    + bf3_ref[...])


# ------------------------- host-side weight repacking ------------------------ #

def pack_params(params):
    """One-time repack of PyTorch-layout params into lane-dense, (8,128)-aligned
    matrices whose column layouts encode the parity-block pooling and the torch
    flatten order."""
    c1w = np.asarray(params["conv1_w"], np.float32)   # (6, 3, 5, 5)
    c1b = np.asarray(params["conv1_b"], np.float32)
    c2w = np.asarray(params["conv2_w"], np.float32)   # (16, 6, 5, 5)
    c2b = np.asarray(params["conv2_b"], np.float32)
    f1w = np.asarray(params["fc1_w"], np.float32)     # (256, 400)
    f1b = np.asarray(params["fc1_b"], np.float32)
    f2w = np.asarray(params["fc2_w"], np.float32)     # (128, 256)
    f2b = np.asarray(params["fc2_b"], np.float32)
    f3w = np.asarray(params["fc3_w"], np.float32)     # (100, 128)
    f3b = np.asarray(params["fc3_b"], np.float32)

    # conv1: rows = w*3 + ci (input lane), cols = (ow%2)*128 + c*16 + ow//2.
    w1 = np.zeros((5, 128, 256), np.float32)
    b1 = np.zeros((1, 256), np.float32)
    for kh in range(5):
        for kw in range(5):
            for ow in range(28):
                rows = (ow + kw) * 3 + np.arange(3)                       # ci
                cols = (ow % 2) * 128 + np.arange(6) * 16 + ow // 2       # c
                w1[kh, rows[:, None], cols[None, :]] = c1w[:, :, kh, kw].T
    for c in range(6):
        for q in range(14):
            b1[0, c * 16 + q] = c1b[c]
            b1[0, 128 + c * 16 + q] = c1b[c]

    # conv2: rows = c*16 + (ow2+kw) (pooled-1 lane), cols = (ow2%2)*128 + d*8 + ow2//2.
    w2 = np.zeros((5, 128, 256), np.float32)
    b2 = np.zeros((1, 256), np.float32)
    for kh in range(5):
        for kw in range(5):
            for ow2 in range(10):
                rows = np.arange(6) * 16 + (ow2 + kw)                     # c
                cols = (ow2 % 2) * 128 + np.arange(16) * 8 + ow2 // 2     # d
                w2[kh, rows[:, None], cols[None, :]] = c2w[:, :, kh, kw].T
    for d in range(16):
        for q in range(5):
            b2[0, d * 8 + q] = c2b[d]
            b2[0, 128 + d * 8 + q] = c2b[d]

    # fc1: row i2*128 + d*8 + j2  <->  torch flatten index d*25 + i2*5 + j2.
    wf1 = np.zeros((640, 256), np.float32)
    for i2 in range(5):
        for j2 in range(5):
            rows = i2 * 128 + np.arange(16) * 8 + j2
            ks = np.arange(16) * 25 + i2 * 5 + j2
            wf1[rows, :] = f1w[:, ks].T
    bf1 = f1b.reshape(1, 256)

    wf2 = np.ascontiguousarray(f2w.T)                  # (256, 128)
    bf2 = f2b.reshape(1, 128)
    wf3 = np.zeros((128, 128), np.float32)
    wf3[:, :NUM_CLASSES] = f3w.T
    bf3 = np.zeros((1, 128), np.float32)
    bf3[0, :NUM_CLASSES] = f3b

    packed = dict(w1=w1, b1=b1, w2=w2, b2=b2, wf1=wf1, bf1=bf1,
                  wf2=wf2, bf2=bf2, wf3=wf3, bf3=bf3)
    return {k: jnp.asarray(v) for k, v in packed.items()}


# ------------------------------- wrapper ------------------------------------- #

@jax.jit
def _lenet_logits(x_nchw, packed):
    B = x_nchw.shape[0]
    R2 = 32 * B
    R1 = R2 + 8
    FB = ((B + 7) // 8) * 8

    # NCHW -> NHWC -> one row per image row, lanes = w*3+ci, padded to 128.
    x = jnp.transpose(x_nchw, (0, 2, 3, 1)).reshape(B * 32, 32 * 3)
    x = jnp.pad(x, ((0, 16), (0, 128 - 96)))           # (B*32 + 16, 128)

    out_p = pl.pallas_call(
        _lenet_kernel,
        out_shape=jax.ShapeDtypeStruct((B, 128), jnp.float32),
        in_specs=[VMEM_SPEC] * 11,
        out_specs=VMEM_SPEC,
        scratch_shapes=[
            pltpu.VMEM((R1 + 8, 128), jnp.float32),    # pooled-W conv1 rows
            pltpu.VMEM((R2, 128), jnp.float32),        # pooled-W conv2 rows
            pltpu.VMEM((FB, 640), jnp.float32),        # flattened features
        ],
    )(x, packed["w1"], packed["b1"], packed["w2"], packed["b2"],
      packed["wf1"], packed["bf1"], packed["wf2"], packed["bf2"],
      packed["wf3"], packed["bf3"])
    return out_p[:, :NUM_CLASSES]


def lenet_forward(x_nchw, packed):
    B = x_nchw.shape[0]
    out = _lenet_logits(x_nchw, packed)
    shape_dict = {
        1: [B, 6, 14, 14],
        2: [B, 16, 5, 5],
        3: [B, 16 * 5 * 5],
        4: [B, int(packed["wf1"].shape[1])],
        5: [B, int(packed["wf2"].shape[1])],
        6: [B, NUM_CLASSES],
    }
    return out, shape_dict


# --------------------------- params & reference ------------------------------ #

def init_params(key):
    # PyTorch-like uniform(-1/sqrt(fan_in), 1/sqrt(fan_in)) init, deterministic.
    def unif(k, shape, fan_in):
        bound = 1.0 / (fan_in ** 0.5)
        return jax.random.uniform(k, shape, jnp.float32, -bound, bound)

    ks = jax.random.split(key, 10)
    return {
        "conv1_w": unif(ks[0], (6, 3, 5, 5), 3 * 25),
        "conv1_b": unif(ks[1], (6,), 3 * 25),
        "conv2_w": unif(ks[2], (16, 6, 5, 5), 6 * 25),
        "conv2_b": unif(ks[3], (16,), 6 * 25),
        "fc1_w":  unif(ks[4], (256, 400), 400),
        "fc1_b":  unif(ks[5], (256,), 400),
        "fc2_w":  unif(ks[6], (128, 256), 256),
        "fc2_b":  unif(ks[7], (128,), 256),
        "fc3_w":  unif(ks[8], (100, 128), 128),
        "fc3_b":  unif(ks[9], (100,), 128),
    }


def reference_forward(x_nchw, params):
    """Pure-JAX reference (same math as the PyTorch module) for self-checking."""
    hp = jax.lax.Precision.HIGHEST
    x = jnp.transpose(x_nchw, (0, 2, 3, 1))                       # NHWC

    def conv_relu(x, w, b):
        B, H, W, C = x.shape
        k = w.shape[2]
        OH, OW = H - k + 1, W - k + 1
        cols = [x[:, i:i + OH, j:j + OW, :] for i in range(k) for j in range(k)]
        p = jnp.stack(cols, axis=3).reshape(B, OH, OW, k * k * C)
        wm = jnp.transpose(w, (2, 3, 1, 0)).reshape(k * k * C, -1)
        return jnp.maximum(jnp.einsum('bhwk,kn->bhwn', p, wm, precision=hp) + b, 0.0)

    def pool(x):
        B, H, W, C = x.shape
        return x.reshape(B, H // 2, 2, W // 2, 2, C).max(axis=(2, 4))

    x = pool(conv_relu(x, params["conv1_w"], params["conv1_b"]))
    x = pool(conv_relu(x, params["conv2_w"], params["conv2_b"]))
    f = jnp.transpose(x, (0, 3, 1, 2)).reshape(x.shape[0], -1)    # torch flatten
    h = jnp.maximum(jnp.dot(f, params["fc1_w"].T, precision=hp) + params["fc1_b"], 0.0)
    h = jnp.maximum(jnp.dot(h, params["fc2_w"].T, precision=hp) + params["fc2_b"], 0.0)
    return jnp.dot(h, params["fc3_w"].T, precision=hp) + params["fc3_b"]


# --------------------------------- main -------------------------------------- #

if __name__ == "__main__":
    key = jax.random.PRNGKey(0)
    kx, kp = jax.random.split(key)
    # LeNet's hard-coded view(-1, 16*5*5) requires 3x32x32 inputs; batch=2.
    x = jax.random.normal(kx, (2, 3, 32, 32), jnp.float32)
    params = init_params(kp)
    packed = pack_params(params)

    out, shape_dict = lenet_forward(x, packed)
    out = jax.block_until_ready(out)

    assert out.shape == (2, 100) and out.dtype == jnp.float32
    assert shape_dict[1] == [2, 6, 14, 14]
    assert shape_dict[2] == [2, 16, 5, 5]
    assert shape_dict[3] == [2, 400]
    assert shape_dict[6] == [2, 100]

    ref = jax.block_until_ready(reference_forward(x, params))
    err = float(jnp.max(jnp.abs(out - ref)))
    assert err < 5e-2, f"kernel/reference mismatch: max abs err = {err}"

    print("KERNEL_OK")
</pallas_src>

<mosaic_0001>
module attributes {stable_mosaic.version = 11 : i64} {
  func.func @_lenet_kernel(%arg0: memref<80x128xf32, #tpu.memory_space<vmem>>, %arg1: memref<5x128x256xf32, #tpu.memory_space<vmem>>, %arg2: memref<1x256xf32, #tpu.memory_space<vmem>>, %arg3: memref<5x128x256xf32, #tpu.memory_space<vmem>>, %arg4: memref<1x256xf32, #tpu.memory_space<vmem>>, %arg5: memref<640x256xf32, #tpu.memory_space<vmem>>, %arg6: memref<1x256xf32, #tpu.memory_space<vmem>>, %arg7: memref<256x128xf32, #tpu.memory_space<vmem>>, %arg8: memref<1x128xf32, #tpu.memory_space<vmem>>, %arg9: memref<128x128xf32, #tpu.memory_space<vmem>>, %arg10: memref<1x128xf32, #tpu.memory_space<vmem>>, %arg11: memref<2x128xf32, #tpu.memory_space<vmem>>, %arg12: memref<80x128xf32, #tpu.memory_space<vmem>>, %arg13: memref<64x128xf32, #tpu.memory_space<vmem>>, %arg14: memref<8x640xf32, #tpu.memory_space<vmem>>) attributes {dimension_semantics = [], scalar_prefetch = 0 : i64, scratch_operands = 3 : i64, tpu.core_type = #tpu.core_type<tc>} {
    %c0 = arith.constant 0 : index
    %c0_0 = arith.constant 0 : index
    %0 = vector.load %arg0[%c0, %c0_0] : memref<80x128xf32, #tpu.memory_space<vmem>>, vector<72x128xf32>
    %c0_1 = arith.constant 0 : index
    %c0_2 = arith.constant 0 : index
    %c0_3 = arith.constant 0 : index
    %1 = vector.load %arg1[%c0_1, %c0_2, %c0_3] : memref<5x128x256xf32, #tpu.memory_space<vmem>>, vector<1x128x256xf32>
    %2 = vector.shape_cast %1 : vector<1x128x256xf32> to vector<128x256xf32>
    %cst = arith.constant dense<0.000000e+00> : vector<72x256xf32>
    %3 = tpu.matmul %0, %2, %cst {dimension_numbers = #tpu.dot_dimension_numbers<[1], [0], [0], [1], [0, 0, 1, 1], [], []>} : vector<72x128xf32>, vector<128x256xf32>, vector<72x256xf32> -> vector<72x256xf32>
    %c1 = arith.constant 1 : index
    %c0_4 = arith.constant 0 : index
    %4 = vector.load %arg0[%c1, %c0_4] : memref<80x128xf32, #tpu.memory_space<vmem>>, vector<72x128xf32>
    %c1_5 = arith.constant 1 : index
    %c0_6 = arith.constant 0 : index
    %c0_7 = arith.constant 0 : index
    %5 = vector.load %arg1[%c1_5, %c0_6, %c0_7] : memref<5x128x256xf32, #tpu.memory_space<vmem>>, vector<1x128x256xf32>
    %6 = vector.shape_cast %5 : vector<1x128x256xf32> to vector<128x256xf32>
    %cst_8 = arith.constant dense<0.000000e+00> : vector<72x256xf32>
    %7 = tpu.matmul %4, %6, %cst_8 {dimension_numbers = #tpu.dot_dimension_numbers<[1], [0], [0], [1], [0, 0, 1, 1], [], []>} : vector<72x128xf32>, vector<128x256xf32>, vector<72x256xf32> -> vector<72x256xf32>
    %8 = arith.addf %3, %7 : vector<72x256xf32>
    %c2 = arith.constant 2 : index
    %c0_9 = arith.constant 0 : index
    %9 = vector.load %arg0[%c2, %c0_9] : memref<80x128xf32, #tpu.memory_space<vmem>>, vector<72x128xf32>
    %c2_10 = arith.constant 2 : index
    %c0_11 = arith.constant 0 : index
    %c0_12 = arith.constant 0 : index
    %10 = vector.load %arg1[%c2_10, %c0_11, %c0_12] : memref<5x128x256xf32, #tpu.memory_space<vmem>>, vector<1x128x256xf32>
    %11 = vector.shape_cast %10 : vector<1x128x256xf32> to vector<128x256xf32>
    %cst_13 = arith.constant dense<0.000000e+00> : vector<72x256xf32>
    %12 = tpu.matmul %9, %11, %cst_13 {dimension_numbers = #tpu.dot_dimension_numbers<[1], [0], [0], [1], [0, 0, 1, 1], [], []>} : vector<72x128xf32>, vector<128x256xf32>, vector<72x256xf32> -> vector<72x256xf32>
    %13 = arith.addf %8, %12 : vector<72x256xf32>
    %c3 = arith.constant 3 : index
    %c0_14 = arith.constant 0 : index
    %14 = vector.load %arg0[%c3, %c0_14] : memref<80x128xf32, #tpu.memory_space<vmem>>, vector<72x128xf32>
    %c3_15 = arith.constant 3 : index
    %c0_16 = arith.constant 0 : index
    %c0_17 = arith.constant 0 : index
    %15 = vector.load %arg1[%c3_15, %c0_16, %c0_17] : memref<5x128x256xf32, #tpu.memory_space<vmem>>, vector<1x128x256xf32>
    %16 = vector.shape_cast %15 : vector<1x128x256xf32> to vector<128x256xf32>
    %cst_18 = arith.constant dense<0.000000e+00> : vector<72x256xf32>
    %17 = tpu.matmul %14, %16, %cst_18 {dimension_numbers = #tpu.dot_dimension_numbers<[1], [0], [0], [1], [0, 0, 1, 1], [], []>} : vector<72x128xf32>, vector<128x256xf32>, vector<72x256xf32> -> vector<72x256xf32>
    %18 = arith.addf %13, %17 : vector<72x256xf32>
    %c4 = arith.constant 4 : index
    %c0_19 = arith.constant 0 : index
    %19 = vector.load %arg0[%c4, %c0_19] : memref<80x128xf32, #tpu.memory_space<vmem>>, vector<72x128xf32>
    %c4_20 = arith.constant 4 : index
    %c0_21 = arith.constant 0 : index
    %c0_22 = arith.constant 0 : index
    %20 = vector.load %arg1[%c4_20, %c0_21, %c0_22] : memref<5x128x256xf32, #tpu.memory_space<vmem>>, vector<1x128x256xf32>
    %21 = vector.shape_cast %20 : vector<1x128x256xf32> to vector<128x256xf32>
    %cst_23 = arith.constant dense<0.000000e+00> : vector<72x256xf32>
    %22 = tpu.matmul %19, %21, %cst_23 {dimension_numbers = #tpu.dot_dimension_numbers<[1], [0], [0], [1], [0, 0, 1, 1], [], []>} : vector<72x128xf32>, vector<128x256xf32>, vector<72x256xf32> -> vector<72x256xf32>
    %23 = arith.addf %18, %22 : vector<72x256xf32>
    %c0_24 = arith.constant 0 : index
    %c0_25 = arith.constant 0 : index
    %24 = vector.load %arg2[%c0_24, %c0_25] : memref<1x256xf32, #tpu.memory_space<vmem>>, vector<1x256xf32>
    %25 = vector.broadcast %24 : vector<1x256xf32> to vector<72x256xf32>
    %26 = arith.addf %23, %25 : vector<72x256xf32>
    %cst_26 = arith.constant 0.000000e+00 : f32
    %27 = vector.broadcast %cst_26 : f32 to vector<72x256xf32>
    %28 = arith.maximumf %26, %27 : vector<72x256xf32>
    %29 = vector.extract_strided_slice %28 {offsets = [0, 0], sizes = [72, 128], strides = [1, 1]} : vector<72x256xf32> to vector<72x128xf32>
    %30 = vector.extract_strided_slice %28 {offsets = [0, 128], sizes = [72, 128], strides = [1, 1]} : vector<72x256xf32> to vector<72x128xf32>
    %31 = arith.maximumf %29, %30 : vector<72x128xf32>
    %c0_27 = arith.constant 0 : index
    %c0_28 = arith.constant 0 : index
    %32 = vector.load %arg12[%c0_27, %c0_28] : memref<80x128xf32, #tpu.memory_space<vmem>>, vector<72x128xf32>
    tpu.vector_store %arg12[%c0_27, %c0_28], %31 {strides = array<i32>} : memref<80x128xf32, #tpu.memory_space<vmem>>, vector<72x128xf32>,
    %cst_29 = arith.constant 0.000000e+00 : f32
    %33 = vector.broadcast %cst_29 : f32 to vector<8x128xf32>
    %c72 = arith.constant 72 : index
    %c0_30 = arith.constant 0 : index
    %34 = vector.load %arg12[%c72, %c0_30] : memref<80x128xf32, #tpu.memory_space<vmem>>, vector<8x128xf32>
    tpu.vector_store %arg12[%c72, %c0_30], %33 {strides = array<i32>} : memref<80x128xf32, #tpu.memory_space<vmem>>, vector<8x128xf32>,
    %c0_31 = arith.constant 0 : index
    %c0_32 = arith.constant 0 : index
    %35 = vector.load %arg12[%c0_31, %c0_32] : memref<80x128xf32, #tpu.memory_space<vmem>>, vector<64x128xf32>
    %c1_33 = arith.constant 1 : index
    %c0_34 = arith.constant 0 : index
    %36 = vector.load %arg12[%c1_33, %c0_34] : memref<80x128xf32, #tpu.memory_space<vmem>>, vector<64x128xf32>
    %37 = arith.maximumf %35, %36 : vector<64x128xf32>
    %c0_35 = arith.constant 0 : index
    %c0_36 = arith.constant 0 : index
    %c0_37 = arith.constant 0 : index
    %38 = vector.load %arg3[%c0_35, %c0_36, %c0_37] : memref<5x128x256xf32, #tpu.memory_space<vmem>>, vector<1x128x256xf32>
    %39 = vector.shape_cast %38 : vector<1x128x256xf32> to vector<128x256xf32>
    %cst_38 = arith.constant dense<0.000000e+00> : vector<64x256xf32>
    %40 = tpu.matmul %37, %39, %cst_38 {dimension_numbers = #tpu.dot_dimension_numbers<[1], [0], [0], [1], [0, 0, 1, 1], [], []>} : vector<64x128xf32>, vector<128x256xf32>, vector<64x256xf32> -> vector<64x256xf32>
    %c2_39 = arith.constant 2 : index
    %c0_40 = arith.constant 0 : index
    %41 = vector.load %arg12[%c2_39, %c0_40] : memref<80x128xf32, #tpu.memory_space<vmem>>, vector<64x128xf32>
    %c3_41 = arith.constant 3 : index
    %c0_42 = arith.constant 0 : index
    %42 = vector.load %arg12[%c3_41, %c0_42] : memref<80x128xf32, #tpu.memory_space<vmem>>, vector<64x128xf32>
    %43 = arith.maximumf %41, %42 : vector<64x128xf32>
    %c1_43 = arith.constant 1 : index
    %c0_44 = arith.constant 0 : index
    %c0_45 = arith.constant 0 : index
    %44 = vector.load %arg3[%c1_43, %c0_44, %c0_45] : memref<5x128x256xf32, #tpu.memory_space<vmem>>, vector<1x128x256xf32>
    %45 = vector.shape_cast %44 : vector<1x128x256xf32> to vector<128x256xf32>
    %cst_46 = arith.constant dense<0.000000e+00> : vector<64x256xf32>
    %46 = tpu.matmul %43, %45, %cst_46 {dimension_numbers = #tpu.dot_dimension_numbers<[1], [0], [0], [1], [0, 0, 1, 1], [], []>} : vector<64x128xf32>, vector<128x256xf32>, vector<64x256xf32> -> vector<64x256xf32>
    %47 = arith.addf %40, %46 : vector<64x256xf32>
    %c4_47 = arith.constant 4 : index
    %c0_48 = arith.constant 0 : index
    %48 = vector.load %arg12[%c4_47, %c0_48] : memref<80x128xf32, #tpu.memory_space<vmem>>, vector<64x128xf32>
    %c5 = arith.constant 5 : index
    %c0_49 = arith.constant 0 : index
    %49 = vector.load %arg12[%c5, %c0_49] : memref<80x128xf32, #tpu.memory_space<vmem>>, vector<64x128xf32>
    %50 = arith.maximumf %48, %49 : vector<64x128xf32>
    %c2_50 = arith.constant 2 : index
    %c0_51 = arith.constant 0 : index
    %c0_52 = arith.constant 0 : index
    %51 = vector.load %arg3[%c2_50, %c0_51, %c0_52] : memref<5x128x256xf32, #tpu.memory_space<vmem>>, vector<1x128x256xf32>
    %52 = vector.shape_cast %51 : vector<1x128x256xf32> to vector<128x256xf32>
    %cst_53 = arith.constant dense<0.000000e+00> : vector<64x256xf32>
    %53 = tpu.matmul %50, %52, %cst_53 {dimension_numbers = #tpu.dot_dimension_numbers<[1], [0], [0], [1], [0, 0, 1, 1], [], []>} : vector<64x128xf32>, vector<128x256xf32>, vector<64x256xf32> -> vector<64x256xf32>
    %54 = arith.addf %47, %53 : vector<64x256xf32>
    %c6 = arith.constant 6 : index
    %c0_54 = arith.constant 0 : index
    %55 = vector.load %arg12[%c6, %c0_54] : memref<80x128xf32, #tpu.memory_space<vmem>>, vector<64x128xf32>
    %c7 = arith.constant 7 : index
    %c0_55 = arith.constant 0 : index
    %56 = vector.load %arg12[%c7, %c0_55] : memref<80x128xf32, #tpu.memory_space<vmem>>, vector<64x128xf32>
    %57 = arith.maximumf %55, %56 : vector<64x128xf32>
    %c3_56 = arith.constant 3 : index
    %c0_57 = arith.constant 0 : index
    %c0_58 = arith.constant 0 : index
    %58 = vector.load %arg3[%c3_56, %c0_57, %c0_58] : memref<5x128x256xf32, #tpu.memory_space<vmem>>, vector<1x128x256xf32>
    %59 = vector.shape_cast %58 : vector<1x128x256xf32> to vector<128x256xf32>
    %cst_59 = arith.constant dense<0.000000e+00> : vector<64x256xf32>
    %60 = tpu.matmul %57, %59, %cst_59 {dimension_numbers = #tpu.dot_dimension_numbers<[1], [0], [0], [1], [0, 0, 1, 1], [], []>} : vector<64x128xf32>, vector<128x256xf32>, vector<64x256xf32> -> vector<64x256xf32>
    %61 = arith.addf %54, %60 : vector<64x256xf32>
    %c8 = arith.constant 8 : index
    %c0_60 = arith.constant 0 : index
    %62 = vector.load %arg12[%c8, %c0_60] : memref<80x128xf32, #tpu.memory_space<vmem>>, vector<64x128xf32>
    %c9 = arith.constant 9 : index
    %c0_61 = arith.constant 0 : index
    %63 = vector.load %arg12[%c9, %c0_61] : memref<80x128xf32, #tpu.memory_space<vmem>>, vector<64x128xf32>
    %64 = arith.maximumf %62, %63 : vector<64x128xf32>
    %c4_62 = arith.constant 4 : index
    %c0_63 = arith.constant 0 : index
    %c0_64 = arith.constant 0 : index
    %65 = vector.load %arg3[%c4_62, %c0_63, %c0_64] : memref<5x128x256xf32, #tpu.memory_space<vmem>>, vector<1x128x256xf32>
    %66 = vector.shape_cast %65 : vector<1x128x256xf32> to vector<128x256xf32>
    %cst_65 = arith.constant dense<0.000000e+00> : vector<64x256xf32>
    %67 = tpu.matmul %64, %66, %cst_65 {dimension_numbers = #tpu.dot_dimension_numbers<[1], [0], [0], [1], [0, 0, 1, 1], [], []>} : vector<64x128xf32>, vector<128x256xf32>, vector<64x256xf32> -> vector<64x256xf32>
    %68 = arith.addf %61, %67 : vector<64x256xf32>
    %c0_66 = arith.constant 0 : index
    %c0_67 = arith.constant 0 : index
    %69 = vector.load %arg4[%c0_66, %c0_67] : memref<1x256xf32, #tpu.memory_space<vmem>>, vector<1x256xf32>
    %70 = vector.broadcast %69 : vector<1x256xf32> to vector<64x256xf32>
    %71 = arith.addf %68, %70 : vector<64x256xf32>
    %cst_68 = arith.constant 0.000000e+00 : f32
    %72 = vector.broadcast %cst_68 : f32 to vector<64x256xf32>
    %73 = arith.maximumf %71, %72 : vector<64x256xf32>
    %74 = vector.extract_strided_slice %73 {offsets = [0, 0], sizes = [64, 128], strides = [1, 1]} : vector<64x256xf32> to vector<64x128xf32>
    %75 = vector.extract_strided_slice %73 {offsets = [0, 128], sizes = [64, 128], strides = [1, 1]} : vector<64x256xf32> to vector<64x128xf32>
    %76 = arith.maximumf %74, %75 : vector<64x128xf32>
    %c0_69 = arith.constant 0 : index
    %c0_70 = arith.constant 0 : index
    %77 = vector.load %arg13[%c0_69, %c0_70] : memref<64x128xf32, #tpu.memory_space<vmem>>, vector<64x128xf32>
    tpu.vector_store %arg13[%c0_69, %c0_70], %76 {strides = array<i32>} : memref<64x128xf32, #tpu.memory_space<vmem>>, vector<64x128xf32>,
    %c0_71 = arith.constant 0 : index
    %c0_72 = arith.constant 0 : index
    %78 = vector.load %arg13[%c0_71, %c0_72] : memref<64x128xf32, #tpu.memory_space<vmem>>, vector<1x128xf32>
    %c2_73 = arith.constant 2 : index
    %c0_74 = arith.constant 0 : index
    %79 = vector.load %arg13[%c2_73, %c0_74] : memref<64x128xf32, #tpu.memory_space<vmem>>, vector<1x128xf32>
    %80 = arith.maximumf %78, %79 : vector<1x128xf32>
    %c4_75 = arith.constant 4 : index
    %c0_76 = arith.constant 0 : index
    %81 = vector.load %arg13[%c4_75, %c0_76] : memref<64x128xf32, #tpu.memory_space<vmem>>, vector<1x128xf32>
    %c6_77 = arith.constant 6 : index
    %c0_78 = arith.constant 0 : index
    %82 = vector.load %arg13[%c6_77, %c0_78] : memref<64x128xf32, #tpu.memory_space<vmem>>, vector<1x128xf32>
    %83 = arith.maximumf %81, %82 : vector<1x128xf32>
    %c8_79 = arith.constant 8 : index
    %c0_80 = arith.constant 0 : index
    %84 = vector.load %arg13[%c8_79, %c0_80] : memref<64x128xf32, #tpu.memory_space<vmem>>, vector<1x128xf32>
    %c10 = arith.constant 10 : index
    %c0_81 = arith.constant 0 : index
    %85 = vector.load %arg13[%c10, %c0_81] : memref<64x128xf32, #tpu.memory_space<vmem>>, vector<1x128xf32>
    %86 = arith.maximumf %84, %85 : vector<1x128xf32>
    %c12 = arith.constant 12 : index
    %c0_82 = arith.constant 0 : index
    %87 = vector.load %arg13[%c12, %c0_82] : memref<64x128xf32, #tpu.memory_space<vmem>>, vector<1x128xf32>
    %c14 = arith.constant 14 : index
    %c0_83 = arith.constant 0 : index
    %88 = vector.load %arg13[%c14, %c0_83] : memref<64x128xf32, #tpu.memory_space<vmem>>, vector<1x128xf32>
    %89 = arith.maximumf %87, %88 : vector<1x128xf32>
    %c16 = arith.constant 16 : index
    %c0_84 = arith.constant 0 : index
    %90 = vector.load %arg13[%c16, %c0_84] : memref<64x128xf32, #tpu.memory_space<vmem>>, vector<1x128xf32>
    %c18 = arith.constant 18 : index
    %c0_85 = arith.constant 0 : index
    %91 = vector.load %arg13[%c18, %c0_85] : memref<64x128xf32, #tpu.memory_space<vmem>>, vector<1x128xf32>
    %92 = arith.maximumf %90, %91 : vector<1x128xf32>
    %93 = tpu.concatenate %80, %83, %86, %89, %92 in 1 : vector<1x128xf32>, vector<1x128xf32>, vector<1x128xf32>, vector<1x128xf32>, vector<1x128xf32> -> vector<1x640xf32>
    %c0_86 = arith.constant 0 : index
    %c0_87 = arith.constant 0 : index
    %94 = vector.load %arg14[%c0_86, %c0_87] : memref<8x640xf32, #tpu.memory_space<vmem>>, vector<1x640xf32>
    tpu.vector_store %arg14[%c0_86, %c0_87], %93 {strides = array<i32>} : memref<8x640xf32, #tpu.memory_space<vmem>>, vector<1x640xf32>,
    %c32 = arith.constant 32 : index
    %c0_88 = arith.constant 0 : index
    %95 = vector.load %arg13[%c32, %c0_88] : memref<64x128xf32, #tpu.memory_space<vmem>>, vector<1x128xf32>
    %c34 = arith.constant 34 : index
    %c0_89 = arith.constant 0 : index
    %96 = vector.load %arg13[%c34, %c0_89] : memref<64x128xf32, #tpu.memory_space<vmem>>, vector<1x128xf32>
    %97 = arith.maximumf %95, %96 : vector<1x128xf32>
    %c36 = arith.constant 36 : index
    %c0_90 = arith.constant 0 : index
    %98 = vector.load %arg13[%c36, %c0_90] : memref<64x128xf32, #tpu.memory_space<vmem>>, vector<1x128xf32>
    %c38 = arith.constant 38 : index
    %c0_91 = arith.constant 0 : index
    %99 = vector.load %arg13[%c38, %c0_91] : memref<64x128xf32, #tpu.memory_space<vmem>>, vector<1x128xf32>
    %100 = arith.maximumf %98, %99 : vector<1x128xf32>
    %c40 = arith.constant 40 : index
    %c0_92 = arith.constant 0 : index
    %101 = vector.load %arg13[%c40, %c0_92] : memref<64x128xf32, #tpu.memory_space<vmem>>, vector<1x128xf32>
    %c42 = arith.constant 42 : index
    %c0_93 = arith.constant 0 : index
    %102 = vector.load %arg13[%c42, %c0_93] : memref<64x128xf32, #tpu.memory_space<vmem>>, vector<1x128xf32>
    %103 = arith.maximumf %101, %102 : vector<1x128xf32>
    %c44 = arith.constant 44 : index
    %c0_94 = arith.constant 0 : index
    %104 = vector.load %arg13[%c44, %c0_94] : memref<64x128xf32, #tpu.memory_space<vmem>>, vector<1x128xf32>
    %c46 = arith.constant 46 : index
    %c0_95 = arith.constant 0 : index
    %105 = vector.load %arg13[%c46, %c0_95] : memref<64x128xf32, #tpu.memory_space<vmem>>, vector<1x128xf32>
    %106 = arith.maximumf %104, %105 : vector<1x128xf32>
    %c48 = arith.constant 48 : index
    %c0_96 = arith.constant 0 : index
    %107 = vector.load %arg13[%c48, %c0_96] : memref<64x128xf32, #tpu.memory_space<vmem>>, vector<1x128xf32>
    %c50 = arith.constant 50 : index
    %c0_97 = arith.constant 0 : index
    %108 = vector.load %arg13[%c50, %c0_97] : memref<64x128xf32, #tpu.memory_space<vmem>>, vector<1x128xf32>
    %109 = arith.maximumf %107, %108 : vector<1x128xf32>
    %110 = tpu.concatenate %97, %100, %103, %106, %109 in 1 : vector<1x128xf32>, vector<1x128xf32>, vector<1x128xf32>, vector<1x128xf32>, vector<1x128xf32> -> vector<1x640xf32>
    %c1_98 = arith.constant 1 : index
    %c0_99 = arith.constant 0 : index
    %111 = vector.load %arg14[%c1_98, %c0_99] : memref<8x640xf32, #tpu.memory_space<vmem>>, vector<1x640xf32>
    tpu.vector_store %arg14[%c1_98, %c0_99], %110 {strides = array<i32>} : memref<8x640xf32, #tpu.memory_space<vmem>>, vector<1x640xf32>,
    %c0_100 = arith.constant 0 : index
    %c0_101 = arith.constant 0 : index
    %112 = vector.load %arg14[%c0_100, %c0_101] : memref<8x640xf32, #tpu.memory_space<vmem>>, vector<2x640xf32>
    %c0_102 = arith.constant 0 : index
    %c0_103 = arith.constant 0 : index
    %113 = vector.load %arg5[%c0_102, %c0_103] : memref<640x256xf32, #tpu.memory_space<vmem>>, vector<640x256xf32>
    %cst_104 = arith.constant dense<0.000000e+00> : vector<2x256xf32>
    %114 = tpu.matmul %112, %113, %cst_104 {dimension_numbers = #tpu.dot_dimension_numbers<[1], [0], [0], [1], [0, 0, 1, 1], [], []>} : vector<2x640xf32>, vector<640x256xf32>, vector<2x256xf32> -> vector<2x256xf32>
    %c0_105 = arith.constant 0 : index
    %c0_106 = arith.constant 0 : index
    %115 = vector.load %arg6[%c0_105, %c0_106] : memref<1x256xf32, #tpu.memory_space<vmem>>, vector<1x256xf32>
    %116 = vector.broadcast %115 : vector<1x256xf32> to vector<2x256xf32>
    %117 = arith.addf %114, %116 : vector<2x256xf32>
    %cst_107 = arith.constant 0.000000e+00 : f32
    %118 = vector.broadcast %cst_107 : f32 to vector<2x256xf32>
    %119 = arith.maximumf %117, %118 : vector<2x256xf32>
    %c0_108 = arith.constant 0 : index
    %c0_109 = arith.constant 0 : index
    %120 = vector.load %arg7[%c0_108, %c0_109] : memref<256x128xf32, #tpu.memory_space<vmem>>, vector<256x128xf32>
    %cst_110 = arith.constant dense<0.000000e+00> : vector<2x128xf32>
    %121 = tpu.matmul %119, %120, %cst_110 {dimension_numbers = #tpu.dot_dimension_numbers<[1], [0], [0], [1], [0, 0, 1, 1], [], []>} : vector<2x256xf32>, vector<256x128xf32>, vector<2x128xf32> -> vector<2x128xf32>
    %c0_111 = arith.constant 0 : index
    %c0_112 = arith.constant 0 : index
    %122 = vector.load %arg8[%c0_111, %c0_112] : memref<1x128xf32, #tpu.memory_space<vmem>>, vector<1x128xf32>
    %123 = vector.broadcast %122 : vector<1x128xf32> to vector<2x128xf32>
    %124 = arith.addf %121, %123 : vector<2x128xf32>
    %cst_113 = arith.constant 0.000000e+00 : f32
    %125 = vector.broadcast %cst_113 : f32 to vector<2x128xf32>
    %126 = arith.maximumf %124, %125 : vector<2x128xf32>
    %c0_114 = arith.constant 0 : index
    %c0_115 = arith.constant 0 : index
    %127 = vector.load %arg9[%c0_114, %c0_115] : memref<128x128xf32, #tpu.memory_space<vmem>>, vector<128x128xf32>
    %cst_116 = arith.constant dense<0.000000e+00> : vector<2x128xf32>
    %128 = tpu.matmul %126, %127, %cst_116 {dimension_numbers = #tpu.dot_dimension_numbers<[1], [0], [0], [1], [0, 0, 1, 1], [], []>} : vector<2x128xf32>, vector<128x128xf32>, vector<2x128xf32> -> vector<2x128xf32>
    %c0_117 = arith.constant 0 : index
    %c0_118 = arith.constant 0 : index
    %129 = vector.load %arg10[%c0_117, %c0_118] : memref<1x128xf32, #tpu.memory_space<vmem>>, vector<1x128xf32>
    %130 = vector.broadcast %129 : vector<1x128xf32> to vector<2x128xf32>
    %131 = arith.addf %128, %130 : vector<2x128xf32>
    %c0_119 = arith.constant 0 : index
    %c0_120 = arith.constant 0 : index
    %132 = vector.load %arg11[%c0_119, %c0_120] : memref<2x128xf32, #tpu.memory_space<vmem>>, vector<2x128xf32>
    tpu.vector_store %arg11[%c0_119, %c0_120], %131 {strides = array<i32>} : memref<2x128xf32, #tpu.memory_space<vmem>>, vector<2x128xf32>,
    return
  }
}

</mosaic_0001>

<llo_original>
// kernel: _lenet_logits.1
$region0: #{_lenet_logits.1}
  #allocation0 [shape = 'u32[]', space=smem, size = 0x4, offset = 0x4, fixed_abs, tag = 'smem constant byte address 0x4 - core index']
  #allocation1 [shape = 'u32[144,128]{1,0:T(1,128)}', space=vmem, size = 0x12000, scoped, tag = 'internal scratch']
  #allocation2 [shape = 'f32[80,128]{1,0:T(8,128)}', space=vmem, size = 0xa000, scoped, tag = 'scratch operand']
  #allocation3 [shape = 'f32[64,128]{1,0:T(8,128)}', space=vmem, size = 0x8000, scoped, tag = 'scratch operand']
  #allocation4 [shape = 'f32[8,640]{1,0:T(8,128)}', space=vmem, size = 0x5000, scoped, tag = 'scratch operand']
  %s0 = inlined_call_operand.vmem [shape: f32[80,128], index: 0, kind: input, shape index: {}]
  %s1 = inlined_call_operand.hbm [shape: f32[5,128,256], index: 1, kind: input, shape index: {}]
  %s2 = inlined_call_operand.vmem [shape: f32[1,256], index: 2, kind: input, shape index: {}]
  %s3 = inlined_call_operand.hbm [shape: f32[5,128,256], index: 3, kind: input, shape index: {}]
  %s4 = inlined_call_operand.vmem [shape: f32[1,256], index: 4, kind: input, shape index: {}]
  %s5 = inlined_call_operand.hbm [shape: f32[640,256], index: 5, kind: input, shape index: {}]
  %s6 = inlined_call_operand.vmem [shape: f32[1,256], index: 6, kind: input, shape index: {}]
  %s7 = inlined_call_operand.vmem [shape: f32[256,128], index: 7, kind: input, shape index: {}]
  %s8 = inlined_call_operand.vmem [shape: f32[1,128], index: 8, kind: input, shape index: {}]
  %s9 = inlined_call_operand.vmem [shape: f32[128,128], index: 9, kind: input, shape index: {}]
  %s10 = inlined_call_operand.vmem [shape: f32[1,128], index: 10, kind: input, shape index: {}]
  %s11 = inlined_call_operand.hbm [shape: f32[2,128], index: 11, kind: output, shape index: {}]
  %s12 = sld [smem:[#allocation0]]
  $region66: #{_lenet_logits.1} parent=0
    _
  %s14 = ssub.s32 1, %s12
  %s15 = scalar_select 0, %s14, %s12
  $region1: #{_lenet_logits.1} parent=0
    #allocation5 [shape = 'u8[655360]{0}', space=vmem, size = 0xa0000, scoped, tag = 'input window, operand 1, single buffered']
    #allocation6 [shape = 's32[1]{0}', space=sflag, size = 0x4, scoped, tag = 'scoped memory for _lenet_logits.1']
    #allocation7 [shape = 's32[1]{0}', space=sflag, size = 0x4, scoped, tag = 'scoped memory for _lenet_logits.1']
    #allocation8 [shape = 'u8[655360]{0}', space=vmem, size = 0xa0000, scoped, tag = 'input window, operand 3, single buffered']
    #allocation9 [shape = 's32[1]{0}', space=sflag, size = 0x4, scoped, tag = 'scoped memory for _lenet_logits.1']
    #allocation10 [shape = 'u8[655360]{0}', space=vmem, size = 0xa0000, scoped, tag = 'input window, operand 5, single buffered']
    #allocation11 [shape = 'u8[1024]{0}', space=vmem, size = 0x400, scoped, tag = 'output window, operand 0, single buffered']
    %16 = vsyncpa [#allocation6], 0
    %17 = vsyncpa [#allocation9], 0
    %18 = vsyncpa [#allocation7], 0
    // Predicated region
    $region2: #{_lenet_logits.1} parent=1 // pred_check
      _
    $region3: #{_lenet_logits.1} parent=1 // pred_check_branch
      %20 = sbr.rel (0) target = $region5
    $region4: #{_lenet_logits.1} parent=1 // pred_region
      _
    $region5: #{_lenet_logits.1} parent=1 // pred_fallthru
      _
    // Predicated region
    $region6: #{_lenet_logits.1} parent=1 // pred_check
      _
    $region7: #{_lenet_logits.1} parent=1 // pred_check_branch
      %22 = sbr.rel (0) target = $region9
    $region8: #{_lenet_logits.1} parent=1 // pred_region
      %s24 = ssub.s32 20480, 20480
      %25 = vsyncadd [#allocation6], %s24
      %s26 = sshll.u32 [#allocation5], 4
      %s27 = int_to_ptr.vmem [resolvable:$true] %s26
      %32 = dma.hbm_to_vmem [thread:$0]  %s1, 20480, %s27, [#allocation6], 256, 256, 16
    $region9: #{_lenet_logits.1} parent=1 // pred_fallthru
      _
    // Predicated region
    $region10: #{_lenet_logits.1} parent=1 // pred_check
      _
    $region11: #{_lenet_logits.1} parent=1 // pred_check_branch
      %34 = sbr.rel (0) target = $region13
    $region12: #{_lenet_logits.1} parent=1 // pred_region
      _
    $region13: #{_lenet_logits.1} parent=1 // pred_fallthru
      _
    // Predicated region
    $region14: #{_lenet_logits.1} parent=1 // pred_check
      _
    $region15: #{_lenet_logits.1} parent=1 // pred_check_branch
      %36 = sbr.rel (0) target = $region17
    $region16: #{_lenet_logits.1} parent=1 // pred_region
      %s38 = ssub.s32 20480, 20480
      %39 = vsyncadd [#allocation9], %s38
      %s40 = sshll.u32 [#allocation8], 4
      %s41 = int_to_ptr.vmem [resolvable:$true] %s40
      %46 = dma.hbm_to_vmem [thread:$0]  %s3, 20480, %s41, [#allocation9], 256, 256, 16
    $region17: #{_lenet_logits.1} parent=1 // pred_fallthru
      _
    // Predicated region
    $region18: #{_lenet_logits.1} parent=1 // pred_check
      _
    $region19: #{_lenet_logits.1} parent=1 // pred_check_branch
      %48 = sbr.rel (0) target = $region21
    $region20: #{_lenet_logits.1} parent=1 // pred_region
      _
    $region21: #{_lenet_logits.1} parent=1 // pred_fallthru
      _
    // Predicated region
    $region22: #{_lenet_logits.1} parent=1 // pred_check
      _
    $region23: #{_lenet_logits.1} parent=1 // pred_check_branch
      %50 = sbr.rel (0) target = $region25
    $region24: #{_lenet_logits.1} parent=1 // pred_region
      %s52 = ssub.s32 20480, 20480
      %53 = vsyncadd [#allocation9], %s52
      %s54 = sshll.u32 [#allocation10], 4
      %s55 = int_to_ptr.vmem [resolvable:$true] %s54
      %60 = dma.hbm_to_vmem [thread:$0]  %s5, 20480, %s55, [#allocation9], 256, 256, 16
    $region25: #{_lenet_logits.1} parent=1 // pred_fallthru
      _
    // Predicated region
    $region26: #{_lenet_logits.1} parent=1 // pred_check
      _
    $region27: #{_lenet_logits.1} parent=1 // pred_check_branch
      %62 = sbr.rel (0) target = $region29
    $region28: #{_lenet_logits.1} parent=1 // pred_region
      _
    $region29: #{_lenet_logits.1} parent=1 // pred_fallthru
      _
    // Predicated region
    $region30: #{_lenet_logits.1} parent=1 // pred_check
      _
    $region31: #{_lenet_logits.1} parent=1 // pred_check_branch
      %64 = sbr.rel (0) target = $region33
    $region32: #{_lenet_logits.1} parent=1 // pred_region
      _
    $region33: #{_lenet_logits.1} parent=1 // pred_fallthru
      _
    // Predicated region
    $region34: #{_lenet_logits.1} parent=1 // pred_check
      _
    $region35: #{_lenet_logits.1} parent=1 // pred_check_branch
      %66 = sbr.rel (0) target = $region37
    $region36: #{_lenet_logits.1} parent=1 // pred_region
      _
    $region37: #{_lenet_logits.1} parent=1 // pred_fallthru
      _
    // Predicated region
    $region38: #{_lenet_logits.1} parent=1 // pred_check
      _
    $region39: #{_lenet_logits.1} parent=1 // pred_check_branch
      %68 = sbr.rel (0) target = $region41
    $region40: #{_lenet_logits.1} parent=1 // pred_region
      _
    $region41: #{_lenet_logits.1} parent=1 // pred_fallthru
      _
    // Predicated region
    $region42: #{_lenet_logits.1} parent=1 // pred_check
      _
    $region43: #{_lenet_logits.1} parent=1 // pred_check_branch
      %70 = sbr.rel (0) target = $region45
    $region44: #{_lenet_logits.1} parent=1 // pred_region
      _
    $region45: #{_lenet_logits.1} parent=1 // pred_fallthru
      _
    // Predicated region
    $region46: #{_lenet_logits.1} parent=1 // pred_check
      _
    $region47: #{_lenet_logits.1} parent=1 // pred_check_branch
      %72 = sbr.rel (0) target = $region49
    $region48: #{_lenet_logits.1} parent=1 // pred_region
      %73 = dma.done [#allocation6], 20480
    $region49: #{_lenet_logits.1} parent=1 // pred_fallthru
      _
    // Predicated region
    $region50: #{_lenet_logits.1} parent=1 // pred_check
      _
    $region51: #{_lenet_logits.1} parent=1 // pred_check_branch
      %75 = sbr.rel (0) target = $region53
    $region52: #{_lenet_logits.1} parent=1 // pred_region
      %76 = dma.done [#allocation9], 20480
    $region53: #{_lenet_logits.1} parent=1 // pred_fallthru
      _
    // Predicated region
    $region54: #{_lenet_logits.1} parent=1 // pred_check
      _
    $region55: #{_lenet_logits.1} parent=1 // pred_check_branch
      %78 = sbr.rel (0) target = $region57
    $region56: #{_lenet_logits.1} parent=1 // pred_region
      %79 = dma.done [#allocation9], 20480
    $region57: #{_lenet_logits.1} parent=1 // pred_fallthru
      _
    %v80 = vld [vmem:[%s0] sm:$0xff]
    %v81 = vld [vmem:[%s0 + $0x8] sm:$0xff]
    %v82 = vld [vmem:[%s0 + $0x10] sm:$0xff]
    %v83 = vld [vmem:[%s0 + $0x18] sm:$0xff]
    %v84 = vld [vmem:[%s0 + $0x20] sm:$0xff]
    %v85 = vld [vmem:[%s0 + $0x28] sm:$0xff]
    %v86 = vld [vmem:[%s0 + $0x30] sm:$0xff]
    %v87 = vld [vmem:[%s0 + $0x38] sm:$0xff]
    %v88 = vld [vmem:[%s0 + $0x40] sm:$0xff]
    %v89 = vld [vmem:[#allocation5] sm:$0xff]
    %v90 = vld [vmem:[#allocation5 + $0x8] sm:$0xff]
    %v91 = vld [vmem:[#allocation5 + $0x10] sm:$0xff]
    %v92 = vld [vmem:[#allocation5 + $0x18] sm:$0xff]
    %v93 = vld [vmem:[#allocation5 + $0x20] sm:$0xff]
    %v94 = vld [vmem:[#allocation5 + $0x28] sm:$0xff]
    %v95 = vld [vmem:[#allocation5 + $0x30] sm:$0xff]
    %v96 = vld [vmem:[#allocation5 + $0x38] sm:$0xff]
    %v97 = vld [vmem:[#allocation5 + $0x40] sm:$0xff]
    %v98 = vld [vmem:[#allocation5 + $0x48] sm:$0xff]
    %v99 = vld [vmem:[#allocation5 + $0x50] sm:$0xff]
    %v100 = vld [vmem:[#allocation5 + $0x58] sm:$0xff]
    %v101 = vld [vmem:[#allocation5 + $0x60] sm:$0xff]
    %v102 = vld [vmem:[#allocation5 + $0x68] sm:$0xff]
    %v103 = vld [vmem:[#allocation5 + $0x70] sm:$0xff]
    %v104 = vld [vmem:[#allocation5 + $0x78] sm:$0xff]
    %v105 = vld [vmem:[#allocation5 + $0x80] sm:$0xff]
    %v106 = vld [vmem:[#allocation5 + $0x88] sm:$0xff]
    %v107 = vld [vmem:[#allocation5 + $0x90] sm:$0xff]
    %v108 = vld [vmem:[#allocation5 + $0x98] sm:$0xff]
    %v109 = vld [vmem:[#allocation5 + $0xa0] sm:$0xff]
    %v110 = vld [vmem:[#allocation5 + $0xa8] sm:$0xff]
    %v111 = vld [vmem:[#allocation5 + $0xb0] sm:$0xff]
    %v112 = vld [vmem:[#allocation5 + $0xb8] sm:$0xff]
    %v113 = vld [vmem:[#allocation5 + $0xc0] sm:$0xff]
    %v114 = vld [vmem:[#allocation5 + $0xc8] sm:$0xff]
    %v115 = vld [vmem:[#allocation5 + $0xd0] sm:$0xff]
    %v116 = vld [vmem:[#allocation5 + $0xd8] sm:$0xff]
    %v117 = vld [vmem:[#allocation5 + $0xe0] sm:$0xff]
    %v118 = vld [vmem:[#allocation5 + $0xe8] sm:$0xff]
    %v119 = vld [vmem:[#allocation5 + $0xf0] sm:$0xff]
    %v120 = vld [vmem:[#allocation5 + $0xf8] sm:$0xff]
    %v121 = vld [vmem:[%s0 + $0x1] sm:$0xff]
    %v122 = vld [vmem:[%s0 + $0x9] sm:$0xff]
    %v123 = vld [vmem:[%s0 + $0x11] sm:$0xff]
    %v124 = vld [vmem:[%s0 + $0x19] sm:$0xff]
    %v125 = vld [vmem:[%s0 + $0x21] sm:$0xff]
    %v126 = vld [vmem:[%s0 + $0x29] sm:$0xff]
    %v127 = vld [vmem:[%s0 + $0x31] sm:$0xff]
    %v128 = vld [vmem:[%s0 + $0x39] sm:$0xff]
    %v129 = vld [vmem:[%s0 + $0x41] sm:$0xff]
    %s130 = scalar_lea.vmem [#allocation5], 256
    %v131 = vld [vmem:[%s130] sm:$0xff]
    %v132 = vld [vmem:[%s130 + $0x8] sm:$0xff]
    %v133 = vld [vmem:[%s130 + $0x10] sm:$0xff]
    %v134 = vld [vmem:[%s130 + $0x18] sm:$0xff]
    %v135 = vld [vmem:[%s130 + $0x20] sm:$0xff]
    %v136 = vld [vmem:[%s130 + $0x28] sm:$0xff]
    %v137 = vld [vmem:[%s130 + $0x30] sm:$0xff]
    %v138 = vld [vmem:[%s130 + $0x38] sm:$0xff]
    %v139 = vld [vmem:[%s130 + $0x40] sm:$0xff]
    %v140 = vld [vmem:[%s130 + $0x48] sm:$0xff]
    %v141 = vld [vmem:[%s130 + $0x50] sm:$0xff]
    %v142 = vld [vmem:[%s130 + $0x58] sm:$0xff]
    %v143 = vld [vmem:[%s130 + $0x60] sm:$0xff]
    %v144 = vld [vmem:[%s130 + $0x68] sm:$0xff]
    %v145 = vld [vmem:[%s130 + $0x70] sm:$0xff]
    %v146 = vld [vmem:[%s130 + $0x78] sm:$0xff]
    %v147 = vld [vmem:[%s130 + $0x80] sm:$0xff]
    %v148 = vld [vmem:[%s130 + $0x88] sm:$0xff]
    %v149 = vld [vmem:[%s130 + $0x90] sm:$0xff]
    %v150 = vld [vmem:[%s130 + $0x98] sm:$0xff]
    %v151 = vld [vmem:[%s130 + $0xa0] sm:$0xff]
    %v152 = vld [vmem:[%s130 + $0xa8] sm:$0xff]
    %v153 = vld [vmem:[%s130 + $0xb0] sm:$0xff]
    %v154 = vld [vmem:[%s130 + $0xb8] sm:$0xff]
    %v155 = vld [vmem:[%s130 + $0xc0] sm:$0xff]
    %v156 = vld [vmem:[%s130 + $0xc8] sm:$0xff]
    %v157 = vld [vmem:[%s130 + $0xd0] sm:$0xff]
    %v158 = vld [vmem:[%s130 + $0xd8] sm:$0xff]
    %v159 = vld [vmem:[%s130 + $0xe0] sm:$0xff]
    %v160 = vld [vmem:[%s130 + $0xe8] sm:$0xff]
    %v161 = vld [vmem:[%s130 + $0xf0] sm:$0xff]
    %v162 = vld [vmem:[%s130 + $0xf8] sm:$0xff]
    %163 = vmatprep.subr.mxu0 %v132
    %164 = vmatpush1.msra.mxu0 %v131
    %165 = vmatprep.subr.mxu0 %v134
    %166 = vmatpush1.msra.mxu0 %v133
    %167 = vmatprep.subr.mxu0 %v136
    %168 = vmatpush1.msra.mxu0 %v135
    %169 = vmatprep.subr.mxu0 %v138
    %170 = vmatpush1.msra.mxu0 %v137
    %171 = vmatprep.subr.mxu0 %v140
    %172 = vmatpush1.msra.mxu0 %v139
    %173 = vmatprep.subr.mxu0 %v142
    %174 = vmatpush1.msra.mxu0 %v141
    %175 = vmatprep.subr.mxu0 %v144
    %176 = vmatpush1.msra.mxu0 %v143
    %177 = vmatprep.subr.mxu0 %v146
    %178 = vmatpush1.msra.mxu0 %v145
    %179 = vmatprep.subr.mxu0 %v148
    %180 = vmatpush1.msra.mxu0 %v147
    %181 = vmatprep.subr.mxu0 %v150
    %182 = vmatpush1.msra.mxu0 %v149
    %183 = vmatprep.subr.mxu0 %v152
    %184 = vmatpush1.msra.mxu0 %v151
    %185 = vmatprep.subr.mxu0 %v154
    %186 = vmatpush1.msra.mxu0 %v153
    %187 = vmatprep.subr.mxu0 %v156
    %188 = vmatpush1.msra.mxu0 %v155
    %189 = vmatprep.subr.mxu0 %v158
    %190 = vmatpush1.msra.mxu0 %v157
    %191 = vmatprep.subr.mxu0 %v160
    %192 = vmatpush1.msra.mxu0 %v159
    %193 = vmatprep.subr.mxu0 %v162
    %194 = vmatpush1.msra.mxu0 %v161
    %195 = vmatprep.subr.mxu0 0.0
    %196 = vmatpush1.msra.mxu0 0.0
    %197 = vmatprep.subr.mxu0 0.0
    %198 = vmatpush1.msra.mxu0 0.0
    %199 = vmatprep.subr.mxu0 0.0
    %200 = vmatpush1.msra.mxu0 0.0
    %201 = vmatprep.subr.mxu0 0.0
    %202 = vmatpush1.msra.mxu0 0.0
    %203 = vmatprep.subr.mxu0 0.0
    %204 = vmatpush1.msra.mxu0 0.0
    %205 = vmatprep.subr.mxu0 0.0
    %206 = vmatpush1.msra.mxu0 0.0
    %207 = vmatprep.subr.mxu0 0.0
    %208 = vmatpush1.msra.mxu0 0.0
    %209 = vmatprep.subr.mxu0 0.0
    %210 = vmatpush1.msra.mxu0 0.0
    %211 = vmatprep.subr.mxu0 0.0
    %212 = vmatpush1.msra.mxu0 0.0
    %213 = vmatprep.subr.mxu0 0.0
    %214 = vmatpush1.msra.mxu0 0.0
    %215 = vmatprep.subr.mxu0 0.0
    %216 = vmatpush1.msra.mxu0 0.0
    %217 = vmatprep.subr.mxu0 0.0
    %218 = vmatpush1.msra.mxu0 0.0
    %219 = vmatprep.subr.mxu0 0.0
    %220 = vmatpush1.msra.mxu0 0.0
    %221 = vmatprep.subr.mxu0 0.0
    %222 = vmatpush1.msra.mxu0 0.0
    %223 = vmatprep.subr.mxu0 0.0
    %224 = vmatpush1.msra.mxu0 0.0
    %225 = vmatprep.subr.mxu0 0.0
    %226 = vmatpush1.msra.mxu0 0.0
    %227 = vmatprep.mubr.f32.mxu0 0.0
    %228 = vmatmul.mubr.f32.gmra.mrb[0].mxu0 %v121
    %v229 = vpop.f32.mrb[0].mxu0
    %v230 = vadd.f32 0.0, %v229
    %v231 = vpop.f32.mrb[0].mxu0
    %v232 = vadd.f32 0.0, %v231
    %233 = vmatprep.mubr.f32.mxu0 0.0
    %234 = vmatmul.mubr.f32.gmra.mrb[0].mxu0 %v122
    %v235 = vpop.f32.mrb[0].mxu0
    %v236 = vadd.f32 0.0, %v235
    %v237 = vpop.f32.mrb[0].mxu0
    %v238 = vadd.f32 0.0, %v237
    %239 = vmatprep.mubr.f32.mxu0 0.0
    %240 = vmatmul.mubr.f32.gmra.mrb[0].mxu0 %v123
    %v241 = vpop.f32.mrb[0].mxu0
    %v242 = vadd.f32 0.0, %v241
    %v243 = vpop.f32.mrb[0].mxu0
    %v244 = vadd.f32 0.0, %v243
    %245 = vmatprep.mubr.f32.mxu0 0.0
    %246 = vmatmul.mubr.f32.gmra.mrb[0].mxu0 %v124
    %v247 = vpop.f32.mrb[0].mxu0
    %v248 = vadd.f32 0.0, %v247
    %v249 = vpop.f32.mrb[0].mxu0
    %v250 = vadd.f32 0.0, %v249
    %251 = vmatprep.mubr.f32.mxu0 0.0
    %252 = vmatmul.mubr.f32.gmra.mrb[0].mxu0 %v125
    %v253 = vpop.f32.mrb[0].mxu0
    %v254 = vadd.f32 0.0, %v253
    %v255 = vpop.f32.mrb[0].mxu0
    %v256 = vadd.f32 0.0, %v255
    %257 = vmatprep.mubr.f32.mxu0 0.0
    %258 = vmatmul.mubr.f32.gmra.mrb[0].mxu0 %v126
    %v259 = vpop.f32.mrb[0].mxu0
    %v260 = vadd.f32 0.0, %v259
    %v261 = vpop.f32.mrb[0].mxu0
    %v262 = vadd.f32 0.0, %v261
    %263 = vmatprep.mubr.f32.mxu0 0.0
    %264 = vmatmul.mubr.f32.gmra.mrb[0].mxu0 %v127
    %v265 = vpop.f32.mrb[0].mxu0
    %v266 = vadd.f32 0.0, %v265
    %v267 = vpop.f32.mrb[0].mxu0
    %v268 = vadd.f32 0.0, %v267
    %269 = vmatprep.mubr.f32.mxu0 0.0
    %270 = vmatmul.mubr.f32.gmra.mrb[0].mxu0 %v128
    %v271 = vpop.f32.mrb[0].mxu0
    %v272 = vadd.f32 0.0, %v271
    %v273 = vpop.f32.mrb[0].mxu0
    %v274 = vadd.f32 0.0, %v273
    %275 = vmatprep.mubr.f32.mxu0 0.0
    %276 = vmatmul.mubr.f32.gmra.mrb[0].mxu0 %v129
    %v277 = vpop.f32.mrb[0].mxu0
    %v278 = vadd.f32 0.0, %v277
    %v279 = vpop.f32.mrb[0].mxu0
    %v280 = vadd.f32 0.0, %v279
    %281 = vdwg.mxu0
    %282 = vmatprep.subr.mxu0 %v90
    %283 = vmatpush1.msra.mxu0 %v89
    %284 = vmatprep.subr.mxu0 %v92
    %285 = vmatpush1.msra.mxu0 %v91
    %286 = vmatprep.subr.mxu0 %v94
    %287 = vmatpush1.msra.mxu0 %v93
    %288 = vmatprep.subr.mxu0 %v96
    %289 = vmatpush1.msra.mxu0 %v95
    %290 = vmatprep.subr.mxu0 %v98
    %291 = vmatpush1.msra.mxu0 %v97
    %292 = vmatprep.subr.mxu0 %v100
    %293 = vmatpush1.msra.mxu0 %v99
    %294 = vmatprep.subr.mxu0 %v102
    %295 = vmatpush1.msra.mxu0 %v101
    %296 = vmatprep.subr.mxu0 %v104
    %297 = vmatpush1.msra.mxu0 %v103
    %298 = vmatprep.subr.mxu0 %v106
    %299 = vmatpush1.msra.mxu0 %v105
    %300 = vmatprep.subr.mxu0 %v108
    %301 = vmatpush1.msra.mxu0 %v107
    %302 = vmatprep.subr.mxu0 %v110
    %303 = vmatpush1.msra.mxu0 %v109
    %304 = vmatprep.subr.mxu0 %v112
    %305 = vmatpush1.msra.mxu0 %v111
    %306 = vmatprep.subr.mxu0 %v114
    %307 = vmatpush1.msra.mxu0 %v113
    %308 = vmatprep.subr.mxu0 %v116
    %309 = vmatpush1.msra.mxu0 %v115
    %310 = vmatprep.subr.mxu0 %v118
    %311 = vmatpush1.msra.mxu0 %v117
    %312 = vmatprep.subr.mxu0 %v120
    %313 = vmatpush1.msra.mxu0 %v119
    %314 = vmatprep.subr.mxu0 0.0
    %315 = vmatpush1.msra.mxu0 0.0
    %316 = vmatprep.subr.mxu0 0.0
    %317 = vmatpush1.msra.mxu0 0.0
    %318 = vmatprep.subr.mxu0 0.0
    %319 = vmatpush1.msra.mxu0 0.0
    %320 = vmatprep.subr.mxu0 0.0
    %321 = vmatpush1.msra.mxu0 0.0
    %322 = vmatprep.subr.mxu0 0.0
    %323 = vmatpush1.msra.mxu0 0.0
    %324 = vmatprep.subr.mxu0 0.0
    %325 = vmatpush1.msra.mxu0 0.0
    %326 = vmatprep.subr.mxu0 0.0
    %327 = vmatpush1.msra.mxu0 0.0
    %328 = vmatprep.subr.mxu0 0.0
    %329 = vmatpush1.msra.mxu0 0.0
    %330 = vmatprep.subr.mxu0 0.0
    %331 = vmatpush1.msra.mxu0 0.0
    %332 = vmatprep.subr.mxu0 0.0
    %333 = vmatpush1.msra.mxu0 0.0
    %334 = vmatprep.subr.mxu0 0.0
    %335 = vmatpush1.msra.mxu0 0.0
    %336 = vmatprep.subr.mxu0 0.0
    %337 = vmatpush1.msra.mxu0 0.0
    %338 = vmatprep.subr.mxu0 0.0
    %339 = vmatpush1.msra.mxu0 0.0
    %340 = vmatprep.subr.mxu0 0.0
    %341 = vmatpush1.msra.mxu0 0.0
    %342 = vmatprep.subr.mxu0 0.0
    %343 = vmatpush1.msra.mxu0 0.0
    %344 = vmatprep.subr.mxu0 0.0
    %345 = vmatpush1.msra.mxu0 0.0
    %346 = vmatprep.mubr.f32.mxu0 0.0
    %347 = vmatmul.mubr.f32.gmra.mrb[0].mxu0 %v80
    %v348 = vpop.f32.mrb[0].mxu0
    %v349 = vadd.f32 %v230, %v348
    %v350 = vpop.f32.mrb[0].mxu0
    %v351 = vadd.f32 %v232, %v350
    %352 = vmatprep.mubr.f32.mxu0 0.0
    %353 = vmatmul.mubr.f32.gmra.mrb[0].mxu0 %v81
    %v354 = vpop.f32.mrb[0].mxu0
    %v355 = vadd.f32 %v236, %v354
    %v356 = vpop.f32.mrb[0].mxu0
    %v357 = vadd.f32 %v238, %v356
    %358 = vmatprep.mubr.f32.mxu0 0.0
    %359 = vmatmul.mubr.f32.gmra.mrb[0].mxu0 %v82
    %v360 = vpop.f32.mrb[0].mxu0
    %v361 = vadd.f32 %v242, %v360
    %v362 = vpop.f32.mrb[0].mxu0
    %v363 = vadd.f32 %v244, %v362
    %364 = vmatprep.mubr.f32.mxu0 0.0
    %365 = vmatmul.mubr.f32.gmra.mrb[0].mxu0 %v83
    %v366 = vpop.f32.mrb[0].mxu0
    %v367 = vadd.f32 %v248, %v366
    %v368 = vpop.f32.mrb[0].mxu0
    %v369 = vadd.f32 %v250, %v368
    %370 = vmatprep.mubr.f32.mxu0 0.0
    %371 = vmatmul.mubr.f32.gmra.mrb[0].mxu0 %v84
    %v372 = vpop.f32.mrb[0].mxu0
    %v373 = vadd.f32 %v254, %v372
    %v374 = vpop.f32.mrb[0].mxu0
    %v375 = vadd.f32 %v256, %v374
    %376 = vmatprep.mubr.f32.mxu0 0.0
    %377 = vmatmul.mubr.f32.gmra.mrb[0].mxu0 %v85
    %v378 = vpop.f32.mrb[0].mxu0
    %v379 = vadd.f32 %v260, %v378
    %v380 = vpop.f32.mrb[0].mxu0
    %v381 = vadd.f32 %v262, %v380
    %382 = vmatprep.mubr.f32.mxu0 0.0
    %383 = vmatmul.mubr.f32.gmra.mrb[0].mxu0 %v86
    %v384 = vpop.f32.mrb[0].mxu0
    %v385 = vadd.f32 %v266, %v384
    %v386 = vpop.f32.mrb[0].mxu0
    %v387 = vadd.f32 %v268, %v386
    %388 = vmatprep.mubr.f32.mxu0 0.0
    %389 = vmatmul.mubr.f32.gmra.mrb[0].mxu0 %v87
    %v390 = vpop.f32.mrb[0].mxu0
    %v391 = vadd.f32 %v272, %v390
    %v392 = vpop.f32.mrb[0].mxu0
    %v393 = vadd.f32 %v274, %v392
    %394 = vmatprep.mubr.f32.mxu0 0.0
    %395 = vmatmul.mubr.f32.gmra.mrb[0].mxu0 %v88
    %v396 = vpop.f32.mrb[0].mxu0
    %v397 = vadd.f32 %v278, %v396
    %v398 = vpop.f32.mrb[0].mxu0
    %v399 = vadd.f32 %v280, %v398
    %400 = vdwg.mxu0
    %v401 = vld [vmem:[%s0 + $0x2] sm:$0xff]
    %v402 = vld [vmem:[%s0 + $0xa] sm:$0xff]
    %v403 = vld [vmem:[%s0 + $0x12] sm:$0xff]
    %v404 = vld [vmem:[%s0 + $0x1a] sm:$0xff]
    %v405 = vld [vmem:[%s0 + $0x22] sm:$0xff]
    %v406 = vld [vmem:[%s0 + $0x2a] sm:$0xff]
    %v407 = vld [vmem:[%s0 + $0x32] sm:$0xff]
    %v408 = vld [vmem:[%s0 + $0x3a] sm:$0xff]
    %v409 = vld [vmem:[%s0 + $0x42] sm:$0xff]
    %s410 = scalar_lea.vmem [#allocation5], 512
    %v411 = vld [vmem:[%s410] sm:$0xff]
    %v412 = vld [vmem:[%s410 + $0x8] sm:$0xff]
    %v413 = vld [vmem:[%s410 + $0x10] sm:$0xff]
    %v414 = vld [vmem:[%s410 + $0x18] sm:$0xff]
    %v415 = vld [vmem:[%s410 + $0x20] sm:$0xff]
    %v416 = vld [vmem:[%s410 + $0x28] sm:$0xff]
    %v417 = vld [vmem:[%s410 + $0x30] sm:$0xff]
    %v418 = vld [vmem:[%s410 + $0x38] sm:$0xff]
    %v419 = vld [vmem:[%s410 + $0x40] sm:$0xff]
    %v420 = vld [vmem:[%s410 + $0x48] sm:$0xff]
    %v421 = vld [vmem:[%s410 + $0x50] sm:$0xff]
    %v422 = vld [vmem:[%s410 + $0x58] sm:$0xff]
    %v423 = vld [vmem:[%s410 + $0x60] sm:$0xff]
    %v424 = vld [vmem:[%s410 + $0x68] sm:$0xff]
    %v425 = vld [vmem:[%s410 + $0x70] sm:$0xff]
    %v426 = vld [vmem:[%s410 + $0x78] sm:$0xff]
    %v427 = vld [vmem:[%s410 + $0x80] sm:$0xff]
    %v428 = vld [vmem:[%s410 + $0x88] sm:$0xff]
    %v429 = vld [vmem:[%s410 + $0x90] sm:$0xff]
    %v430 = vld [vmem:[%s410 + $0x98] sm:$0xff]
    %v431 = vld [vmem:[%s410 + $0xa0] sm:$0xff]
    %v432 = vld [vmem:[%s410 + $0xa8] sm:$0xff]
    %v433 = vld [vmem:[%s410 + $0xb0] sm:$0xff]
    %v434 = vld [vmem:[%s410 + $0xb8] sm:$0xff]
    %v435 = vld [vmem:[%s410 + $0xc0] sm:$0xff]
    %v436 = vld [vmem:[%s410 + $0xc8] sm:$0xff]
    %v437 = vld [vmem:[%s410 + $0xd0] sm:$0xff]
    %v438 = vld [vmem:[%s410 + $0xd8] sm:$0xff]
    %v439 = vld [vmem:[%s410 + $0xe0] sm:$0xff]
    %v440 = vld [vmem:[%s410 + $0xe8] sm:$0xff]
    %v441 = vld [vmem:[%s410 + $0xf0] sm:$0xff]
    %v442 = vld [vmem:[%s410 + $0xf8] sm:$0xff]
    %443 = vmatprep.subr.mxu0 %v412
    %444 = vmatpush1.msra.mxu0 %v411
    %445 = vmatprep.subr.mxu0 %v414
    %446 = vmatpush1.msra.mxu0 %v413
    %447 = vmatprep.subr.mxu0 %v416
    %448 = vmatpush1.msra.mxu0 %v415
    %449 = vmatprep.subr.mxu0 %v418
    %450 = vmatpush1.msra.mxu0 %v417
    %451 = vmatprep.subr.mxu0 %v420
    %452 = vmatpush1.msra.mxu0 %v419
    %453 = vmatprep.subr.mxu0 %v422
    %454 = vmatpush1.msra.mxu0 %v421
    %455 = vmatprep.subr.mxu0 %v424
    %456 = vmatpush1.msra.mxu0 %v423
    %457 = vmatprep.subr.mxu0 %v426
    %458 = vmatpush1.msra.mxu0 %v425
    %459 = vmatprep.subr.mxu0 %v428
    %460 = vmatpush1.msra.mxu0 %v427
    %461 = vmatprep.subr.mxu0 %v430
    %462 = vmatpush1.msra.mxu0 %v429
    %463 = vmatprep.subr.mxu0 %v432
    %464 = vmatpush1.msra.mxu0 %v431
    %465 = vmatprep.subr.mxu0 %v434
    %466 = vmatpush1.msra.mxu0 %v433
    %467 = vmatprep.subr.mxu0 %v436
    %468 = vmatpush1.msra.mxu0 %v435
    %469 = vmatprep.subr.mxu0 %v438
    %470 = vmatpush1.msra.mxu0 %v437
    %471 = vmatprep.subr.mxu0 %v440
    %472 = vmatpush1.msra.mxu0 %v439
    %473 = vmatprep.subr.mxu0 %v442
    %474 = vmatpush1.msra.mxu0 %v441
    %475 = vmatprep.subr.mxu0 0.0
    %476 = vmatpush1.msra.mxu0 0.0
    %477 = vmatprep.subr.mxu0 0.0
    %478 = vmatpush1.msra.mxu0 0.0
    %479 = vmatprep.subr.mxu0 0.0
    %480 = vmatpush1.msra.mxu0 0.0
    %481 = vmatprep.subr.mxu0 0.0
    %482 = vmatpush1.msra.mxu0 0.0
    %483 = vmatprep.subr.mxu0 0.0
    %484 = vmatpush1.msra.mxu0 0.0
    %485 = vmatprep.subr.mxu0 0.0
    %486 = vmatpush1.msra.mxu0 0.0
    %487 = vmatprep.subr.mxu0 0.0
    %488 = vmatpush1.msra.mxu0 0.0
    %489 = vmatprep.subr.mxu0 0.0
    %490 = vmatpush1.msra.mxu0 0.0
    %491 = vmatprep.subr.mxu0 0.0
    %492 = vmatpush1.msra.mxu0 0.0
    %493 = vmatprep.subr.mxu0 0.0
    %494 = vmatpush1.msra.mxu0 0.0
    %495 = vmatprep.subr.mxu0 0.0
    %496 = vmatpush1.msra.mxu0 0.0
    %497 = vmatprep.subr.mxu0 0.0
    %498 = vmatpush1.msra.mxu0 0.0
    %499 = vmatprep.subr.mxu0 0.0
    %500 = vmatpush1.msra.mxu0 0.0
    %501 = vmatprep.subr.mxu0 0.0
    %502 = vmatpush1.msra.mxu0 0.0
    %503 = vmatprep.subr.mxu0 0.0
    %504 = vmatpush1.msra.mxu0 0.0
    %505 = vmatprep.subr.mxu0 0.0
    %506 = vmatpush1.msra.mxu0 0.0
    %507 = vmatprep.mubr.f32.mxu0 0.0
    %508 = vmatmul.mubr.f32.gmra.mrb[0].mxu0 %v401
    %v509 = vpop.f32.mrb[0].mxu0
    %v510 = vadd.f32 0.0, %v509
    %v511 = vpop.f32.mrb[0].mxu0
    %v512 = vadd.f32 0.0, %v511
    %513 = vmatprep.mubr.f32.mxu0 0.0
    %514 = vmatmul.mubr.f32.gmra.mrb[0].mxu0 %v402
    %v515 = vpop.f32.mrb[0].mxu0
    %v516 = vadd.f32 0.0, %v515
    %v517 = vpop.f32.mrb[0].mxu0
    %v518 = vadd.f32 0.0, %v517
    %519 = vmatprep.mubr.f32.mxu0 0.0
    %520 = vmatmul.mubr.f32.gmra.mrb[0].mxu0 %v403
    %v521 = vpop.f32.mrb[0].mxu0
    %v522 = vadd.f32 0.0, %v521
    %v523 = vpop.f32.mrb[0].mxu0
    %v524 = vadd.f32 0.0, %v523
    %525 = vmatprep.mubr.f32.mxu0 0.0
    %526 = vmatmul.mubr.f32.gmra.mrb[0].mxu0 %v404
    %v527 = vpop.f32.mrb[0].mxu0
    %v528 = vadd.f32 0.0, %v527
    %v529 = vpop.f32.mrb[0].mxu0
    %v530 = vadd.f32 0.0, %v529
    %531 = vmatprep.mubr.f32.mxu0 0.0
    %532 = vmatmul.mubr.f32.gmra.mrb[0].mxu0 %v405
    %v533 = vpop.f32.mrb[0].mxu0
    %v534 = vadd.f32 0.0, %v533
    %v535 = vpop.f32.mrb[0].mxu0
    %v536 = vadd.f32 0.0, %v535
    %537 = vmatprep.mubr.f32.mxu0 0.0
    %538 = vmatmul.mubr.f32.gmra.mrb[0].mxu0 %v406
    %v539 = vpop.f32.mrb[0].mxu0
    %v540 = vadd.f32 0.0, %v539
    %v541 = vpop.f32.mrb[0].mxu0
    %v542 = vadd.f32 0.0, %v541
    %543 = vmatprep.mubr.f32.mxu0 0.0
    %544 = vmatmul.mubr.f32.gmra.mrb[0].mxu0 %v407
    %v545 = vpop.f32.mrb[0].mxu0
    %v546 = vadd.f32 0.0, %v545
    %v547 = vpop.f32.mrb[0].mxu0
    %v548 = vadd.f32 0.0, %v547
    %549 = vmatprep.mubr.f32.mxu0 0.0
    %550 = vmatmul.mubr.f32.gmra.mrb[0].mxu0 %v408
    %v551 = vpop.f32.mrb[0].mxu0
    %v552 = vadd.f32 0.0, %v551
    %v553 = vpop.f32.mrb[0].mxu0
    %v554 = vadd.f32 0.0, %v553
    %555 = vmatprep.mubr.f32.mxu0 0.0
    %556 = vmatmul.mubr.f32.gmra.mrb[0].mxu0 %v409
    %v557 = vpop.f32.mrb[0].mxu0
    %v558 = vadd.f32 0.0, %v557
    %v559 = vpop.f32.mrb[0].mxu0
    %v560 = vadd.f32 0.0, %v559
    %561 = vdwg.mxu0
    %v562 = vadd.f32 %v349, %v510
    %v563 = vadd.f32 %v351, %v512
    %v564 = vadd.f32 %v355, %v516
    %v565 = vadd.f32 %v357, %v518
    %v566 = vadd.f32 %v361, %v522
    %v567 = vadd.f32 %v363, %v524
    %v568 = vadd.f32 %v367, %v528
    %v569 = vadd.f32 %v369, %v530
    %v570 = vadd.f32 %v373, %v534
    %v571 = vadd.f32 %v375, %v536
    %v572 = vadd.f32 %v379, %v540
    %v573 = vadd.f32 %v381, %v542
    %v574 = vadd.f32 %v385, %v546
    %v575 = vadd.f32 %v387, %v548
    %v576 = vadd.f32 %v391, %v552
    %v577 = vadd.f32 %v393, %v554
    %v578 = vadd.f32 %v397, %v558
    %v579 = vadd.f32 %v399, %v560
    %v580 = vld [vmem:[%s0 + $0x3] sm:$0xff]
    %v581 = vld [vmem:[%s0 + $0xb] sm:$0xff]
    %v582 = vld [vmem:[%s0 + $0x13] sm:$0xff]
    %v583 = vld [vmem:[%s0 + $0x1b] sm:$0xff]
    %v584 = vld [vmem:[%s0 + $0x23] sm:$0xff]
    %v585 = vld [vmem:[%s0 + $0x2b] sm:$0xff]
    %v586 = vld [vmem:[%s0 + $0x33] sm:$0xff]
    %v587 = vld [vmem:[%s0 + $0x3b] sm:$0xff]
    %v588 = vld [vmem:[%s0 + $0x43] sm:$0xff]
    %s589 = scalar_lea.vmem [#allocation5], 768
    %v590 = vld [vmem:[%s589] sm:$0xff]
    %v591 = vld [vmem:[%s589 + $0x8] sm:$0xff]
    %v592 = vld [vmem:[%s589 + $0x10] sm:$0xff]
    %v593 = vld [vmem:[%s589 + $0x18] sm:$0xff]
    %v594 = vld [vmem:[%s589 + $0x20] sm:$0xff]
    %v595 = vld [vmem:[%s589 + $0x28] sm:$0xff]
    %v596 = vld [vmem:[%s589 + $0x30] sm:$0xff]
    %v597 = vld [vmem:[%s589 + $0x38] sm:$0xff]
    %v598 = vld [vmem:[%s589 + $0x40] sm:$0xff]
    %v599 = vld [vmem:[%s589 + $0x48] sm:$0xff]
    %v600 = vld [vmem:[%s589 + $0x50] sm:$0xff]
    %v601 = vld [vmem:[%s589 + $0x58] sm:$0xff]
    %v602 = vld [vmem:[%s589 + $0x60] sm:$0xff]
    %v603 = vld [vmem:[%s589 + $0x68] sm:$0xff]
    %v604 = vld [vmem:[%s589 + $0x70] sm:$0xff]
    %v605 = vld [vmem:[%s589 + $0x78] sm:$0xff]
    %v606 = vld [vmem:[%s589 + $0x80] sm:$0xff]
    %v607 = vld [vmem:[%s589 + $0x88] sm:$0xff]
    %v608 = vld [vmem:[%s589 + $0x90] sm:$0xff]
    %v609 = vld [vmem:[%s589 + $0x98] sm:$0xff]
    %v610 = vld [vmem:[%s589 + $0xa0] sm:$0xff]
    %v611 = vld [vmem:[%s589 + $0xa8] sm:$0xff]
    %v612 = vld [vmem:[%s589 + $0xb0] sm:$0xff]
    %v613 = vld [vmem:[%s589 + $0xb8] sm:$0xff]
    %v614 = vld [vmem:[%s589 + $0xc0] sm:$0xff]
    %v615 = vld [vmem:[%s589 + $0xc8] sm:$0xff]
    %v616 = vld [vmem:[%s589 + $0xd0] sm:$0xff]
    %v617 = vld [vmem:[%s589 + $0xd8] sm:$0xff]
    %v618 = vld [vmem:[%s589 + $0xe0] sm:$0xff]
    %v619 = vld [vmem:[%s589 + $0xe8] sm:$0xff]
    %v620 = vld [vmem:[%s589 + $0xf0] sm:$0xff]
    %v621 = vld [vmem:[%s589 + $0xf8] sm:$0xff]
    %622 = vmatprep.subr.mxu0 %v591
    %623 = vmatpush1.msra.mxu0 %v590
    %624 = vmatprep.subr.mxu0 %v593
    %625 = vmatpush1.msra.mxu0 %v592
    %626 = vmatprep.subr.mxu0 %v595
    %627 = vmatpush1.msra.mxu0 %v594
    %628 = vmatprep.subr.mxu0 %v597
    %629 = vmatpush1.msra.mxu0 %v596
    %630 = vmatprep.subr.mxu0 %v599
    %631 = vmatpush1.msra.mxu0 %v598
    %632 = vmatprep.subr.mxu0 %v601
    %633 = vmatpush1.msra.mxu0 %v600
    %634 = vmatprep.subr.mxu0 %v603
    %635 = vmatpush1.msra.mxu0 %v602
    %636 = vmatprep.subr.mxu0 %v605
    %637 = vmatpush1.msra.mxu0 %v604
    %638 = vmatprep.subr.mxu0 %v607
    %639 = vmatpush1.msra.mxu0 %v606
    %640 = vmatprep.subr.mxu0 %v609
    %641 = vmatpush1.msra.mxu0 %v608
    %642 = vmatprep.subr.mxu0 %v611
    %643 = vmatpush1.msra.mxu0 %v610
    %644 = vmatprep.subr.mxu0 %v613
    %645 = vmatpush1.msra.mxu0 %v612
    %646 = vmatprep.subr.mxu0 %v615
    %647 = vmatpush1.msra.mxu0 %v614
    %648 = vmatprep.subr.mxu0 %v617
    %649 = vmatpush1.msra.mxu0 %v616
    %650 = vmatprep.subr.mxu0 %v619
    %651 = vmatpush1.msra.mxu0 %v618
    %652 = vmatprep.subr.mxu0 %v621
    %653 = vmatpush1.msra.mxu0 %v620
    %654 = vmatprep.subr.mxu0 0.0
    %655 = vmatpush1.msra.mxu0 0.0
    %656 = vmatprep.subr.mxu0 0.0
    %657 = vmatpush1.msra.mxu0 0.0
    %658 = vmatprep.subr.mxu0 0.0
    %659 = vmatpush1.msra.mxu0 0.0
    %660 = vmatprep.subr.mxu0 0.0
    %661 = vmatpush1.msra.mxu0 0.0
    %662 = vmatprep.subr.mxu0 0.0
    %663 = vmatpush1.msra.mxu0 0.0
    %664 = vmatprep.subr.mxu0 0.0
    %665 = vmatpush1.msra.mxu0 0.0
    %666 = vmatprep.subr.mxu0 0.0
    %667 = vmatpush1.msra.mxu0 0.0
    %668 = vmatprep.subr.mxu0 0.0
    %669 = vmatpush1.msra.mxu0 0.0
    %670 = vmatprep.subr.mxu0 0.0
    %671 = vmatpush1.msra.mxu0 0.0
    %672 = vmatprep.subr.mxu0 0.0
    %673 = vmatpush1.msra.mxu0 0.0
    %674 = vmatprep.subr.mxu0 0.0
    %675 = vmatpush1.msra.mxu0 0.0
    %676 = vmatprep.subr.mxu0 0.0
    %677 = vmatpush1.msra.mxu0 0.0
    %678 = vmatprep.subr.mxu0 0.0
    %679 = vmatpush1.msra.mxu0 0.0
    %680 = vmatprep.subr.mxu0 0.0
    %681 = vmatpush1.msra.mxu0 0.0
    %682 = vmatprep.subr.mxu0 0.0
    %683 = vmatpush1.msra.mxu0 0.0
    %684 = vmatprep.subr.mxu0 0.0
    %685 = vmatpush1.msra.mxu0 0.0
    %686 = vmatprep.mubr.f32.mxu0 0.0
    %687 = vmatmul.mubr.f32.gmra.mrb[0].mxu0 %v580
    %v688 = vpop.f32.mrb[0].mxu0
    %v689 = vadd.f32 0.0, %v688
    %v690 = vpop.f32.mrb[0].mxu0
    %v691 = vadd.f32 0.0, %v690
    %692 = vmatprep.mubr.f32.mxu0 0.0
    %693 = vmatmul.mubr.f32.gmra.mrb[0].mxu0 %v581
    %v694 = vpop.f32.mrb[0].mxu0
    %v695 = vadd.f32 0.0, %v694
    %v696 = vpop.f32.mrb[0].mxu0
    %v697 = vadd.f32 0.0, %v696
    %698 = vmatprep.mubr.f32.mxu0 0.0
    %699 = vmatmul.mubr.f32.gmra.mrb[0].mxu0 %v582
    %v700 = vpop.f32.mrb[0].mxu0
    %v701 = vadd.f32 0.0, %v700
    %v702 = vpop.f32.mrb[0].mxu0
    %v703 = vadd.f32 0.0, %v702
    %704 = vmatprep.mubr.f32.mxu0 0.0
    %705 = vmatmul.mubr.f32.gmra.mrb[0].mxu0 %v583
    %v706 = vpop.f32.mrb[0].mxu0
    %v707 = vadd.f32 0.0, %v706
    %v708 = vpop.f32.mrb[0].mxu0
    %v709 = vadd.f32 0.0, %v708
    %710 = vmatprep.mubr.f32.mxu0 0.0
    %711 = vmatmul.mubr.f32.gmra.mrb[0].mxu0 %v584
    %v712 = vpop.f32.mrb[0].mxu0
    %v713 = vadd.f32 0.0, %v712
    %v714 = vpop.f32.mrb[0].mxu0
    %v715 = vadd.f32 0.0, %v714
    %716 = vmatprep.mubr.f32.mxu0 0.0
    %717 = vmatmul.mubr.f32.gmra.mrb[0].mxu0 %v585
    %v718 = vpop.f32.mrb[0].mxu0
    %v719 = vadd.f32 0.0, %v718
    %v720 = vpop.f32.mrb[0].mxu0
    %v721 = vadd.f32 0.0, %v720
    %722 = vmatprep.mubr.f32.mxu0 0.0
    %723 = vmatmul.mubr.f32.gmra.mrb[0].mxu0 %v586
    %v724 = vpop.f32.mrb[0].mxu0
    %v725 = vadd.f32 0.0, %v724
    %v726 = vpop.f32.mrb[0].mxu0
    %v727 = vadd.f32 0.0, %v726
    %728 = vmatprep.mubr.f32.mxu0 0.0
    %729 = vmatmul.mubr.f32.gmra.mrb[0].mxu0 %v587
    %v730 = vpop.f32.mrb[0].mxu0
    %v731 = vadd.f32 0.0, %v730
    %v732 = vpop.f32.mrb[0].mxu0
    %v733 = vadd.f32 0.0, %v732
    %734 = vmatprep.mubr.f32.mxu0 0.0
    %735 = vmatmul.mubr.f32.gmra.mrb[0].mxu0 %v588
    %v736 = vpop.f32.mrb[0].mxu0
    %v737 = vadd.f32 0.0, %v736
    %v738 = vpop.f32.mrb[0].mxu0
    %v739 = vadd.f32 0.0, %v738
    %740 = vdwg.mxu0
    %v741 = vadd.f32 %v562, %v689
    %v742 = vadd.f32 %v563, %v691
    %v743 = vadd.f32 %v564, %v695
    %v744 = vadd.f32 %v565, %v697
    %v745 = vadd.f32 %v566, %v701
    %v746 = vadd.f32 %v567, %v703
    %v747 = vadd.f32 %v568, %v707
    %v748 = vadd.f32 %v569, %v709
    %v749 = vadd.f32 %v570, %v713
    %v750 = vadd.f32 %v571, %v715
    %v751 = vadd.f32 %v572, %v719
    %v752 = vadd.f32 %v573, %v721
    %v753 = vadd.f32 %v574, %v725
    %v754 = vadd.f32 %v575, %v727
    %v755 = vadd.f32 %v576, %v731
    %v756 = vadd.f32 %v577, %v733
    %v757 = vadd.f32 %v578, %v737
    %v758 = vadd.f32 %v579, %v739
    %v759 = vld [vmem:[%s0 + $0x4] sm:$0xff]
    %v760 = vld [vmem:[%s0 + $0xc] sm:$0xff]
    %v761 = vld [vmem:[%s0 + $0x14] sm:$0xff]
    %v762 = vld [vmem:[%s0 + $0x1c] sm:$0xff]
    %v763 = vld [vmem:[%s0 + $0x24] sm:$0xff]
    %v764 = vld [vmem:[%s0 + $0x2c] sm:$0xff]
    %v765 = vld [vmem:[%s0 + $0x34] sm:$0xff]
    %v766 = vld [vmem:[%s0 + $0x3c] sm:$0xff]
    %v767 = vld [vmem:[%s0 + $0x44] sm:$0xff]
    %s768 = scalar_lea.vmem [#allocation5], 1024
    %v769 = vld [vmem:[%s768] sm:$0xff]
    %v770 = vld [vmem:[%s768 + $0x8] sm:$0xff]
    %v771 = vld [vmem:[%s768 + $0x10] sm:$0xff]
    %v772 = vld [vmem:[%s768 + $0x18] sm:$0xff]
    %v773 = vld [vmem:[%s768 + $0x20] sm:$0xff]
    %v774 = vld [vmem:[%s768 + $0x28] sm:$0xff]
    %v775 = vld [vmem:[%s768 + $0x30] sm:$0xff]
    %v776 = vld [vmem:[%s768 + $0x38] sm:$0xff]
    %v777 = vld [vmem:[%s768 + $0x40] sm:$0xff]
    %v778 = vld [vmem:[%s768 + $0x48] sm:$0xff]
    %v779 = vld [vmem:[%s768 + $0x50] sm:$0xff]
    %v780 = vld [vmem:[%s768 + $0x58] sm:$0xff]
    %v781 = vld [vmem:[%s768 + $0x60] sm:$0xff]
    %v782 = vld [vmem:[%s768 + $0x68] sm:$0xff]
    %v783 = vld [vmem:[%s768 + $0x70] sm:$0xff]
    %v784 = vld [vmem:[%s768 + $0x78] sm:$0xff]
    %v785 = vld [vmem:[%s768 + $0x80] sm:$0xff]
    %v786 = vld [vmem:[%s768 + $0x88] sm:$0xff]
    %v787 = vld [vmem:[%s768 + $0x90] sm:$0xff]
    %v788 = vld [vmem:[%s768 + $0x98] sm:$0xff]
    %v789 = vld [vmem:[%s768 + $0xa0] sm:$0xff]
    %v790 = vld [vmem:[%s768 + $0xa8] sm:$0xff]
    %v791 = vld [vmem:[%s768 + $0xb0] sm:$0xff]
    %v792 = vld [vmem:[%s768 + $0xb8] sm:$0xff]
    %v793 = vld [vmem:[%s768 + $0xc0] sm:$0xff]
    %v794 = vld [vmem:[%s768 + $0xc8] sm:$0xff]
    %v795 = vld [vmem:[%s768 + $0xd0] sm:$0xff]
    %v796 = vld [vmem:[%s768 + $0xd8] sm:$0xff]
    %v797 = vld [vmem:[%s768 + $0xe0] sm:$0xff]
    %v798 = vld [vmem:[%s768 + $0xe8] sm:$0xff]
    %v799 = vld [vmem:[%s768 + $0xf0] sm:$0xff]
    %v800 = vld [vmem:[%s768 + $0xf8] sm:$0xff]
    %801 = vmatprep.subr.mxu0 %v770
    %802 = vmatpush1.msra.mxu0 %v769
    %803 = vmatprep.subr.mxu0 %v772
    %804 = vmatpush1.msra.mxu0 %v771
    %805 = vmatprep.subr.mxu0 %v774
    %806 = vmatpush1.msra.mxu0 %v773
    %807 = vmatprep.subr.mxu0 %v776
    %808 = vmatpush1.msra.mxu0 %v775
    %809 = vmatprep.subr.mxu0 %v778
    %810 = vmatpush1.msra.mxu0 %v777
    %811 = vmatprep.subr.mxu0 %v780
    %812 = vmatpush1.msra.mxu0 %v779
    %813 = vmatprep.subr.mxu0 %v782
    %814 = vmatpush1.msra.mxu0 %v781
    %815 = vmatprep.subr.mxu0 %v784
    %816 = vmatpush1.msra.mxu0 %v783
    %817 = vmatprep.subr.mxu0 %v786
    %818 = vmatpush1.msra.mxu0 %v785
    %819 = vmatprep.subr.mxu0 %v788
    %820 = vmatpush1.msra.mxu0 %v787
    %821 = vmatprep.subr.mxu0 %v790
    %822 = vmatpush1.msra.mxu0 %v789
    %823 = vmatprep.subr.mxu0 %v792
    %824 = vmatpush1.msra.mxu0 %v791
    %825 = vmatprep.subr.mxu0 %v794
    %826 = vmatpush1.msra.mxu0 %v793
    %827 = vmatprep.subr.mxu0 %v796
    %828 = vmatpush1.msra.mxu0 %v795
    %829 = vmatprep.subr.mxu0 %v798
    %830 = vmatpush1.msra.mxu0 %v797
    %831 = vmatprep.subr.mxu0 %v800
    %832 = vmatpush1.msra.mxu0 %v799
    %833 = vmatprep.subr.mxu0 0.0
    %834 = vmatpush1.msra.mxu0 0.0
    %835 = vmatprep.subr.mxu0 0.0
    %836 = vmatpush1.msra.mxu0 0.0
    %837 = vmatprep.subr.mxu0 0.0
    %838 = vmatpush1.msra.mxu0 0.0
    %839 = vmatprep.subr.mxu0 0.0
    %840 = vmatpush1.msra.mxu0 0.0
    %841 = vmatprep.subr.mxu0 0.0
    %842 = vmatpush1.msra.mxu0 0.0
    %843 = vmatprep.subr.mxu0 0.0
    %844 = vmatpush1.msra.mxu0 0.0
    %845 = vmatprep.subr.mxu0 0.0
    %846 = vmatpush1.msra.mxu0 0.0
    %847 = vmatprep.subr.mxu0 0.0
    %848 = vmatpush1.msra.mxu0 0.0
    %849 = vmatprep.subr.mxu0 0.0
    %850 = vmatpush1.msra.mxu0 0.0
    %851 = vmatprep.subr.mxu0 0.0
    %852 = vmatpush1.msra.mxu0 0.0
    %853 = vmatprep.subr.mxu0 0.0
    %854 = vmatpush1.msra.mxu0 0.0
    %855 = vmatprep.subr.mxu0 0.0
    %856 = vmatpush1.msra.mxu0 0.0
    %857 = vmatprep.subr.mxu0 0.0
    %858 = vmatpush1.msra.mxu0 0.0
    %859 = vmatprep.subr.mxu0 0.0
    %860 = vmatpush1.msra.mxu0 0.0
    %861 = vmatprep.subr.mxu0 0.0
    %862 = vmatpush1.msra.mxu0 0.0
    %863 = vmatprep.subr.mxu0 0.0
    %864 = vmatpush1.msra.mxu0 0.0
    %865 = vmatprep.mubr.f32.mxu0 0.0
    %866 = vmatmul.mubr.f32.gmra.mrb[0].mxu0 %v759
    %v867 = vpop.f32.mrb[0].mxu0
    %v868 = vadd.f32 0.0, %v867
    %v869 = vpop.f32.mrb[0].mxu0
    %v870 = vadd.f32 0.0, %v869
    %871 = vmatprep.mubr.f32.mxu0 0.0
    %872 = vmatmul.mubr.f32.gmra.mrb[0].mxu0 %v760
    %v873 = vpop.f32.mrb[0].mxu0
    %v874 = vadd.f32 0.0, %v873
    %v875 = vpop.f32.mrb[0].mxu0
    %v876 = vadd.f32 0.0, %v875
    %877 = vmatprep.mubr.f32.mxu0 0.0
    %878 = vmatmul.mubr.f32.gmra.mrb[0].mxu0 %v761
    %v879 = vpop.f32.mrb[0].mxu0
    %v880 = vadd.f32 0.0, %v879
    %v881 = vpop.f32.mrb[0].mxu0
    %v882 = vadd.f32 0.0, %v881
    %883 = vmatprep.mubr.f32.mxu0 0.0
    %884 = vmatmul.mubr.f32.gmra.mrb[0].mxu0 %v762
    %v885 = vpop.f32.mrb[0].mxu0
    %v886 = vadd.f32 0.0, %v885
    %v887 = vpop.f32.mrb[0].mxu0
    %v888 = vadd.f32 0.0, %v887
    %889 = vmatprep.mubr.f32.mxu0 0.0
    %890 = vmatmul.mubr.f32.gmra.mrb[0].mxu0 %v763
    %v891 = vpop.f32.mrb[0].mxu0
    %v892 = vadd.f32 0.0, %v891
    %v893 = vpop.f32.mrb[0].mxu0
    %v894 = vadd.f32 0.0, %v893
    %895 = vmatprep.mubr.f32.mxu0 0.0
    %896 = vmatmul.mubr.f32.gmra.mrb[0].mxu0 %v764
    %v897 = vpop.f32.mrb[0].mxu0
    %v898 = vadd.f32 0.0, %v897
    %v899 = vpop.f32.mrb[0].mxu0
    %v900 = vadd.f32 0.0, %v899
    %901 = vmatprep.mubr.f32.mxu0 0.0
    %902 = vmatmul.mubr.f32.gmra.mrb[0].mxu0 %v765
    %v903 = vpop.f32.mrb[0].mxu0
    %v904 = vadd.f32 0.0, %v903
    %v905 = vpop.f32.mrb[0].mxu0
    %v906 = vadd.f32 0.0, %v905
    %907 = vmatprep.mubr.f32.mxu0 0.0
    %908 = vmatmul.mubr.f32.gmra.mrb[0].mxu0 %v766
    %v909 = vpop.f32.mrb[0].mxu0
    %v910 = vadd.f32 0.0, %v909
    %v911 = vpop.f32.mrb[0].mxu0
    %v912 = vadd.f32 0.0, %v911
    %913 = vmatprep.mubr.f32.mxu0 0.0
    %914 = vmatmul.mubr.f32.gmra.mrb[0].mxu0 %v767
    %v915 = vpop.f32.mrb[0].mxu0
    %v916 = vadd.f32 0.0, %v915
    %v917 = vpop.f32.mrb[0].mxu0
    %v918 = vadd.f32 0.0, %v917
    %919 = vdwg.mxu0
    %v920 = vadd.f32 %v741, %v868
    %v921 = vadd.f32 %v742, %v870
    %v922 = vadd.f32 %v743, %v874
    %v923 = vadd.f32 %v744, %v876
    %v924 = vadd.f32 %v745, %v880
    %v925 = vadd.f32 %v746, %v882
    %v926 = vadd.f32 %v747, %v886
    %v927 = vadd.f32 %v748, %v888
    %v928 = vadd.f32 %v749, %v892
    %v929 = vadd.f32 %v750, %v894
    %v930 = vadd.f32 %v751, %v898
    %v931 = vadd.f32 %v752, %v900
    %v932 = vadd.f32 %v753, %v904
    %v933 = vadd.f32 %v754, %v906
    %v934 = vadd.f32 %v755, %v910
    %v935 = vadd.f32 %v756, %v912
    %v936 = vadd.f32 %v757, %v916
    %v937 = vadd.f32 %v758, %v918
    %v938 = vld [vmem:[%s2] sm:$0x3]
    %v940 = vlaneseq
    %v941 = vshrl.u32 %v940, 7
    %v942 = vsub.s32 0, %v941
    %v943 = vrot.slane %v938, %v942
    %v944 = vlaneseq
    %v945 = vshrl.u32 %v944, 7
    %v946 = vsub.s32 1, %v945
    %v947 = vrot.slane %v938, %v946
    %v950 = vadd.f32 %v920, %v943
    %v951 = vadd.f32 %v921, %v947
    %v952 = vadd.f32 %v922, %v943
    %v953 = vadd.f32 %v923, %v947
    %v954 = vadd.f32 %v924, %v943
    %v955 = vadd.f32 %v925, %v947
    %v956 = vadd.f32 %v926, %v943
    %v957 = vadd.f32 %v927, %v947
    %v958 = vadd.f32 %v928, %v943
    %v959 = vadd.f32 %v929, %v947
    %v960 = vadd.f32 %v930, %v943
    %v961 = vadd.f32 %v931, %v947
    %v962 = vadd.f32 %v932, %v943
    %v963 = vadd.f32 %v933, %v947
    %v964 = vadd.f32 %v934, %v943
    %v965 = vadd.f32 %v935, %v947
    %v966 = vadd.f32 %v936, %v943
    %v967 = vadd.f32 %v937, %v947
    %v968 = vmax.f32 %v950, 0.0
    %v969 = vmax.f32 %v951, 0.0
    %v970 = vmax.f32 %v952, 0.0
    %v971 = vmax.f32 %v953, 0.0
    %v972 = vmax.f32 %v954, 0.0
    %v973 = vmax.f32 %v955, 0.0
    %v974 = vmax.f32 %v956, 0.0
    %v975 = vmax.f32 %v957, 0.0
    %v976 = vmax.f32 %v958, 0.0
    %v977 = vmax.f32 %v959, 0.0
    %v978 = vmax.f32 %v960, 0.0
    %v979 = vmax.f32 %v961, 0.0
    %v980 = vmax.f32 %v962, 0.0
    %v981 = vmax.f32 %v963, 0.0
    %v982 = vmax.f32 %v964, 0.0
    %v983 = vmax.f32 %v965, 0.0
    %v984 = vmax.f32 %v966, 0.0
    %v985 = vmax.f32 %v967, 0.0
    %v986 = vmax.f32 %v968, %v969
    %v987 = vmax.f32 %v970, %v971
    %v988 = vmax.f32 %v972, %v973
    %v989 = vmax.f32 %v974, %v975
    %v990 = vmax.f32 %v976, %v977
    %v991 = vmax.f32 %v978, %v979
    %v992 = vmax.f32 %v980, %v981
    %v993 = vmax.f32 %v982, %v983
    %v994 = vmax.f32 %v984, %v985
    %995 = vst [vmem:[#allocation2] sm:$0xff] %v986
    %996 = vst [vmem:[#allocation2 + $0x8] sm:$0xff] %v987
    %997 = vst [vmem:[#allocation2 + $0x10] sm:$0xff] %v988
    %998 = vst [vmem:[#allocation2 + $0x18] sm:$0xff] %v989
    %999 = vst [vmem:[#allocation2 + $0x20] sm:$0xff] %v990
    %1000 = vst [vmem:[#allocation2 + $0x28] sm:$0xff] %v991
    %1001 = vst [vmem:[#allocation2 + $0x30] sm:$0xff] %v992
    %1002 = vst [vmem:[#allocation2 + $0x38] sm:$0xff] %v993
    %1003 = vst [vmem:[#allocation2 + $0x40] sm:$0xff] %v994
    %1004 = vst [vmem:[#allocation2 + $0x48] sm:$0xff] 0.0
    %v1005 = vld [vmem:[#allocation2] sm:$0xff]
    %v1006 = vld [vmem:[#allocation2 + $0x8] sm:$0xff]
    %v1007 = vld [vmem:[#allocation2 + $0x10] sm:$0xff]
    %v1008 = vld [vmem:[#allocation2 + $0x18] sm:$0xff]
    %v1009 = vld [vmem:[#allocation2 + $0x20] sm:$0xff]
    %v1010 = vld [vmem:[#allocation2 + $0x28] sm:$0xff]
    %v1011 = vld [vmem:[#allocation2 + $0x30] sm:$0xff]
    %v1012 = vld [vmem:[#allocation2 + $0x38] sm:$0xff]
    %v1013 = vld [vmem:[#allocation2 + $0x1] sm:$0xff]
    %v1014 = vld [vmem:[#allocation2 + $0x9] sm:$0xff]
    %v1015 = vld [vmem:[#allocation2 + $0x11] sm:$0xff]
    %v1016 = vld [vmem:[#allocation2 + $0x19] sm:$0xff]
    %v1017 = vld [vmem:[#allocation2 + $0x21] sm:$0xff]
    %v1018 = vld [vmem:[#allocation2 + $0x29] sm:$0xff]
    %v1019 = vld [vmem:[#allocation2 + $0x31] sm:$0xff]
    %v1020 = vld [vmem:[#allocation2 + $0x39] sm:$0xff]
    %v1021 = vmax.f32 %v1005, %v1013
    %v1022 = vmax.f32 %v1006, %v1014
    %v1023 = vmax.f32 %v1007, %v1015
    %v1024 = vmax.f32 %v1008, %v1016
    %v1025 = vmax.f32 %v1009, %v1017
    %v1026 = vmax.f32 %v1010, %v1018
    %v1027 = vmax.f32 %v1011, %v1019
    %v1028 = vmax.f32 %v1012, %v1020
    %v1029 = vld [vmem:[#allocation8] sm:$0xff]
    %v1030 = vld [vmem:[#allocation8 + $0x8] sm:$0xff]
    %v1031 = vld [vmem:[#allocation8 + $0x10] sm:$0xff]
    %v1032 = vld [vmem:[#allocation8 + $0x18] sm:$0xff]
    %v1033 = vld [vmem:[#allocation8 + $0x20] sm:$0xff]
    %v1034 = vld [vmem:[#allocation8 + $0x28] sm:$0xff]
    %v1035 = vld [vmem:[#allocation8 + $0x30] sm:$0xff]
    %v1036 = vld [vmem:[#allocation8 + $0x38] sm:$0xff]
    %v1037 = vld [vmem:[#allocation8 + $0x40] sm:$0xff]
    %v1038 = vld [vmem:[#allocation8 + $0x48] sm:$0xff]
    %v1039 = vld [vmem:[#allocation8 + $0x50] sm:$0xff]
    %v1040 = vld [vmem:[#allocation8 + $0x58] sm:$0xff]
    %v1041 = vld [vmem:[#allocation8 + $0x60] sm:$0xff]
    %v1042 = vld [vmem:[#allocation8 + $0x68] sm:$0xff]
    %v1043 = vld [vmem:[#allocation8 + $0x70] sm:$0xff]
    %v1044 = vld [vmem:[#allocation8 + $0x78] sm:$0xff]
    %v1045 = vld [vmem:[#allocation8 + $0x80] sm:$0xff]
    %v1046 = vld [vmem:[#allocation8 + $0x88] sm:$0xff]
    %v1047 = vld [vmem:[#allocation8 + $0x90] sm:$0xff]
    %v1048 = vld [vmem:[#allocation8 + $0x98] sm:$0xff]
    %v1049 = vld [vmem:[#allocation8 + $0xa0] sm:$0xff]
    %v1050 = vld [vmem:[#allocation8 + $0xa8] sm:$0xff]
    %v1051 = vld [vmem:[#allocation8 + $0xb0] sm:$0xff]
    %v1052 = vld [vmem:[#allocation8 + $0xb8] sm:$0xff]
    %v1053 = vld [vmem:[#allocation8 + $0xc0] sm:$0xff]
    %v1054 = vld [vmem:[#allocation8 + $0xc8] sm:$0xff]
    %v1055 = vld [vmem:[#allocation8 + $0xd0] sm:$0xff]
    %v1056 = vld [vmem:[#allocation8 + $0xd8] sm:$0xff]
    %v1057 = vld [vmem:[#allocation8 + $0xe0] sm:$0xff]
    %v1058 = vld [vmem:[#allocation8 + $0xe8] sm:$0xff]
    %v1059 = vld [vmem:[#allocation8 + $0xf0] sm:$0xff]
    %v1060 = vld [vmem:[#allocation8 + $0xf8] sm:$0xff]
    %v1061 = vld [vmem:[#allocation2 + $0x2] sm:$0xff]
    %v1062 = vld [vmem:[#allocation2 + $0xa] sm:$0xff]
    %v1063 = vld [vmem:[#allocation2 + $0x12] sm:$0xff]
    %v1064 = vld [vmem:[#allocation2 + $0x1a] sm:$0xff]
    %v1065 = vld [vmem:[#allocation2 + $0x22] sm:$0xff]
    %v1066 = vld [vmem:[#allocation2 + $0x2a] sm:$0xff]
    %v1067 = vld [vmem:[#allocation2 + $0x32] sm:$0xff]
    %v1068 = vld [vmem:[#allocation2 + $0x3a] sm:$0xff]
    %v1069 = vld [vmem:[#allocation2 + $0x3] sm:$0xff]
    %v1070 = vld [vmem:[#allocation2 + $0xb] sm:$0xff]
    %v1071 = vld [vmem:[#allocation2 + $0x13] sm:$0xff]
    %v1072 = vld [vmem:[#allocation2 + $0x1b] sm:$0xff]
    %v1073 = vld [vmem:[#allocation2 + $0x23] sm:$0xff]
    %v1074 = vld [vmem:[#allocation2 + $0x2b] sm:$0xff]
    %v1075 = vld [vmem:[#allocation2 + $0x33] sm:$0xff]
    %v1076 = vld [vmem:[#allocation2 + $0x3b] sm:$0xff]
    %v1077 = vmax.f32 %v1061, %v1069
    %v1078 = vmax.f32 %v1062, %v1070
    %v1079 = vmax.f32 %v1063, %v1071
    %v1080 = vmax.f32 %v1064, %v1072
    %v1081 = vmax.f32 %v1065, %v1073
    %v1082 = vmax.f32 %v1066, %v1074
    %v1083 = vmax.f32 %v1067, %v1075
    %v1084 = vmax.f32 %v1068, %v1076
    %s1085 = scalar_lea.vmem [#allocation8], 256
    %v1086 = vld [vmem:[%s1085] sm:$0xff]
    %v1087 = vld [vmem:[%s1085 + $0x8] sm:$0xff]
    %v1088 = vld [vmem:[%s1085 + $0x10] sm:$0xff]
    %v1089 = vld [vmem:[%s1085 + $0x18] sm:$0xff]
    %v1090 = vld [vmem:[%s1085 + $0x20] sm:$0xff]
    %v1091 = vld [vmem:[%s1085 + $0x28] sm:$0xff]
    %v1092 = vld [vmem:[%s1085 + $0x30] sm:$0xff]
    %v1093 = vld [vmem:[%s1085 + $0x38] sm:$0xff]
    %v1094 = vld [vmem:[%s1085 + $0x40] sm:$0xff]
    %v1095 = vld [vmem:[%s1085 + $0x48] sm:$0xff]
    %v1096 = vld [vmem:[%s1085 + $0x50] sm:$0xff]
    %v1097 = vld [vmem:[%s1085 + $0x58] sm:$0xff]
    %v1098 = vld [vmem:[%s1085 + $0x60] sm:$0xff]
    %v1099 = vld [vmem:[%s1085 + $0x68] sm:$0xff]
    %v1100 = vld [vmem:[%s1085 + $0x70] sm:$0xff]
    %v1101 = vld [vmem:[%s1085 + $0x78] sm:$0xff]
    %v1102 = vld [vmem:[%s1085 + $0x80] sm:$0xff]
    %v1103 = vld [vmem:[%s1085 + $0x88] sm:$0xff]
    %v1104 = vld [vmem:[%s1085 + $0x90] sm:$0xff]
    %v1105 = vld [vmem:[%s1085 + $0x98] sm:$0xff]
    %v1106 = vld [vmem:[%s1085 + $0xa0] sm:$0xff]
    %v1107 = vld [vmem:[%s1085 + $0xa8] sm:$0xff]
    %v1108 = vld [vmem:[%s1085 + $0xb0] sm:$0xff]
    %v1109 = vld [vmem:[%s1085 + $0xb8] sm:$0xff]
    %v1110 = vld [vmem:[%s1085 + $0xc0] sm:$0xff]
    %v1111 = vld [vmem:[%s1085 + $0xc8] sm:$0xff]
    %v1112 = vld [vmem:[%s1085 + $0xd0] sm:$0xff]
    %v1113 = vld [vmem:[%s1085 + $0xd8] sm:$0xff]
    %v1114 = vld [vmem:[%s1085 + $0xe0] sm:$0xff]
    %v1115 = vld [vmem:[%s1085 + $0xe8] sm:$0xff]
    %v1116 = vld [vmem:[%s1085 + $0xf0] sm:$0xff]
    %v1117 = vld [vmem:[%s1085 + $0xf8] sm:$0xff]
    %1118 = vmatprep.subr.mxu0 %v1087
    %1119 = vmatpush1.msra.mxu0 %v1086
    %1120 = vmatprep.subr.mxu0 %v1089
    %1121 = vmatpush1.msra.mxu0 %v1088
    %1122 = vmatprep.subr.mxu0 %v1091
    %1123 = vmatpush1.msra.mxu0 %v1090
    %1124 = vmatprep.subr.mxu0 %v1093
    %1125 = vmatpush1.msra.mxu0 %v1092
    %1126 = vmatprep.subr.mxu0 %v1095
    %1127 = vmatpush1.msra.mxu0 %v1094
    %1128 = vmatprep.subr.mxu0 %v1097
    %1129 = vmatpush1.msra.mxu0 %v1096
    %1130 = vmatprep.subr.mxu0 %v1099
    %1131 = vmatpush1.msra.mxu0 %v1098
    %1132 = vmatprep.subr.mxu0 %v1101
    %1133 = vmatpush1.msra.mxu0 %v1100
    %1134 = vmatprep.subr.mxu0 %v1103
    %1135 = vmatpush1.msra.mxu0 %v1102
    %1136 = vmatprep.subr.mxu0 %v1105
    %1137 = vmatpush1.msra.mxu0 %v1104
    %1138 = vmatprep.subr.mxu0 %v1107
    %1139 = vmatpush1.msra.mxu0 %v1106
    %1140 = vmatprep.subr.mxu0 %v1109
    %1141 = vmatpush1.msra.mxu0 %v1108
    %1142 = vmatprep.subr.mxu0 %v1111
    %1143 = vmatpush1.msra.mxu0 %v1110
    %1144 = vmatprep.subr.mxu0 %v1113
    %1145 = vmatpush1.msra.mxu0 %v1112
    %1146 = vmatprep.subr.mxu0 %v1115
    %1147 = vmatpush1.msra.mxu0 %v1114
    %1148 = vmatprep.subr.mxu0 %v1117
    %1149 = vmatpush1.msra.mxu0 %v1116
    %1150 = vmatprep.subr.mxu0 0.0
    %1151 = vmatpush1.msra.mxu0 0.0
    %1152 = vmatprep.subr.mxu0 0.0
    %1153 = vmatpush1.msra.mxu0 0.0
    %1154 = vmatprep.subr.mxu0 0.0
    %1155 = vmatpush1.msra.mxu0 0.0
    %1156 = vmatprep.subr.mxu0 0.0
    %1157 = vmatpush1.msra.mxu0 0.0
    %1158 = vmatprep.subr.mxu0 0.0
    %1159 = vmatpush1.msra.mxu0 0.0
    %1160 = vmatprep.subr.mxu0 0.0
    %1161 = vmatpush1.msra.mxu0 0.0
    %1162 = vmatprep.subr.mxu0 0.0
    %1163 = vmatpush1.msra.mxu0 0.0
    %1164 = vmatprep.subr.mxu0 0.0
    %1165 = vmatpush1.msra.mxu0 0.0
    %1166 = vmatprep.subr.mxu0 0.0
    %1167 = vmatpush1.msra.mxu0 0.0
    %1168 = vmatprep.subr.mxu0 0.0
    %1169 = vmatpush1.msra.mxu0 0.0
    %1170 = vmatprep.subr.mxu0 0.0
    %1171 = vmatpush1.msra.mxu0 0.0
    %1172 = vmatprep.subr.mxu0 0.0
    %1173 = vmatpush1.msra.mxu0 0.0
    %1174 = vmatprep.subr.mxu0 0.0
    %1175 = vmatpush1.msra.mxu0 0.0
    %1176 = vmatprep.subr.mxu0 0.0
    %1177 = vmatpush1.msra.mxu0 0.0
    %1178 = vmatprep.subr.mxu0 0.0
    %1179 = vmatpush1.msra.mxu0 0.0
    %1180 = vmatprep.subr.mxu0 0.0
    %1181 = vmatpush1.msra.mxu0 0.0
    %1182 = vmatprep.mubr.f32.mxu0 0.0
    %1183 = vmatmul.mubr.f32.gmra.mrb[0].mxu0 %v1077
    %v1184 = vpop.f32.mrb[0].mxu0
    %v1185 = vadd.f32 0.0, %v1184
    %v1186 = vpop.f32.mrb[0].mxu0
    %v1187 = vadd.f32 0.0, %v1186
    %1188 = vmatprep.mubr.f32.mxu0 0.0
    %1189 = vmatmul.mubr.f32.gmra.mrb[0].mxu0 %v1078
    %v1190 = vpop.f32.mrb[0].mxu0
    %v1191 = vadd.f32 0.0, %v1190
    %v1192 = vpop.f32.mrb[0].mxu0
    %v1193 = vadd.f32 0.0, %v1192
    %1194 = vmatprep.mubr.f32.mxu0 0.0
    %1195 = vmatmul.mubr.f32.gmra.mrb[0].mxu0 %v1079
    %v1196 = vpop.f32.mrb[0].mxu0
    %v1197 = vadd.f32 0.0, %v1196
    %v1198 = vpop.f32.mrb[0].mxu0
    %v1199 = vadd.f32 0.0, %v1198
    %1200 = vmatprep.mubr.f32.mxu0 0.0
    %1201 = vmatmul.mubr.f32.gmra.mrb[0].mxu0 %v1080
    %v1202 = vpop.f32.mrb[0].mxu0
    %v1203 = vadd.f32 0.0, %v1202
    %v1204 = vpop.f32.mrb[0].mxu0
    %v1205 = vadd.f32 0.0, %v1204
    %1206 = vmatprep.mubr.f32.mxu0 0.0
    %1207 = vmatmul.mubr.f32.gmra.mrb[0].mxu0 %v1081
    %v1208 = vpop.f32.mrb[0].mxu0
    %v1209 = vadd.f32 0.0, %v1208
    %v1210 = vpop.f32.mrb[0].mxu0
    %v1211 = vadd.f32 0.0, %v1210
    %1212 = vmatprep.mubr.f32.mxu0 0.0
    %1213 = vmatmul.mubr.f32.gmra.mrb[0].mxu0 %v1082
    %v1214 = vpop.f32.mrb[0].mxu0
    %v1215 = vadd.f32 0.0, %v1214
    %v1216 = vpop.f32.mrb[0].mxu0
    %v1217 = vadd.f32 0.0, %v1216
    %1218 = vmatprep.mubr.f32.mxu0 0.0
    %1219 = vmatmul.mubr.f32.gmra.mrb[0].mxu0 %v1083
    %v1220 = vpop.f32.mrb[0].mxu0
    %v1221 = vadd.f32 0.0, %v1220
    %v1222 = vpop.f32.mrb[0].mxu0
    %v1223 = vadd.f32 0.0, %v1222
    %1224 = vmatprep.mubr.f32.mxu0 0.0
    %1225 = vmatmul.mubr.f32.gmra.mrb[0].mxu0 %v1084
    %v1226 = vpop.f32.mrb[0].mxu0
    %v1227 = vadd.f32 0.0, %v1226
    %v1228 = vpop.f32.mrb[0].mxu0
    %v1229 = vadd.f32 0.0, %v1228
    %1230 = vdwg.mxu0
    %1231 = vmatprep.subr.mxu0 %v1030
    %1232 = vmatpush1.msra.mxu0 %v1029
    %1233 = vmatprep.subr.mxu0 %v1032
    %1234 = vmatpush1.msra.mxu0 %v1031
    %1235 = vmatprep.subr.mxu0 %v1034
    %1236 = vmatpush1.msra.mxu0 %v1033
    %1237 = vmatprep.subr.mxu0 %v1036
    %1238 = vmatpush1.msra.mxu0 %v1035
    %1239 = vmatprep.subr.mxu0 %v1038
    %1240 = vmatpush1.msra.mxu0 %v1037
    %1241 = vmatprep.subr.mxu0 %v1040
    %1242 = vmatpush1.msra.mxu0 %v1039
    %1243 = vmatprep.subr.mxu0 %v1042
    %1244 = vmatpush1.msra.mxu0 %v1041
    %1245 = vmatprep.subr.mxu0 %v1044
    %1246 = vmatpush1.msra.mxu0 %v1043
    %1247 = vmatprep.subr.mxu0 %v1046
    %1248 = vmatpush1.msra.mxu0 %v1045
    %1249 = vmatprep.subr.mxu0 %v1048
    %1250 = vmatpush1.msra.mxu0 %v1047
    %1251 = vmatprep.subr.mxu0 %v1050
    %1252 = vmatpush1.msra.mxu0 %v1049
    %1253 = vmatprep.subr.mxu0 %v1052
    %1254 = vmatpush1.msra.mxu0 %v1051
    %1255 = vmatprep.subr.mxu0 %v1054
    %1256 = vmatpush1.msra.mxu0 %v1053
    %1257 = vmatprep.subr.mxu0 %v1056
    %1258 = vmatpush1.msra.mxu0 %v1055
    %1259 = vmatprep.subr.mxu0 %v1058
    %1260 = vmatpush1.msra.mxu0 %v1057
    %1261 = vmatprep.subr.mxu0 %v1060
    %1262 = vmatpush1.msra.mxu0 %v1059
    %1263 = vmatprep.subr.mxu0 0.0
    %1264 = vmatpush1.msra.mxu0 0.0
    %1265 = vmatprep.subr.mxu0 0.0
    %1266 = vmatpush1.msra.mxu0 0.0
    %1267 = vmatprep.subr.mxu0 0.0
    %1268 = vmatpush1.msra.mxu0 0.0
    %1269 = vmatprep.subr.mxu0 0.0
    %1270 = vmatpush1.msra.mxu0 0.0
    %1271 = vmatprep.subr.mxu0 0.0
    %1272 = vmatpush1.msra.mxu0 0.0
    %1273 = vmatprep.subr.mxu0 0.0
    %1274 = vmatpush1.msra.mxu0 0.0
    %1275 = vmatprep.subr.mxu0 0.0
    %1276 = vmatpush1.msra.mxu0 0.0
    %1277 = vmatprep.subr.mxu0 0.0
    %1278 = vmatpush1.msra.mxu0 0.0
    %1279 = vmatprep.subr.mxu0 0.0
    %1280 = vmatpush1.msra.mxu0 0.0
    %1281 = vmatprep.subr.mxu0 0.0
    %1282 = vmatpush1.msra.mxu0 0.0
    %1283 = vmatprep.subr.mxu0 0.0
    %1284 = vmatpush1.msra.mxu0 0.0
    %1285 = vmatprep.subr.mxu0 0.0
    %1286 = vmatpush1.msra.mxu0 0.0
    %1287 = vmatprep.subr.mxu0 0.0
    %1288 = vmatpush1.msra.mxu0 0.0
    %1289 = vmatprep.subr.mxu0 0.0
    %1290 = vmatpush1.msra.mxu0 0.0
    %1291 = vmatprep.subr.mxu0 0.0
    %1292 = vmatpush1.msra.mxu0 0.0
    %1293 = vmatprep.subr.mxu0 0.0
    %1294 = vmatpush1.msra.mxu0 0.0
    %1295 = vmatprep.mubr.f32.mxu0 0.0
    %1296 = vmatmul.mubr.f32.gmra.mrb[0].mxu0 %v1021
    %v1297 = vpop.f32.mrb[0].mxu0
    %v1298 = vadd.f32 %v1185, %v1297
    %v1299 = vpop.f32.mrb[0].mxu0
    %v1300 = vadd.f32 %v1187, %v1299
    %1301 = vmatprep.mubr.f32.mxu0 0.0
    %1302 = vmatmul.mubr.f32.gmra.mrb[0].mxu0 %v1022
    %v1303 = vpop.f32.mrb[0].mxu0
    %v1304 = vadd.f32 %v1191, %v1303
    %v1305 = vpop.f32.mrb[0].mxu0
    %v1306 = vadd.f32 %v1193, %v1305
    %1307 = vmatprep.mubr.f32.mxu0 0.0
    %1308 = vmatmul.mubr.f32.gmra.mrb[0].mxu0 %v1023
    %v1309 = vpop.f32.mrb[0].mxu0
    %v1310 = vadd.f32 %v1197, %v1309
    %v1311 = vpop.f32.mrb[0].mxu0
    %v1312 = vadd.f32 %v1199, %v1311
    %1313 = vmatprep.mubr.f32.mxu0 0.0
    %1314 = vmatmul.mubr.f32.gmra.mrb[0].mxu0 %v1024
    %v1315 = vpop.f32.mrb[0].mxu0
    %v1316 = vadd.f32 %v1203, %v1315
    %v1317 = vpop.f32.mrb[0].mxu0
    %v1318 = vadd.f32 %v1205, %v1317
    %1319 = vmatprep.mubr.f32.mxu0 0.0
    %1320 = vmatmul.mubr.f32.gmra.mrb[0].mxu0 %v1025
    %v1321 = vpop.f32.mrb[0].mxu0
    %v1322 = vadd.f32 %v1209, %v1321
    %v1323 = vpop.f32.mrb[0].mxu0
    %v1324 = vadd.f32 %v1211, %v1323
    %1325 = vmatprep.mubr.f32.mxu0 0.0
    %1326 = vmatmul.mubr.f32.gmra.mrb[0].mxu0 %v1026
    %v1327 = vpop.f32.mrb[0].mxu0
    %v1328 = vadd.f32 %v1215, %v1327
    %v1329 = vpop.f32.mrb[0].mxu0
    %v1330 = vadd.f32 %v1217, %v1329
    %1331 = vmatprep.mubr.f32.mxu0 0.0
    %1332 = vmatmul.mubr.f32.gmra.mrb[0].mxu0 %v1027
    %v1333 = vpop.f32.mrb[0].mxu0
    %v1334 = vadd.f32 %v1221, %v1333
    %v1335 = vpop.f32.mrb[0].mxu0
    %v1336 = vadd.f32 %v1223, %v1335
    %1337 = vmatprep.mubr.f32.mxu0 0.0
    %1338 = vmatmul.mubr.f32.gmra.mrb[0].mxu0 %v1028
    %v1339 = vpop.f32.mrb[0].mxu0
    %v1340 = vadd.f32 %v1227, %v1339
    %v1341 = vpop.f32.mrb[0].mxu0
    %v1342 = vadd.f32 %v1229, %v1341
    %1343 = vdwg.mxu0
    %v1344 = vld [vmem:[#allocation2 + $0x4] sm:$0xff]
    %v1345 = vld [vmem:[#allocation2 + $0xc] sm:$0xff]
    %v1346 = vld [vmem:[#allocation2 + $0x14] sm:$0xff]
    %v1347 = vld [vmem:[#allocation2 + $0x1c] sm:$0xff]
    %v1348 = vld [vmem:[#allocation2 + $0x24] sm:$0xff]
    %v1349 = vld [vmem:[#allocation2 + $0x2c] sm:$0xff]
    %v1350 = vld [vmem:[#allocation2 + $0x34] sm:$0xff]
    %v1351 = vld [vmem:[#allocation2 + $0x3c] sm:$0xff]
    %v1352 = vld [vmem:[#allocation2 + $0x5] sm:$0xff]
    %v1353 = vld [vmem:[#allocation2 + $0xd] sm:$0xff]
    %v1354 = vld [vmem:[#allocation2 + $0x15] sm:$0xff]
    %v1355 = vld [vmem:[#allocation2 + $0x1d] sm:$0xff]
    %v1356 = vld [vmem:[#allocation2 + $0x25] sm:$0xff]
    %v1357 = vld [vmem:[#allocation2 + $0x2d] sm:$0xff]
    %v1358 = vld [vmem:[#allocation2 + $0x35] sm:$0xff]
    %v1359 = vld [vmem:[#allocation2 + $0x3d] sm:$0xff]
    %v1360 = vmax.f32 %v1344, %v1352
    %v1361 = vmax.f32 %v1345, %v1353
    %v1362 = vmax.f32 %v1346, %v1354
    %v1363 = vmax.f32 %v1347, %v1355
    %v1364 = vmax.f32 %v1348, %v1356
    %v1365 = vmax.f32 %v1349, %v1357
    %v1366 = vmax.f32 %v1350, %v1358
    %v1367 = vmax.f32 %v1351, %v1359
    %s1368 = scalar_lea.vmem [#allocation8], 512
    %v1369 = vld [vmem:[%s1368] sm:$0xff]
    %v1370 = vld [vmem:[%s1368 + $0x8] sm:$0xff]
    %v1371 = vld [vmem:[%s1368 + $0x10] sm:$0xff]
    %v1372 = vld [vmem:[%s1368 + $0x18] sm:$0xff]
    %v1373 = vld [vmem:[%s1368 + $0x20] sm:$0xff]
    %v1374 = vld [vmem:[%s1368 + $0x28] sm:$0xff]
    %v1375 = vld [vmem:[%s1368 + $0x30] sm:$0xff]
    %v1376 = vld [vmem:[%s1368 + $0x38] sm:$0xff]
    %v1377 = vld [vmem:[%s1368 + $0x40] sm:$0xff]
    %v1378 = vld [vmem:[%s1368 + $0x48] sm:$0xff]
    %v1379 = vld [vmem:[%s1368 + $0x50] sm:$0xff]
    %v1380 = vld [vmem:[%s1368 + $0x58] sm:$0xff]
    %v1381 = vld [vmem:[%s1368 + $0x60] sm:$0xff]
    %v1382 = vld [vmem:[%s1368 + $0x68] sm:$0xff]
    %v1383 = vld [vmem:[%s1368 + $0x70] sm:$0xff]
    %v1384 = vld [vmem:[%s1368 + $0x78] sm:$0xff]
    %v1385 = vld [vmem:[%s1368 + $0x80] sm:$0xff]
    %v1386 = vld [vmem:[%s1368 + $0x88] sm:$0xff]
    %v1387 = vld [vmem:[%s1368 + $0x90] sm:$0xff]
    %v1388 = vld [vmem:[%s1368 + $0x98] sm:$0xff]
    %v1389 = vld [vmem:[%s1368 + $0xa0] sm:$0xff]
    %v1390 = vld [vmem:[%s1368 + $0xa8] sm:$0xff]
    %v1391 = vld [vmem:[%s1368 + $0xb0] sm:$0xff]
    %v1392 = vld [vmem:[%s1368 + $0xb8] sm:$0xff]
    %v1393 = vld [vmem:[%s1368 + $0xc0] sm:$0xff]
    %v1394 = vld [vmem:[%s1368 + $0xc8] sm:$0xff]
    %v1395 = vld [vmem:[%s1368 + $0xd0] sm:$0xff]
    %v1396 = vld [vmem:[%s1368 + $0xd8] sm:$0xff]
    %v1397 = vld [vmem:[%s1368 + $0xe0] sm:$0xff]
    %v1398 = vld [vmem:[%s1368 + $0xe8] sm:$0xff]
    %v1399 = vld [vmem:[%s1368 + $0xf0] sm:$0xff]
    %v1400 = vld [vmem:[%s1368 + $0xf8] sm:$0xff]
    %1401 = vmatprep.subr.mxu0 %v1370
    %1402 = vmatpush1.msra.mxu0 %v1369
    %1403 = vmatprep.subr.mxu0 %v1372
    %1404 = vmatpush1.msra.mxu0 %v1371
    %1405 = vmatprep.subr.mxu0 %v1374
    %1406 = vmatpush1.msra.mxu0 %v1373
    %1407 = vmatprep.subr.mxu0 %v1376
    %1408 = vmatpush1.msra.mxu0 %v1375
    %1409 = vmatprep.subr.mxu0 %v1378
    %1410 = vmatpush1.msra.mxu0 %v1377
    %1411 = vmatprep.subr.mxu0 %v1380
    %1412 = vmatpush1.msra.mxu0 %v1379
    %1413 = vmatprep.subr.mxu0 %v1382
    %1414 = vmatpush1.msra.mxu0 %v1381
    %1415 = vmatprep.subr.mxu0 %v1384
    %1416 = vmatpush1.msra.mxu0 %v1383
    %1417 = vmatprep.subr.mxu0 %v1386
    %1418 = vmatpush1.msra.mxu0 %v1385
    %1419 = vmatprep.subr.mxu0 %v1388
    %1420 = vmatpush1.msra.mxu0 %v1387
    %1421 = vmatprep.subr.mxu0 %v1390
    %1422 = vmatpush1.msra.mxu0 %v1389
    %1423 = vmatprep.subr.mxu0 %v1392
    %1424 = vmatpush1.msra.mxu0 %v1391
    %1425 = vmatprep.subr.mxu0 %v1394
    %1426 = vmatpush1.msra.mxu0 %v1393
    %1427 = vmatprep.subr.mxu0 %v1396
    %1428 = vmatpush1.msra.mxu0 %v1395
    %1429 = vmatprep.subr.mxu0 %v1398
    %1430 = vmatpush1.msra.mxu0 %v1397
    %1431 = vmatprep.subr.mxu0 %v1400
    %1432 = vmatpush1.msra.mxu0 %v1399
    %1433 = vmatprep.subr.mxu0 0.0
    %1434 = vmatpush1.msra.mxu0 0.0
    %1435 = vmatprep.subr.mxu0 0.0
    %1436 = vmatpush1.msra.mxu0 0.0
    %1437 = vmatprep.subr.mxu0 0.0
    %1438 = vmatpush1.msra.mxu0 0.0
    %1439 = vmatprep.subr.mxu0 0.0
    %1440 = vmatpush1.msra.mxu0 0.0
    %1441 = vmatprep.subr.mxu0 0.0
    %1442 = vmatpush1.msra.mxu0 0.0
    %1443 = vmatprep.subr.mxu0 0.0
    %1444 = vmatpush1.msra.mxu0 0.0
    %1445 = vmatprep.subr.mxu0 0.0
    %1446 = vmatpush1.msra.mxu0 0.0
    %1447 = vmatprep.subr.mxu0 0.0
    %1448 = vmatpush1.msra.mxu0 0.0
    %1449 = vmatprep.subr.mxu0 0.0
    %1450 = vmatpush1.msra.mxu0 0.0
    %1451 = vmatprep.subr.mxu0 0.0
    %1452 = vmatpush1.msra.mxu0 0.0
    %1453 = vmatprep.subr.mxu0 0.0
    %1454 = vmatpush1.msra.mxu0 0.0
    %1455 = vmatprep.subr.mxu0 0.0
    %1456 = vmatpush1.msra.mxu0 0.0
    %1457 = vmatprep.subr.mxu0 0.0
    %1458 = vmatpush1.msra.mxu0 0.0
    %1459 = vmatprep.subr.mxu0 0.0
    %1460 = vmatpush1.msra.mxu0 0.0
    %1461 = vmatprep.subr.mxu0 0.0
    %1462 = vmatpush1.msra.mxu0 0.0
    %1463 = vmatprep.subr.mxu0 0.0
    %1464 = vmatpush1.msra.mxu0 0.0
    %1465 = vmatprep.mubr.f32.mxu0 0.0
    %1466 = vmatmul.mubr.f32.gmra.mrb[0].mxu0 %v1360
    %v1467 = vpop.f32.mrb[0].mxu0
    %v1468 = vadd.f32 0.0, %v1467
    %v1469 = vpop.f32.mrb[0].mxu0
    %v1470 = vadd.f32 0.0, %v1469
    %1471 = vmatprep.mubr.f32.mxu0 0.0
    %1472 = vmatmul.mubr.f32.gmra.mrb[0].mxu0 %v1361
    %v1473 = vpop.f32.mrb[0].mxu0
    %v1474 = vadd.f32 0.0, %v1473
    %v1475 = vpop.f32.mrb[0].mxu0
    %v1476 = vadd.f32 0.0, %v1475
    %1477 = vmatprep.mubr.f32.mxu0 0.0
    %1478 = vmatmul.mubr.f32.gmra.mrb[0].mxu0 %v1362
    %v1479 = vpop.f32.mrb[0].mxu0
    %v1480 = vadd.f32 0.0, %v1479
    %v1481 = vpop.f32.mrb[0].mxu0
    %v1482 = vadd.f32 0.0, %v1481
    %1483 = vmatprep.mubr.f32.mxu0 0.0
    %1484 = vmatmul.mubr.f32.gmra.mrb[0].mxu0 %v1363
    %v1485 = vpop.f32.mrb[0].mxu0
    %v1486 = vadd.f32 0.0, %v1485
    %v1487 = vpop.f32.mrb[0].mxu0
    %v1488 = vadd.f32 0.0, %v1487
    %1489 = vmatprep.mubr.f32.mxu0 0.0
    %1490 = vmatmul.mubr.f32.gmra.mrb[0].mxu0 %v1364
    %v1491 = vpop.f32.mrb[0].mxu0
    %v1492 = vadd.f32 0.0, %v1491
    %v1493 = vpop.f32.mrb[0].mxu0
    %v1494 = vadd.f32 0.0, %v1493
    %1495 = vmatprep.mubr.f32.mxu0 0.0
    %1496 = vmatmul.mubr.f32.gmra.mrb[0].mxu0 %v1365
    %v1497 = vpop.f32.mrb[0].mxu0
    %v1498 = vadd.f32 0.0, %v1497
    %v1499 = vpop.f32.mrb[0].mxu0
    %v1500 = vadd.f32 0.0, %v1499
    %1501 = vmatprep.mubr.f32.mxu0 0.0
    %1502 = vmatmul.mubr.f32.gmra.mrb[0].mxu0 %v1366
    %v1503 = vpop.f32.mrb[0].mxu0
    %v1504 = vadd.f32 0.0, %v1503
    %v1505 = vpop.f32.mrb[0].mxu0
    %v1506 = vadd.f32 0.0, %v1505
    %1507 = vmatprep.mubr.f32.mxu0 0.0
    %1508 = vmatmul.mubr.f32.gmra.mrb[0].mxu0 %v1367
    %v1509 = vpop.f32.mrb[0].mxu0
    %v1510 = vadd.f32 0.0, %v1509
    %v1511 = vpop.f32.mrb[0].mxu0
    %v1512 = vadd.f32 0.0, %v1511
    %1513 = vdwg.mxu0
    %v1514 = vadd.f32 %v1298, %v1468
    %v1515 = vadd.f32 %v1300, %v1470
    %v1516 = vadd.f32 %v1304, %v1474
    %v1517 = vadd.f32 %v1306, %v1476
    %v1518 = vadd.f32 %v1310, %v1480
    %v1519 = vadd.f32 %v1312, %v1482
    %v1520 = vadd.f32 %v1316, %v1486
    %v1521 = vadd.f32 %v1318, %v1488
    %v1522 = vadd.f32 %v1322, %v1492
    %v1523 = vadd.f32 %v1324, %v1494
    %v1524 = vadd.f32 %v1328, %v1498
    %v1525 = vadd.f32 %v1330, %v1500
    %v1526 = vadd.f32 %v1334, %v1504
    %v1527 = vadd.f32 %v1336, %v1506
    %v1528 = vadd.f32 %v1340, %v1510
    %v1529 = vadd.f32 %v1342, %v1512
    %v1530 = vld [vmem:[#allocation2 + $0x6] sm:$0xff]
    %v1531 = vld [vmem:[#allocation2 + $0xe] sm:$0xff]
    %v1532 = vld [vmem:[#allocation2 + $0x16] sm:$0xff]
    %v1533 = vld [vmem:[#allocation2 + $0x1e] sm:$0xff]
    %v1534 = vld [vmem:[#allocation2 + $0x26] sm:$0xff]
    %v1535 = vld [vmem:[#allocation2 + $0x2e] sm:$0xff]
    %v1536 = vld [vmem:[#allocation2 + $0x36] sm:$0xff]
    %v1537 = vld [vmem:[#allocation2 + $0x3e] sm:$0xff]
    %v1538 = vld [vmem:[#allocation2 + $0x7] sm:$0xff]
    %v1539 = vld [vmem:[#allocation2 + $0xf] sm:$0xff]
    %v1540 = vld [vmem:[#allocation2 + $0x17] sm:$0xff]
    %v1541 = vld [vmem:[#allocation2 + $0x1f] sm:$0xff]
    %v1542 = vld [vmem:[#allocation2 + $0x27] sm:$0xff]
    %v1543 = vld [vmem:[#allocation2 + $0x2f] sm:$0xff]
    %v1544 = vld [vmem:[#allocation2 + $0x37] sm:$0xff]
    %v1545 = vld [vmem:[#allocation2 + $0x3f] sm:$0xff]
    %v1546 = vmax.f32 %v1530, %v1538
    %v1547 = vmax.f32 %v1531, %v1539
    %v1548 = vmax.f32 %v1532, %v1540
    %v1549 = vmax.f32 %v1533, %v1541
    %v1550 = vmax.f32 %v1534, %v1542
    %v1551 = vmax.f32 %v1535, %v1543
    %v1552 = vmax.f32 %v1536, %v1544
    %v1553 = vmax.f32 %v1537, %v1545
    %s1554 = scalar_lea.vmem [#allocation8], 768
    %v1555 = vld [vmem:[%s1554] sm:$0xff]
    %v1556 = vld [vmem:[%s1554 + $0x8] sm:$0xff]
    %v1557 = vld [vmem:[%s1554 + $0x10] sm:$0xff]
    %v1558 = vld [vmem:[%s1554 + $0x18] sm:$0xff]
    %v1559 = vld [vmem:[%s1554 + $0x20] sm:$0xff]
    %v1560 = vld [vmem:[%s1554 + $0x28] sm:$0xff]
    %v1561 = vld [vmem:[%s1554 + $0x30] sm:$0xff]
    %v1562 = vld [vmem:[%s1554 + $0x38] sm:$0xff]
    %v1563 = vld [vmem:[%s1554 + $0x40] sm:$0xff]
    %v1564 = vld [vmem:[%s1554 + $0x48] sm:$0xff]
    %v1565 = vld [vmem:[%s1554 + $0x50] sm:$0xff]
    %v1566 = vld [vmem:[%s1554 + $0x58] sm:$0xff]
    %v1567 = vld [vmem:[%s1554 + $0x60] sm:$0xff]
    %v1568 = vld [vmem:[%s1554 + $0x68] sm:$0xff]
    %v1569 = vld [vmem:[%s1554 + $0x70] sm:$0xff]
    %v1570 = vld [vmem:[%s1554 + $0x78] sm:$0xff]
    %v1571 = vld [vmem:[%s1554 + $0x80] sm:$0xff]
    %v1572 = vld [vmem:[%s1554 + $0x88] sm:$0xff]
    %v1573 = vld [vmem:[%s1554 + $0x90] sm:$0xff]
    %v1574 = vld [vmem:[%s1554 + $0x98] sm:$0xff]
    %v1575 = vld [vmem:[%s1554 + $0xa0] sm:$0xff]
    %v1576 = vld [vmem:[%s1554 + $0xa8] sm:$0xff]
    %v1577 = vld [vmem:[%s1554 + $0xb0] sm:$0xff]
    %v1578 = vld [vmem:[%s1554 + $0xb8] sm:$0xff]
    %v1579 = vld [vmem:[%s1554 + $0xc0] sm:$0xff]
    %v1580 = vld [vmem:[%s1554 + $0xc8] sm:$0xff]
    %v1581 = vld [vmem:[%s1554 + $0xd0] sm:$0xff]
    %v1582 = vld [vmem:[%s1554 + $0xd8] sm:$0xff]
    %v1583 = vld [vmem:[%s1554 + $0xe0] sm:$0xff]
    %v1584 = vld [vmem:[%s1554 + $0xe8] sm:$0xff]
    %v1585 = vld [vmem:[%s1554 + $0xf0] sm:$0xff]
    %v1586 = vld [vmem:[%s1554 + $0xf8] sm:$0xff]
    %1587 = vmatprep.subr.mxu0 %v1556
    %1588 = vmatpush1.msra.mxu0 %v1555
    %1589 = vmatprep.subr.mxu0 %v1558
    %1590 = vmatpush1.msra.mxu0 %v1557
    %1591 = vmatprep.subr.mxu0 %v1560
    %1592 = vmatpush1.msra.mxu0 %v1559
    %1593 = vmatprep.subr.mxu0 %v1562
    %1594 = vmatpush1.msra.mxu0 %v1561
    %1595 = vmatprep.subr.mxu0 %v1564
    %1596 = vmatpush1.msra.mxu0 %v1563
    %1597 = vmatprep.subr.mxu0 %v1566
    %1598 = vmatpush1.msra.mxu0 %v1565
    %1599 = vmatprep.subr.mxu0 %v1568
    %1600 = vmatpush1.msra.mxu0 %v1567
    %1601 = vmatprep.subr.mxu0 %v1570
    %1602 = vmatpush1.msra.mxu0 %v1569
    %1603 = vmatprep.subr.mxu0 %v1572
    %1604 = vmatpush1.msra.mxu0 %v1571
    %1605 = vmatprep.subr.mxu0 %v1574
    %1606 = vmatpush1.msra.mxu0 %v1573
    %1607 = vmatprep.subr.mxu0 %v1576
    %1608 = vmatpush1.msra.mxu0 %v1575
    %1609 = vmatprep.subr.mxu0 %v1578
    %1610 = vmatpush1.msra.mxu0 %v1577
    %1611 = vmatprep.subr.mxu0 %v1580
    %1612 = vmatpush1.msra.mxu0 %v1579
    %1613 = vmatprep.subr.mxu0 %v1582
    %1614 = vmatpush1.msra.mxu0 %v1581
    %1615 = vmatprep.subr.mxu0 %v1584
    %1616 = vmatpush1.msra.mxu0 %v1583
    %1617 = vmatprep.subr.mxu0 %v1586
    %1618 = vmatpush1.msra.mxu0 %v1585
    %1619 = vmatprep.subr.mxu0 0.0
    %1620 = vmatpush1.msra.mxu0 0.0
    %1621 = vmatprep.subr.mxu0 0.0
    %1622 = vmatpush1.msra.mxu0 0.0
    %1623 = vmatprep.subr.mxu0 0.0
    %1624 = vmatpush1.msra.mxu0 0.0
    %1625 = vmatprep.subr.mxu0 0.0
    %1626 = vmatpush1.msra.mxu0 0.0
    %1627 = vmatprep.subr.mxu0 0.0
    %1628 = vmatpush1.msra.mxu0 0.0
    %1629 = vmatprep.subr.mxu0 0.0
    %1630 = vmatpush1.msra.mxu0 0.0
    %1631 = vmatprep.subr.mxu0 0.0
    %1632 = vmatpush1.msra.mxu0 0.0
    %1633 = vmatprep.subr.mxu0 0.0
    %1634 = vmatpush1.msra.mxu0 0.0
    %1635 = vmatprep.subr.mxu0 0.0
    %1636 = vmatpush1.msra.mxu0 0.0
    %1637 = vmatprep.subr.mxu0 0.0
    %1638 = vmatpush1.msra.mxu0 0.0
    %1639 = vmatprep.subr.mxu0 0.0
    %1640 = vmatpush1.msra.mxu0 0.0
    %1641 = vmatprep.subr.mxu0 0.0
    %1642 = vmatpush1.msra.mxu0 0.0
    %1643 = vmatprep.subr.mxu0 0.0
    %1644 = vmatpush1.msra.mxu0 0.0
    %1645 = vmatprep.subr.mxu0 0.0
    %1646 = vmatpush1.msra.mxu0 0.0
    %1647 = vmatprep.subr.mxu0 0.0
    %1648 = vmatpush1.msra.mxu0 0.0
    %1649 = vmatprep.subr.mxu0 0.0
    %1650 = vmatpush1.msra.mxu0 0.0
    %1651 = vmatprep.mubr.f32.mxu0 0.0
    %1652 = vmatmul.mubr.f32.gmra.mrb[0].mxu0 %v1546
    %v1653 = vpop.f32.mrb[0].mxu0
    %v1654 = vadd.f32 0.0, %v1653
    %v1655 = vpop.f32.mrb[0].mxu0
    %v1656 = vadd.f32 0.0, %v1655
    %1657 = vmatprep.mubr.f32.mxu0 0.0
    %1658 = vmatmul.mubr.f32.gmra.mrb[0].mxu0 %v1547
    %v1659 = vpop.f32.mrb[0].mxu0
    %v1660 = vadd.f32 0.0, %v1659
    %v1661 = vpop.f32.mrb[0].mxu0
    %v1662 = vadd.f32 0.0, %v1661
    %1663 = vmatprep.mubr.f32.mxu0 0.0
    %1664 = vmatmul.mubr.f32.gmra.mrb[0].mxu0 %v1548
    %v1665 = vpop.f32.mrb[0].mxu0
    %v1666 = vadd.f32 0.0, %v1665
    %v1667 = vpop.f32.mrb[0].mxu0
    %v1668 = vadd.f32 0.0, %v1667
    %1669 = vmatprep.mubr.f32.mxu0 0.0
    %1670 = vmatmul.mubr.f32.gmra.mrb[0].mxu0 %v1549
    %v1671 = vpop.f32.mrb[0].mxu0
    %v1672 = vadd.f32 0.0, %v1671
    %v1673 = vpop.f32.mrb[0].mxu0
    %v1674 = vadd.f32 0.0, %v1673
    %1675 = vmatprep.mubr.f32.mxu0 0.0
    %1676 = vmatmul.mubr.f32.gmra.mrb[0].mxu0 %v1550
    %v1677 = vpop.f32.mrb[0].mxu0
    %v1678 = vadd.f32 0.0, %v1677
    %v1679 = vpop.f32.mrb[0].mxu0
    %v1680 = vadd.f32 0.0, %v1679
    %1681 = vmatprep.mubr.f32.mxu0 0.0
    %1682 = vmatmul.mubr.f32.gmra.mrb[0].mxu0 %v1551
    %v1683 = vpop.f32.mrb[0].mxu0
    %v1684 = vadd.f32 0.0, %v1683
    %v1685 = vpop.f32.mrb[0].mxu0
    %v1686 = vadd.f32 0.0, %v1685
    %1687 = vmatprep.mubr.f32.mxu0 0.0
    %1688 = vmatmul.mubr.f32.gmra.mrb[0].mxu0 %v1552
    %v1689 = vpop.f32.mrb[0].mxu0
    %v1690 = vadd.f32 0.0, %v1689
    %v1691 = vpop.f32.mrb[0].mxu0
    %v1692 = vadd.f32 0.0, %v1691
    %1693 = vmatprep.mubr.f32.mxu0 0.0
    %1694 = vmatmul.mubr.f32.gmra.mrb[0].mxu0 %v1553
    %v1695 = vpop.f32.mrb[0].mxu0
    %v1696 = vadd.f32 0.0, %v1695
    %v1697 = vpop.f32.mrb[0].mxu0
    %v1698 = vadd.f32 0.0, %v1697
    %1699 = vdwg.mxu0
    %v1700 = vadd.f32 %v1514, %v1654
    %v1701 = vadd.f32 %v1515, %v1656
    %v1702 = vadd.f32 %v1516, %v1660
    %v1703 = vadd.f32 %v1517, %v1662
    %v1704 = vadd.f32 %v1518, %v1666
    %v1705 = vadd.f32 %v1519, %v1668
    %v1706 = vadd.f32 %v1520, %v1672
    %v1707 = vadd.f32 %v1521, %v1674
    %v1708 = vadd.f32 %v1522, %v1678
    %v1709 = vadd.f32 %v1523, %v1680
    %v1710 = vadd.f32 %v1524, %v1684
    %v1711 = vadd.f32 %v1525, %v1686
    %v1712 = vadd.f32 %v1526, %v1690
    %v1713 = vadd.f32 %v1527, %v1692
    %v1714 = vadd.f32 %v1528, %v1696
    %v1715 = vadd.f32 %v1529, %v1698
    %v1716 = vld [vmem:[#allocation2 + $0x8] sm:$0xff]
    %v1717 = vld [vmem:[#allocation2 + $0x10] sm:$0xff]
    %v1718 = vld [vmem:[#allocation2 + $0x18] sm:$0xff]
    %v1719 = vld [vmem:[#allocation2 + $0x20] sm:$0xff]
    %v1720 = vld [vmem:[#allocation2 + $0x28] sm:$0xff]
    %v1721 = vld [vmem:[#allocation2 + $0x30] sm:$0xff]
    %v1722 = vld [vmem:[#allocation2 + $0x38] sm:$0xff]
    %v1723 = vld [vmem:[#allocation2 + $0x40] sm:$0xff]
    %v1724 = vld [vmem:[#allocation2 + $0x9] sm:$0xff]
    %v1725 = vld [vmem:[#allocation2 + $0x11] sm:$0xff]
    %v1726 = vld [vmem:[#allocation2 + $0x19] sm:$0xff]
    %v1727 = vld [vmem:[#allocation2 + $0x21] sm:$0xff]
    %v1728 = vld [vmem:[#allocation2 + $0x29] sm:$0xff]
    %v1729 = vld [vmem:[#allocation2 + $0x31] sm:$0xff]
    %v1730 = vld [vmem:[#allocation2 + $0x39] sm:$0xff]
    %v1731 = vld [vmem:[#allocation2 + $0x41] sm:$0xff]
    %v1732 = vmax.f32 %v1716, %v1724
    %v1733 = vmax.f32 %v1717, %v1725
    %v1734 = vmax.f32 %v1718, %v1726
    %v1735 = vmax.f32 %v1719, %v1727
    %v1736 = vmax.f32 %v1720, %v1728
    %v1737 = vmax.f32 %v1721, %v1729
    %v1738 = vmax.f32 %v1722, %v1730
    %v1739 = vmax.f32 %v1723, %v1731
    %s1740 = scalar_lea.vmem [#allocation8], 1024
    %v1741 = vld [vmem:[%s1740] sm:$0xff]
    %v1742 = vld [vmem:[%s1740 + $0x8] sm:$0xff]
    %v1743 = vld [vmem:[%s1740 + $0x10] sm:$0xff]
    %v1744 = vld [vmem:[%s1740 + $0x18] sm:$0xff]
    %v1745 = vld [vmem:[%s1740 + $0x20] sm:$0xff]
    %v1746 = vld [vmem:[%s1740 + $0x28] sm:$0xff]
    %v1747 = vld [vmem:[%s1740 + $0x30] sm:$0xff]
    %v1748 = vld [vmem:[%s1740 + $0x38] sm:$0xff]
    %v1749 = vld [vmem:[%s1740 + $0x40] sm:$0xff]
    %v1750 = vld [vmem:[%s1740 + $0x48] sm:$0xff]
    %v1751 = vld [vmem:[%s1740 + $0x50] sm:$0xff]
    %v1752 = vld [vmem:[%s1740 + $0x58] sm:$0xff]
    %v1753 = vld [vmem:[%s1740 + $0x60] sm:$0xff]
    %v1754 = vld [vmem:[%s1740 + $0x68] sm:$0xff]
    %v1755 = vld [vmem:[%s1740 + $0x70] sm:$0xff]
    %v1756 = vld [vmem:[%s1740 + $0x78] sm:$0xff]
    %v1757 = vld [vmem:[%s1740 + $0x80] sm:$0xff]
    %v1758 = vld [vmem:[%s1740 + $0x88] sm:$0xff]
    %v1759 = vld [vmem:[%s1740 + $0x90] sm:$0xff]
    %v1760 = vld [vmem:[%s1740 + $0x98] sm:$0xff]
    %v1761 = vld [vmem:[%s1740 + $0xa0] sm:$0xff]
    %v1762 = vld [vmem:[%s1740 + $0xa8] sm:$0xff]
    %v1763 = vld [vmem:[%s1740 + $0xb0] sm:$0xff]
    %v1764 = vld [vmem:[%s1740 + $0xb8] sm:$0xff]
    %v1765 = vld [vmem:[%s1740 + $0xc0] sm:$0xff]
    %v1766 = vld [vmem:[%s1740 + $0xc8] sm:$0xff]
    %v1767 = vld [vmem:[%s1740 + $0xd0] sm:$0xff]
    %v1768 = vld [vmem:[%s1740 + $0xd8] sm:$0xff]
    %v1769 = vld [vmem:[%s1740 + $0xe0] sm:$0xff]
    %v1770 = vld [vmem:[%s1740 + $0xe8] sm:$0xff]
    %v1771 = vld [vmem:[%s1740 + $0xf0] sm:$0xff]
    %v1772 = vld [vmem:[%s1740 + $0xf8] sm:$0xff]
    %1773 = vmatprep.subr.mxu0 %v1742
    %1774 = vmatpush1.msra.mxu0 %v1741
    %1775 = vmatprep.subr.mxu0 %v1744
    %1776 = vmatpush1.msra.mxu0 %v1743
    %1777 = vmatprep.subr.mxu0 %v1746
    %1778 = vmatpush1.msra.mxu0 %v1745
    %1779 = vmatprep.subr.mxu0 %v1748
    %1780 = vmatpush1.msra.mxu0 %v1747
    %1781 = vmatprep.subr.mxu0 %v1750
    %1782 = vmatpush1.msra.mxu0 %v1749
    %1783 = vmatprep.subr.mxu0 %v1752
    %1784 = vmatpush1.msra.mxu0 %v1751
    %1785 = vmatprep.subr.mxu0 %v1754
    %1786 = vmatpush1.msra.mxu0 %v1753
    %1787 = vmatprep.subr.mxu0 %v1756
    %1788 = vmatpush1.msra.mxu0 %v1755
    %1789 = vmatprep.subr.mxu0 %v1758
    %1790 = vmatpush1.msra.mxu0 %v1757
    %1791 = vmatprep.subr.mxu0 %v1760
    %1792 = vmatpush1.msra.mxu0 %v1759
    %1793 = vmatprep.subr.mxu0 %v1762
    %1794 = vmatpush1.msra.mxu0 %v1761
    %1795 = vmatprep.subr.mxu0 %v1764
    %1796 = vmatpush1.msra.mxu0 %v1763
    %1797 = vmatprep.subr.mxu0 %v1766
    %1798 = vmatpush1.msra.mxu0 %v1765
    %1799 = vmatprep.subr.mxu0 %v1768
    %1800 = vmatpush1.msra.mxu0 %v1767
    %1801 = vmatprep.subr.mxu0 %v1770
    %1802 = vmatpush1.msra.mxu0 %v1769
    %1803 = vmatprep.subr.mxu0 %v1772
    %1804 = vmatpush1.msra.mxu0 %v1771
    %1805 = vmatprep.subr.mxu0 0.0
    %1806 = vmatpush1.msra.mxu0 0.0
    %1807 = vmatprep.subr.mxu0 0.0
    %1808 = vmatpush1.msra.mxu0 0.0
    %1809 = vmatprep.subr.mxu0 0.0
    %1810 = vmatpush1.msra.mxu0 0.0
    %1811 = vmatprep.subr.mxu0 0.0
    %1812 = vmatpush1.msra.mxu0 0.0
    %1813 = vmatprep.subr.mxu0 0.0
    %1814 = vmatpush1.msra.mxu0 0.0
    %1815 = vmatprep.subr.mxu0 0.0
    %1816 = vmatpush1.msra.mxu0 0.0
    %1817 = vmatprep.subr.mxu0 0.0
    %1818 = vmatpush1.msra.mxu0 0.0
    %1819 = vmatprep.subr.mxu0 0.0
    %1820 = vmatpush1.msra.mxu0 0.0
    %1821 = vmatprep.subr.mxu0 0.0
    %1822 = vmatpush1.msra.mxu0 0.0
    %1823 = vmatprep.subr.mxu0 0.0
    %1824 = vmatpush1.msra.mxu0 0.0
    %1825 = vmatprep.subr.mxu0 0.0
    %1826 = vmatpush1.msra.mxu0 0.0
    %1827 = vmatprep.subr.mxu0 0.0
    %1828 = vmatpush1.msra.mxu0 0.0
    %1829 = vmatprep.subr.mxu0 0.0
    %1830 = vmatpush1.msra.mxu0 0.0
    %1831 = vmatprep.subr.mxu0 0.0
    %1832 = vmatpush1.msra.mxu0 0.0
    %1833 = vmatprep.subr.mxu0 0.0
    %1834 = vmatpush1.msra.mxu0 0.0
    %1835 = vmatprep.subr.mxu0 0.0
    %1836 = vmatpush1.msra.mxu0 0.0
    %1837 = vmatprep.mubr.f32.mxu0 0.0
    %1838 = vmatmul.mubr.f32.gmra.mrb[0].mxu0 %v1732
    %v1839 = vpop.f32.mrb[0].mxu0
    %v1840 = vadd.f32 0.0, %v1839
    %v1841 = vpop.f32.mrb[0].mxu0
    %v1842 = vadd.f32 0.0, %v1841
    %1843 = vmatprep.mubr.f32.mxu0 0.0
    %1844 = vmatmul.mubr.f32.gmra.mrb[0].mxu0 %v1733
    %v1845 = vpop.f32.mrb[0].mxu0
    %v1846 = vadd.f32 0.0, %v1845
    %v1847 = vpop.f32.mrb[0].mxu0
    %v1848 = vadd.f32 0.0, %v1847
    %1849 = vmatprep.mubr.f32.mxu0 0.0
    %1850 = vmatmul.mubr.f32.gmra.mrb[0].mxu0 %v1734
    %v1851 = vpop.f32.mrb[0].mxu0
    %v1852 = vadd.f32 0.0, %v1851
    %v1853 = vpop.f32.mrb[0].mxu0
    %v1854 = vadd.f32 0.0, %v1853
    %1855 = vmatprep.mubr.f32.mxu0 0.0
    %1856 = vmatmul.mubr.f32.gmra.mrb[0].mxu0 %v1735
    %v1857 = vpop.f32.mrb[0].mxu0
    %v1858 = vadd.f32 0.0, %v1857
    %v1859 = vpop.f32.mrb[0].mxu0
    %v1860 = vadd.f32 0.0, %v1859
    %1861 = vmatprep.mubr.f32.mxu0 0.0
    %1862 = vmatmul.mubr.f32.gmra.mrb[0].mxu0 %v1736
    %v1863 = vpop.f32.mrb[0].mxu0
    %v1864 = vadd.f32 0.0, %v1863
    %v1865 = vpop.f32.mrb[0].mxu0
    %v1866 = vadd.f32 0.0, %v1865
    %1867 = vmatprep.mubr.f32.mxu0 0.0
    %1868 = vmatmul.mubr.f32.gmra.mrb[0].mxu0 %v1737
    %v1869 = vpop.f32.mrb[0].mxu0
    %v1870 = vadd.f32 0.0, %v1869
    %v1871 = vpop.f32.mrb[0].mxu0
    %v1872 = vadd.f32 0.0, %v1871
    %1873 = vmatprep.mubr.f32.mxu0 0.0
    %1874 = vmatmul.mubr.f32.gmra.mrb[0].mxu0 %v1738
    %v1875 = vpop.f32.mrb[0].mxu0
    %v1876 = vadd.f32 0.0, %v1875
    %v1877 = vpop.f32.mrb[0].mxu0
    %v1878 = vadd.f32 0.0, %v1877
    %1879 = vmatprep.mubr.f32.mxu0 0.0
    %1880 = vmatmul.mubr.f32.gmra.mrb[0].mxu0 %v1739
    %v1881 = vpop.f32.mrb[0].mxu0
    %v1882 = vadd.f32 0.0, %v1881
    %v1883 = vpop.f32.mrb[0].mxu0
    %v1884 = vadd.f32 0.0, %v1883
    %1885 = vdwg.mxu0
    %v1886 = vadd.f32 %v1700, %v1840
    %v1887 = vadd.f32 %v1701, %v1842
    %v1888 = vadd.f32 %v1702, %v1846
    %v1889 = vadd.f32 %v1703, %v1848
    %v1890 = vadd.f32 %v1704, %v1852
    %v1891 = vadd.f32 %v1705, %v1854
    %v1892 = vadd.f32 %v1706, %v1858
    %v1893 = vadd.f32 %v1707, %v1860
    %v1894 = vadd.f32 %v1708, %v1864
    %v1895 = vadd.f32 %v1709, %v1866
    %v1896 = vadd.f32 %v1710, %v1870
    %v1897 = vadd.f32 %v1711, %v1872
    %v1898 = vadd.f32 %v1712, %v1876
    %v1899 = vadd.f32 %v1713, %v1878
    %v1900 = vadd.f32 %v1714, %v1882
    %v1901 = vadd.f32 %v1715, %v1884
    %v1902 = vld [vmem:[%s4] sm:$0x3]
    %v1904 = vlaneseq
    %v1905 = vshrl.u32 %v1904, 7
    %v1906 = vsub.s32 0, %v1905
    %v1907 = vrot.slane %v1902, %v1906
    %v1908 = vlaneseq
    %v1909 = vshrl.u32 %v1908, 7
    %v1910 = vsub.s32 1, %v1909
    %v1911 = vrot.slane %v1902, %v1910
    %v1914 = vadd.f32 %v1886, %v1907
    %v1915 = vadd.f32 %v1887, %v1911
    %v1916 = vadd.f32 %v1888, %v1907
    %v1917 = vadd.f32 %v1889, %v1911
    %v1918 = vadd.f32 %v1890, %v1907
    %v1919 = vadd.f32 %v1891, %v1911
    %v1920 = vadd.f32 %v1892, %v1907
    %v1921 = vadd.f32 %v1893, %v1911
    %v1922 = vadd.f32 %v1894, %v1907
    %v1923 = vadd.f32 %v1895, %v1911
    %v1924 = vadd.f32 %v1896, %v1907
    %v1925 = vadd.f32 %v1897, %v1911
    %v1926 = vadd.f32 %v1898, %v1907
    %v1927 = vadd.f32 %v1899, %v1911
    %v1928 = vadd.f32 %v1900, %v1907
    %v1929 = vadd.f32 %v1901, %v1911
    %v1930 = vmax.f32 %v1914, 0.0
    %v1931 = vmax.f32 %v1915, 0.0
    %v1932 = vmax.f32 %v1916, 0.0
    %v1933 = vmax.f32 %v1917, 0.0
    %v1934 = vmax.f32 %v1918, 0.0
    %v1935 = vmax.f32 %v1919, 0.0
    %v1936 = vmax.f32 %v1920, 0.0
    %v1937 = vmax.f32 %v1921, 0.0
    %v1938 = vmax.f32 %v1922, 0.0
    %v1939 = vmax.f32 %v1923, 0.0
    %v1940 = vmax.f32 %v1924, 0.0
    %v1941 = vmax.f32 %v1925, 0.0
    %v1942 = vmax.f32 %v1926, 0.0
    %v1943 = vmax.f32 %v1927, 0.0
    %v1944 = vmax.f32 %v1928, 0.0
    %v1945 = vmax.f32 %v1929, 0.0
    %v1946 = vmax.f32 %v1930, %v1931
    %v1947 = vmax.f32 %v1932, %v1933
    %v1948 = vmax.f32 %v1934, %v1935
    %v1949 = vmax.f32 %v1936, %v1937
    %v1950 = vmax.f32 %v1938, %v1939
    %v1951 = vmax.f32 %v1940, %v1941
    %v1952 = vmax.f32 %v1942, %v1943
    %v1953 = vmax.f32 %v1944, %v1945
    %1954 = vst [vmem:[#allocation3] sm:$0xff] %v1946
    %1955 = vst [vmem:[#allocation3 + $0x8] sm:$0xff] %v1947
    %1956 = vst [vmem:[#allocation3 + $0x10] sm:$0xff] %v1948
    %1957 = vst [vmem:[#allocation3 + $0x18] sm:$0xff] %v1949
    %1958 = vst [vmem:[#allocation3 + $0x20] sm:$0xff] %v1950
    %1959 = vst [vmem:[#allocation3 + $0x28] sm:$0xff] %v1951
    %1960 = vst [vmem:[#allocation3 + $0x30] sm:$0xff] %v1952
    %1961 = vst [vmem:[#allocation3 + $0x38] sm:$0xff] %v1953
    %v1962 = vld [vmem:[#allocation3] sm:$0x1]
    %v1963 = vld [vmem:[#allocation3 + $0x2] sm:$0x1]
    %v1964 = vmax.f32 %v1962, %v1963
    %v1965 = vld [vmem:[#allocation3 + $0x4] sm:$0x1]
    %v1966 = vld [vmem:[#allocation3 + $0x6] sm:$0x1]
    %v1967 = vmax.f32 %v1965, %v1966
    %v1968 = vld [vmem:[#allocation3 + $0x8] sm:$0x1]
    %v1969 = vld [vmem:[#allocation3 + $0xa] sm:$0x1]
    %v1970 = vmax.f32 %v1968, %v1969
    %v1971 = vld [vmem:[#allocation3 + $0xc] sm:$0x1]
    %v1972 = vld [vmem:[#allocation3 + $0xe] sm:$0x1]
    %v1973 = vmax.f32 %v1971, %v1972
    %v1974 = vld [vmem:[#allocation3 + $0x10] sm:$0x1]
    %v1975 = vld [vmem:[#allocation3 + $0x12] sm:$0x1]
    %v1976 = vmax.f32 %v1974, %v1975
    %v1982 = vcombine.low %v1964, %v1967
    %v1983 = vcombine.low %v1970, %v1973
    %v1985 = vunpack.c.l.s4 1966171168
    %v1986 = vunpack.c.0.s8 %v1985
    %v1987 = vlaneseq
    %v1988 = vshrl.u32 %v1987, 7
    %v1989 = vsub.s32 %v1986, %v1988
    %v1990 = vrot.slane %v1982, %v1989
    %v1992 = vunpack.c.l.s4 1966171168
    %v1993 = vunpack.c.0.s8 %v1992
    %v1994 = vlaneseq
    %v1995 = vshrl.u32 %v1994, 7
    %v1996 = vsub.s32 %v1993, %v1995
    %v1997 = vrot.slane %v1983, %v1996
    %v1999 = vunpack.c.l.s4 1966171168
    %v2000 = vunpack.c.0.s8 %v1999
    %v2001 = vlaneseq
    %v2002 = vshrl.u32 %v2001, 7
    %v2003 = vsub.s32 %v2000, %v2002
    %v2004 = vrot.slane %v1976, %v2003
    %v2005 = vcombine.low %v1990, %v1997
    %v2007 = vunpack.c.l.s4 1966171168
    %v2008 = vunpack.c.0.s8 %v2007
    %v2009 = vlaneseq
    %v2010 = vshrl.u32 %v2009, 7
    %v2011 = vsub.s32 %v2008, %v2010
    %v2012 = vrot.slane %v2005, %v2011
    %v2014 = vunpack.c.l.s4 1966171168
    %v2015 = vunpack.c.0.s8 %v2014
    %v2016 = vlaneseq
    %v2017 = vshrl.u32 %v2016, 7
    %v2018 = vsub.s32 %v2015, %v2017
    %v2019 = vrot.slane %v2004, %v2018
    %v2020 = vcombine.low %v2012, %v2019
    %v2022 = vlaneseq
    %vm2023 = vcmp.ge.s32.totalorder %v2022, 0
    %vm2024 = vcmp.lt.s32.totalorder %v2022, 640
    %vm2025 = vmand %vm2023, %vm2024
    %2026 = vst.msk [vmem:[#allocation4] ss:$8 sm:$0xf] %vm2025, %v2020
    %2027 = vst.msk [vmem:[#allocation4] ss:$8 sm:$0x10] %vm2025, %v2020
    %v2028 = vld [vmem:[#allocation3 + $0x20] sm:$0x1]
    %v2029 = vld [vmem:[#allocation3 + $0x22] sm:$0x1]
    %v2030 = vmax.f32 %v2028, %v2029
    %v2031 = vld [vmem:[#allocation3 + $0x24] sm:$0x1]
    %v2032 = vld [vmem:[#allocation3 + $0x26] sm:$0x1]
    %v2033 = vmax.f32 %v2031, %v2032
    %v2034 = vld [vmem:[#allocation3 + $0x28] sm:$0x1]
    %v2035 = vld [vmem:[#allocation3 + $0x2a] sm:$0x1]
    %v2036 = vmax.f32 %v2034, %v2035
    %v2037 = vld [vmem:[#allocation3 + $0x2c] sm:$0x1]
    %v2038 = vld [vmem:[#allocation3 + $0x2e] sm:$0x1]
    %v2039 = vmax.f32 %v2037, %v2038
    %v2040 = vld [vmem:[#allocation3 + $0x30] sm:$0x1]
    %v2041 = vld [vmem:[#allocation3 + $0x32] sm:$0x1]
    %v2042 = vmax.f32 %v2040, %v2041
    %v2048 = vcombine.low %v2030, %v2033
    %v2049 = vcombine.low %v2036, %v2039
    %v2051 = vunpack.c.l.s4 1966171168
    %v2052 = vunpack.c.0.s8 %v2051
    %v2053 = vlaneseq
    %v2054 = vshrl.u32 %v2053, 7
    %v2055 = vsub.s32 %v2052, %v2054
    %v2056 = vrot.slane %v2048, %v2055
    %v2058 = vunpack.c.l.s4 1966171168
    %v2059 = vunpack.c.0.s8 %v2058
    %v2060 = vlaneseq
    %v2061 = vshrl.u32 %v2060, 7
    %v2062 = vsub.s32 %v2059, %v2061
    %v2063 = vrot.slane %v2049, %v2062
    %v2065 = vunpack.c.l.s4 1966171168
    %v2066 = vunpack.c.0.s8 %v2065
    %v2067 = vlaneseq
    %v2068 = vshrl.u32 %v2067, 7
    %v2069 = vsub.s32 %v2066, %v2068
    %v2070 = vrot.slane %v2042, %v2069
    %v2071 = vcombine.low %v2056, %v2063
    %v2073 = vunpack.c.l.s4 1966171168
    %v2074 = vunpack.c.0.s8 %v2073
    %v2075 = vlaneseq
    %v2076 = vshrl.u32 %v2075, 7
    %v2077 = vsub.s32 %v2074, %v2076
    %v2078 = vrot.slane %v2071, %v2077
    %v2080 = vunpack.c.l.s4 1966171168
    %v2081 = vunpack.c.0.s8 %v2080
    %v2082 = vlaneseq
    %v2083 = vshrl.u32 %v2082, 7
    %v2084 = vsub.s32 %v2081, %v2083
    %v2085 = vrot.slane %v2070, %v2084
    %v2086 = vcombine.low %v2078, %v2085
    %s2088 = scalar_lea.vmem [#allocation4], 1
    %2089 = vst.msk [vmem:[%s2088] ss:$8 sm:$0xf] %vm2025, %v2086
    %2090 = vst.msk [vmem:[%s2088] ss:$8 sm:$0x10] %vm2025, %v2086
    %v2091 = vld [vmem:[#allocation4] sm:$0x3]
    %v2092 = vld [vmem:[#allocation4 + $0x8] sm:$0x3]
    %v2093 = vld [vmem:[#allocation4 + $0x10] sm:$0x3]
    %v2094 = vld [vmem:[#allocation4 + $0x18] sm:$0x3]
    %v2095 = vld [vmem:[#allocation4 + $0x20] sm:$0x3]
    %v2096 = vld [vmem:[#allocation10] sm:$0xff]
    %v2097 = vld [vmem:[#allocation10 + $0x8] sm:$0xff]
    %v2098 = vld [vmem:[#allocation10 + $0x10] sm:$0xff]
    %v2099 = vld [vmem:[#allocation10 + $0x18] sm:$0xff]
    %v2100 = vld [vmem:[#allocation10 + $0x20] sm:$0xff]
    %v2101 = vld [vmem:[#allocation10 + $0x28] sm:$0xff]
    %v2102 = vld [vmem:[#allocation10 + $0x30] sm:$0xff]
    %v2103 = vld [vmem:[#allocation10 + $0x38] sm:$0xff]
    %v2104 = vld [vmem:[#allocation10 + $0x40] sm:$0xff]
    %v2105 = vld [vmem:[#allocation10 + $0x48] sm:$0xff]
    %v2106 = vld [vmem:[#allocation10 + $0x50] sm:$0xff]
    %v2107 = vld [vmem:[#allocation10 + $0x58] sm:$0xff]
    %v2108 = vld [vmem:[#allocation10 + $0x60] sm:$0xff]
    %v2109 = vld [vmem:[#allocation10 + $0x68] sm:$0xff]
    %v2110 = vld [vmem:[#allocation10 + $0x70] sm:$0xff]
    %v2111 = vld [vmem:[#allocation10 + $0x78] sm:$0xff]
    %v2112 = vld [vmem:[#allocation10 + $0x80] sm:$0xff]
    %v2113 = vld [vmem:[#allocation10 + $0x88] sm:$0xff]
    %v2114 = vld [vmem:[#allocation10 + $0x90] sm:$0xff]
    %v2115 = vld [vmem:[#allocation10 + $0x98] sm:$0xff]
    %v2116 = vld [vmem:[#allocation10 + $0xa0] sm:$0xff]
    %v2117 = vld [vmem:[#allocation10 + $0xa8] sm:$0xff]
    %v2118 = vld [vmem:[#allocation10 + $0xb0] sm:$0xff]
    %v2119 = vld [vmem:[#allocation10 + $0xb8] sm:$0xff]
    %v2120 = vld [vmem:[#allocation10 + $0xc0] sm:$0xff]
    %v2121 = vld [vmem:[#allocation10 + $0xc8] sm:$0xff]
    %v2122 = vld [vmem:[#allocation10 + $0xd0] sm:$0xff]
    %v2123 = vld [vmem:[#allocation10 + $0xd8] sm:$0xff]
    %v2124 = vld [vmem:[#allocation10 + $0xe0] sm:$0xff]
    %v2125 = vld [vmem:[#allocation10 + $0xe8] sm:$0xff]
    %v2126 = vld [vmem:[#allocation10 + $0xf0] sm:$0xff]
    %v2127 = vld [vmem:[#allocation10 + $0xf8] sm:$0xff]
    %v2128 = vld [vmem:[#allocation10 + $0x100] sm:$0xff]
    %v2129 = vld [vmem:[#allocation10 + $0x108] sm:$0xff]
    %v2130 = vld [vmem:[#allocation10 + $0x110] sm:$0xff]
    %v2131 = vld [vmem:[#allocation10 + $0x118] sm:$0xff]
    %v2132 = vld [vmem:[#allocation10 + $0x120] sm:$0xff]
    %v2133 = vld [vmem:[#allocation10 + $0x128] sm:$0xff]
    %v2134 = vld [vmem:[#allocation10 + $0x130] sm:$0xff]
    %v2135 = vld [vmem:[#allocation10 + $0x138] sm:$0xff]
    %v2136 = vld [vmem:[#allocation10 + $0x140] sm:$0xff]
    %v2137 = vld [vmem:[#allocation10 + $0x148] sm:$0xff]
    %v2138 = vld [vmem:[#allocation10 + $0x150] sm:$0xff]
    %v2139 = vld [vmem:[#allocation10 + $0x158] sm:$0xff]
    %v2140 = vld [vmem:[#allocation10 + $0x160] sm:$0xff]
    %v2141 = vld [vmem:[#allocation10 + $0x168] sm:$0xff]
    %v2142 = vld [vmem:[#allocation10 + $0x170] sm:$0xff]
    %v2143 = vld [vmem:[#allocation10 + $0x178] sm:$0xff]
    %v2144 = vld [vmem:[#allocation10 + $0x180] sm:$0xff]
    %v2145 = vld [vmem:[#allocation10 + $0x188] sm:$0xff]
    %v2146 = vld [vmem:[#allocation10 + $0x190] sm:$0xff]
    %v2147 = vld [vmem:[#allocation10 + $0x198] sm:$0xff]
    %v2148 = vld [vmem:[#allocation10 + $0x1a0] sm:$0xff]
    %v2149 = vld [vmem:[#allocation10 + $0x1a8] sm:$0xff]
    %v2150 = vld [vmem:[#allocation10 + $0x1b0] sm:$0xff]
    %v2151 = vld [vmem:[#allocation10 + $0x1b8] sm:$0xff]
    %v2152 = vld [vmem:[#allocation10 + $0x1c0] sm:$0xff]
    %v2153 = vld [vmem:[#allocation10 + $0x1c8] sm:$0xff]
    %v2154 = vld [vmem:[#allocation10 + $0x1d0] sm:$0xff]
    %v2155 = vld [vmem:[#allocation10 + $0x1d8] sm:$0xff]
    %v2156 = vld [vmem:[#allocation10 + $0x1e0] sm:$0xff]
    %v2157 = vld [vmem:[#allocation10 + $0x1e8] sm:$0xff]
    %v2158 = vld [vmem:[#allocation10 + $0x1f0] sm:$0xff]
    %v2159 = vld [vmem:[#allocation10 + $0x1f8] sm:$0xff]
    %v2160 = vld [vmem:[#allocation10 + $0x200] sm:$0xff]
    %v2161 = vld [vmem:[#allocation10 + $0x208] sm:$0xff]
    %v2162 = vld [vmem:[#allocation10 + $0x210] sm:$0xff]
    %v2163 = vld [vmem:[#allocation10 + $0x218] sm:$0xff]
    %v2164 = vld [vmem:[#allocation10 + $0x220] sm:$0xff]
    %v2165 = vld [vmem:[#allocation10 + $0x228] sm:$0xff]
    %v2166 = vld [vmem:[#allocation10 + $0x230] sm:$0xff]
    %v2167 = vld [vmem:[#allocation10 + $0x238] sm:$0xff]
    %v2168 = vld [vmem:[#allocation10 + $0x240] sm:$0xff]
    %v2169 = vld [vmem:[#allocation10 + $0x248] sm:$0xff]
    %v2170 = vld [vmem:[#allocation10 + $0x250] sm:$0xff]
    %v2171 = vld [vmem:[#allocation10 + $0x258] sm:$0xff]
    %v2172 = vld [vmem:[#allocation10 + $0x260] sm:$0xff]
    %v2173 = vld [vmem:[#allocation10 + $0x268] sm:$0xff]
    %v2174 = vld [vmem:[#allocation10 + $0x270] sm:$0xff]
    %v2175 = vld [vmem:[#allocation10 + $0x278] sm:$0xff]
    %v2176 = vld [vmem:[#allocation10 + $0x280] sm:$0xff]
    %v2177 = vld [vmem:[#allocation10 + $0x288] sm:$0xff]
    %v2178 = vld [vmem:[#allocation10 + $0x290] sm:$0xff]
    %v2179 = vld [vmem:[#allocation10 + $0x298] sm:$0xff]
    %v2180 = vld [vmem:[#allocation10 + $0x2a0] sm:$0xff]
    %v2181 = vld [vmem:[#allocation10 + $0x2a8] sm:$0xff]
    %v2182 = vld [vmem:[#allocation10 + $0x2b0] sm:$0xff]
    %v2183 = vld [vmem:[#allocation10 + $0x2b8] sm:$0xff]
    %v2184 = vld [vmem:[#allocation10 + $0x2c0] sm:$0xff]
    %v2185 = vld [vmem:[#allocation10 + $0x2c8] sm:$0xff]
    %v2186 = vld [vmem:[#allocation10 + $0x2d0] sm:$0xff]
    %v2187 = vld [vmem:[#allocation10 + $0x2d8] sm:$0xff]
    %v2188 = vld [vmem:[#allocation10 + $0x2e0] sm:$0xff]
    %v2189 = vld [vmem:[#allocation10 + $0x2e8] sm:$0xff]
    %v2190 = vld [vmem:[#allocation10 + $0x2f0] sm:$0xff]
    %v2191 = vld [vmem:[#allocation10 + $0x2f8] sm:$0xff]
    %v2192 = vld [vmem:[#allocation10 + $0x300] sm:$0xff]
    %v2193 = vld [vmem:[#allocation10 + $0x308] sm:$0xff]
    %v2194 = vld [vmem:[#allocation10 + $0x310] sm:$0xff]
    %v2195 = vld [vmem:[#allocation10 + $0x318] sm:$0xff]
    %v2196 = vld [vmem:[#allocation10 + $0x320] sm:$0xff]
    %v2197 = vld [vmem:[#allocation10 + $0x328] sm:$0xff]
    %v2198 = vld [vmem:[#allocation10 + $0x330] sm:$0xff]
    %v2199 = vld [vmem:[#allocation10 + $0x338] sm:$0xff]
    %v2200 = vld [vmem:[#allocation10 + $0x340] sm:$0xff]
    %v2201 = vld [vmem:[#allocation10 + $0x348] sm:$0xff]
    %v2202 = vld [vmem:[#allocation10 + $0x350] sm:$0xff]
    %v2203 = vld [vmem:[#allocation10 + $0x358] sm:$0xff]
    %v2204 = vld [vmem:[#allocation10 + $0x360] sm:$0xff]
    %v2205 = vld [vmem:[#allocation10 + $0x368] sm:$0xff]
    %v2206 = vld [vmem:[#allocation10 + $0x370] sm:$0xff]
    %v2207 = vld [vmem:[#allocation10 + $0x378] sm:$0xff]
    %v2208 = vld [vmem:[#allocation10 + $0x380] sm:$0xff]
    %v2209 = vld [vmem:[#allocation10 + $0x388] sm:$0xff]
    %v2210 = vld [vmem:[#allocation10 + $0x390] sm:$0xff]
    %v2211 = vld [vmem:[#allocation10 + $0x398] sm:$0xff]
    %v2212 = vld [vmem:[#allocation10 + $0x3a0] sm:$0xff]
    %v2213 = vld [vmem:[#allocation10 + $0x3a8] sm:$0xff]
    %v2214 = vld [vmem:[#allocation10 + $0x3b0] sm:$0xff]
    %v2215 = vld [vmem:[#allocation10 + $0x3b8] sm:$0xff]
    %v2216 = vld [vmem:[#allocation10 + $0x3c0] sm:$0xff]
    %v2217 = vld [vmem:[#allocation10 + $0x3c8] sm:$0xff]
    %v2218 = vld [vmem:[#allocation10 + $0x3d0] sm:$0xff]
    %v2219 = vld [vmem:[#allocation10 + $0x3d8] sm:$0xff]
    %v2220 = vld [vmem:[#allocation10 + $0x3e0] sm:$0xff]
    %v2221 = vld [vmem:[#allocation10 + $0x3e8] sm:$0xff]
    %v2222 = vld [vmem:[#allocation10 + $0x3f0] sm:$0xff]
    %v2223 = vld [vmem:[#allocation10 + $0x3f8] sm:$0xff]
    %v2224 = vld [vmem:[#allocation10 + $0x400] sm:$0xff]
    %v2225 = vld [vmem:[#allocation10 + $0x408] sm:$0xff]
    %v2226 = vld [vmem:[#allocation10 + $0x410] sm:$0xff]
    %v2227 = vld [vmem:[#allocation10 + $0x418] sm:$0xff]
    %v2228 = vld [vmem:[#allocation10 + $0x420] sm:$0xff]
    %v2229 = vld [vmem:[#allocation10 + $0x428] sm:$0xff]
    %v2230 = vld [vmem:[#allocation10 + $0x430] sm:$0xff]
    %v2231 = vld [vmem:[#allocation10 + $0x438] sm:$0xff]
    %v2232 = vld [vmem:[#allocation10 + $0x440] sm:$0xff]
    %v2233 = vld [vmem:[#allocation10 + $0x448] sm:$0xff]
    %v2234 = vld [vmem:[#allocation10 + $0x450] sm:$0xff]
    %v2235 = vld [vmem:[#allocation10 + $0x458] sm:$0xff]
    %v2236 = vld [vmem:[#allocation10 + $0x460] sm:$0xff]
    %v2237 = vld [vmem:[#allocation10 + $0x468] sm:$0xff]
    %v2238 = vld [vmem:[#allocation10 + $0x470] sm:$0xff]
    %v2239 = vld [vmem:[#allocation10 + $0x478] sm:$0xff]
    %v2240 = vld [vmem:[#allocation10 + $0x480] sm:$0xff]
    %v2241 = vld [vmem:[#allocation10 + $0x488] sm:$0xff]
    %v2242 = vld [vmem:[#allocation10 + $0x490] sm:$0xff]
    %v2243 = vld [vmem:[#allocation10 + $0x498] sm:$0xff]
    %v2244 = vld [vmem:[#allocation10 + $0x4a0] sm:$0xff]
    %v2245 = vld [vmem:[#allocation10 + $0x4a8] sm:$0xff]
    %v2246 = vld [vmem:[#allocation10 + $0x4b0] sm:$0xff]
    %v2247 = vld [vmem:[#allocation10 + $0x4b8] sm:$0xff]
    %v2248 = vld [vmem:[#allocation10 + $0x4c0] sm:$0xff]
    %v2249 = vld [vmem:[#allocation10 + $0x4c8] sm:$0xff]
    %v2250 = vld [vmem:[#allocation10 + $0x4d0] sm:$0xff]
    %v2251 = vld [vmem:[#allocation10 + $0x4d8] sm:$0xff]
    %v2252 = vld [vmem:[#allocation10 + $0x4e0] sm:$0xff]
    %v2253 = vld [vmem:[#allocation10 + $0x4e8] sm:$0xff]
    %v2254 = vld [vmem:[#allocation10 + $0x4f0] sm:$0xff]
    %v2255 = vld [vmem:[#allocation10 + $0x4f8] sm:$0xff]
    %v2256 = vld [vmem:[%s6] sm:$0x3]
    %v2258 = vlaneseq
    %v2259 = vshrl.u32 %v2258, 7
    %v2260 = vsub.s32 0, %v2259
    %v2261 = vrot.slane %v2256, %v2260
    %v2262 = vlaneseq
    %v2263 = vshrl.u32 %v2262, 7
    %v2264 = vsub.s32 1, %v2263
    %v2265 = vrot.slane %v2256, %v2264
    %2268 = vmatprep.subr.mxu0 %v2097
    %2269 = vmatpush1.msra.mxu0 %v2096
    %2270 = vmatprep.subr.mxu0 %v2099
    %2271 = vmatpush1.msra.mxu0 %v2098
    %2272 = vmatprep.subr.mxu0 %v2101
    %2273 = vmatpush1.msra.mxu0 %v2100
    %2274 = vmatprep.subr.mxu0 %v2103
    %2275 = vmatpush1.msra.mxu0 %v2102
    %2276 = vmatprep.subr.mxu0 %v2105
    %2277 = vmatpush1.msra.mxu0 %v2104
    %2278 = vmatprep.subr.mxu0 %v2107
    %2279 = vmatpush1.msra.mxu0 %v2106
    %2280 = vmatprep.subr.mxu0 %v2109
    %2281 = vmatpush1.msra.mxu0 %v2108
    %2282 = vmatprep.subr.mxu0 %v2111
    %2283 = vmatpush1.msra.mxu0 %v2110
    %2284 = vmatprep.subr.mxu0 %v2113
    %2285 = vmatpush1.msra.mxu0 %v2112
    %2286 = vmatprep.subr.mxu0 %v2115
    %2287 = vmatpush1.msra.mxu0 %v2114
    %2288 = vmatprep.subr.mxu0 %v2117
    %2289 = vmatpush1.msra.mxu0 %v2116
    %2290 = vmatprep.subr.mxu0 %v2119
    %2291 = vmatpush1.msra.mxu0 %v2118
    %2292 = vmatprep.subr.mxu0 %v2121
    %2293 = vmatpush1.msra.mxu0 %v2120
    %2294 = vmatprep.subr.mxu0 %v2123
    %2295 = vmatpush1.msra.mxu0 %v2122
    %2296 = vmatprep.subr.mxu0 %v2125
    %2297 = vmatpush1.msra.mxu0 %v2124
    %2298 = vmatprep.subr.mxu0 %v2127
    %2299 = vmatpush1.msra.mxu0 %v2126
    %2300 = vmatprep.subr.mxu0 %v2129
    %2301 = vmatpush1.msra.mxu0 %v2128
    %2302 = vmatprep.subr.mxu0 %v2131
    %2303 = vmatpush1.msra.mxu0 %v2130
    %2304 = vmatprep.subr.mxu0 %v2133
    %2305 = vmatpush1.msra.mxu0 %v2132
    %2306 = vmatprep.subr.mxu0 %v2135
    %2307 = vmatpush1.msra.mxu0 %v2134
    %2308 = vmatprep.subr.mxu0 %v2137
    %2309 = vmatpush1.msra.mxu0 %v2136
    %2310 = vmatprep.subr.mxu0 %v2139
    %2311 = vmatpush1.msra.mxu0 %v2138
    %2312 = vmatprep.subr.mxu0 %v2141
    %2313 = vmatpush1.msra.mxu0 %v2140
    %2314 = vmatprep.subr.mxu0 %v2143
    %2315 = vmatpush1.msra.mxu0 %v2142
    %2316 = vmatprep.subr.mxu0 %v2145
    %2317 = vmatpush1.msra.mxu0 %v2144
    %2318 = vmatprep.subr.mxu0 %v2147
    %2319 = vmatpush1.msra.mxu0 %v2146
    %2320 = vmatprep.subr.mxu0 %v2149
    %2321 = vmatpush1.msra.mxu0 %v2148
    %2322 = vmatprep.subr.mxu0 %v2151
    %2323 = vmatpush1.msra.mxu0 %v2150
    %2324 = vmatprep.subr.mxu0 %v2153
    %2325 = vmatpush1.msra.mxu0 %v2152
    %2326 = vmatprep.subr.mxu0 %v2155
    %2327 = vmatpush1.msra.mxu0 %v2154
    %2328 = vmatprep.subr.mxu0 %v2157
    %2329 = vmatpush1.msra.mxu0 %v2156
    %2330 = vmatprep.subr.mxu0 %v2159
    %2331 = vmatpush1.msra.mxu0 %v2158
    %2332 = vmatprep.mubr.f32.mxu0 %v2092
    %2333 = vmatmul.mubr.f32.gmra.mrb[0].mxu0 %v2091
    %v2334 = vpop.f32.mrb[0].mxu0
    %v2335 = vadd.f32 %v2261, %v2334
    %v2336 = vpop.f32.mrb[0].mxu0
    %v2337 = vadd.f32 %v2265, %v2336
    %2338 = vdwg.mxu0
    %2339 = vmatprep.subr.mxu0 %v2161
    %2340 = vmatpush1.msra.mxu0 %v2160
    %2341 = vmatprep.subr.mxu0 %v2163
    %2342 = vmatpush1.msra.mxu0 %v2162
    %2343 = vmatprep.subr.mxu0 %v2165
    %2344 = vmatpush1.msra.mxu0 %v2164
    %2345 = vmatprep.subr.mxu0 %v2167
    %2346 = vmatpush1.msra.mxu0 %v2166
    %2347 = vmatprep.subr.mxu0 %v2169
    %2348 = vmatpush1.msra.mxu0 %v2168
    %2349 = vmatprep.subr.mxu0 %v2171
    %2350 = vmatpush1.msra.mxu0 %v2170
    %2351 = vmatprep.subr.mxu0 %v2173
    %2352 = vmatpush1.msra.mxu0 %v2172
    %2353 = vmatprep.subr.mxu0 %v2175
    %2354 = vmatpush1.msra.mxu0 %v2174
    %2355 = vmatprep.subr.mxu0 %v2177
    %2356 = vmatpush1.msra.mxu0 %v2176
    %2357 = vmatprep.subr.mxu0 %v2179
    %2358 = vmatpush1.msra.mxu0 %v2178
    %2359 = vmatprep.subr.mxu0 %v2181
    %2360 = vmatpush1.msra.mxu0 %v2180
    %2361 = vmatprep.subr.mxu0 %v2183
    %2362 = vmatpush1.msra.mxu0 %v2182
    %2363 = vmatprep.subr.mxu0 %v2185
    %2364 = vmatpush1.msra.mxu0 %v2184
    %2365 = vmatprep.subr.mxu0 %v2187
    %2366 = vmatpush1.msra.mxu0 %v2186
    %2367 = vmatprep.subr.mxu0 %v2189
    %2368 = vmatpush1.msra.mxu0 %v2188
    %2369 = vmatprep.subr.mxu0 %v2191
    %2370 = vmatpush1.msra.mxu0 %v2190
    %2371 = vmatprep.subr.mxu0 %v2193
    %2372 = vmatpush1.msra.mxu0 %v2192
    %2373 = vmatprep.subr.mxu0 %v2195
    %2374 = vmatpush1.msra.mxu0 %v2194
    %2375 = vmatprep.subr.mxu0 %v2197
    %2376 = vmatpush1.msra.mxu0 %v2196
    %2377 = vmatprep.subr.mxu0 %v2199
    %2378 = vmatpush1.msra.mxu0 %v2198
    %2379 = vmatprep.subr.mxu0 %v2201
    %2380 = vmatpush1.msra.mxu0 %v2200
    %2381 = vmatprep.subr.mxu0 %v2203
    %2382 = vmatpush1.msra.mxu0 %v2202
    %2383 = vmatprep.subr.mxu0 %v2205
    %2384 = vmatpush1.msra.mxu0 %v2204
    %2385 = vmatprep.subr.mxu0 %v2207
    %2386 = vmatpush1.msra.mxu0 %v2206
    %2387 = vmatprep.subr.mxu0 %v2209
    %2388 = vmatpush1.msra.mxu0 %v2208
    %2389 = vmatprep.subr.mxu0 %v2211
    %2390 = vmatpush1.msra.mxu0 %v2210
    %2391 = vmatprep.subr.mxu0 %v2213
    %2392 = vmatpush1.msra.mxu0 %v2212
    %2393 = vmatprep.subr.mxu0 %v2215
    %2394 = vmatpush1.msra.mxu0 %v2214
    %2395 = vmatprep.subr.mxu0 %v2217
    %2396 = vmatpush1.msra.mxu0 %v2216
    %2397 = vmatprep.subr.mxu0 %v2219
    %2398 = vmatpush1.msra.mxu0 %v2218
    %2399 = vmatprep.subr.mxu0 %v2221
    %2400 = vmatpush1.msra.mxu0 %v2220
    %2401 = vmatprep.subr.mxu0 %v2223
    %2402 = vmatpush1.msra.mxu0 %v2222
    %2403 = vmatprep.mubr.f32.mxu0 %v2094
    %2404 = vmatmul.mubr.f32.gmra.mrb[0].mxu0 %v2093
    %v2405 = vpop.f32.mrb[0].mxu0
    %v2406 = vadd.f32 %v2335, %v2405
    %v2407 = vpop.f32.mrb[0].mxu0
    %v2408 = vadd.f32 %v2337, %v2407
    %2409 = vdwg.mxu0
    %2410 = vmatprep.subr.mxu0 %v2225
    %2411 = vmatpush1.msra.mxu0 %v2224
    %2412 = vmatprep.subr.mxu0 %v2227
    %2413 = vmatpush1.msra.mxu0 %v2226
    %2414 = vmatprep.subr.mxu0 %v2229
    %2415 = vmatpush1.msra.mxu0 %v2228
    %2416 = vmatprep.subr.mxu0 %v2231
    %2417 = vmatpush1.msra.mxu0 %v2230
    %2418 = vmatprep.subr.mxu0 %v2233
    %2419 = vmatpush1.msra.mxu0 %v2232
    %2420 = vmatprep.subr.mxu0 %v2235
    %2421 = vmatpush1.msra.mxu0 %v2234
    %2422 = vmatprep.subr.mxu0 %v2237
    %2423 = vmatpush1.msra.mxu0 %v2236
    %2424 = vmatprep.subr.mxu0 %v2239
    %2425 = vmatpush1.msra.mxu0 %v2238
    %2426 = vmatprep.subr.mxu0 %v2241
    %2427 = vmatpush1.msra.mxu0 %v2240
    %2428 = vmatprep.subr.mxu0 %v2243
    %2429 = vmatpush1.msra.mxu0 %v2242
    %2430 = vmatprep.subr.mxu0 %v2245
    %2431 = vmatpush1.msra.mxu0 %v2244
    %2432 = vmatprep.subr.mxu0 %v2247
    %2433 = vmatpush1.msra.mxu0 %v2246
    %2434 = vmatprep.subr.mxu0 %v2249
    %2435 = vmatpush1.msra.mxu0 %v2248
    %2436 = vmatprep.subr.mxu0 %v2251
    %2437 = vmatpush1.msra.mxu0 %v2250
    %2438 = vmatprep.subr.mxu0 %v2253
    %2439 = vmatpush1.msra.mxu0 %v2252
    %2440 = vmatprep.subr.mxu0 %v2255
    %2441 = vmatpush1.msra.mxu0 %v2254
    %2442 = vmatprep.subr.mxu0 0.0
    %2443 = vmatpush1.msra.mxu0 0.0
    %2444 = vmatprep.subr.mxu0 0.0
    %2445 = vmatpush1.msra.mxu0 0.0
    %2446 = vmatprep.subr.mxu0 0.0
    %2447 = vmatpush1.msra.mxu0 0.0
    %2448 = vmatprep.subr.mxu0 0.0
    %2449 = vmatpush1.msra.mxu0 0.0
    %2450 = vmatprep.subr.mxu0 0.0
    %2451 = vmatpush1.msra.mxu0 0.0
    %2452 = vmatprep.subr.mxu0 0.0
    %2453 = vmatpush1.msra.mxu0 0.0
    %2454 = vmatprep.subr.mxu0 0.0
    %2455 = vmatpush1.msra.mxu0 0.0
    %2456 = vmatprep.subr.mxu0 0.0
    %2457 = vmatpush1.msra.mxu0 0.0
    %2458 = vmatprep.subr.mxu0 0.0
    %2459 = vmatpush1.msra.mxu0 0.0
    %2460 = vmatprep.subr.mxu0 0.0
    %2461 = vmatpush1.msra.mxu0 0.0
    %2462 = vmatprep.subr.mxu0 0.0
    %2463 = vmatpush1.msra.mxu0 0.0
    %2464 = vmatprep.subr.mxu0 0.0
    %2465 = vmatpush1.msra.mxu0 0.0
    %2466 = vmatprep.subr.mxu0 0.0
    %2467 = vmatpush1.msra.mxu0 0.0
    %2468 = vmatprep.subr.mxu0 0.0
    %2469 = vmatpush1.msra.mxu0 0.0
    %2470 = vmatprep.subr.mxu0 0.0
    %2471 = vmatpush1.msra.mxu0 0.0
    %2472 = vmatprep.subr.mxu0 0.0
    %2473 = vmatpush1.msra.mxu0 0.0
    %2474 = vmatprep.mubr.f32.mxu0 0.0
    %2475 = vmatmul.mubr.f32.gmra.mrb[0].mxu0 %v2095
    %v2476 = vpop.f32.mrb[0].mxu0
    %v2477 = vadd.f32 %v2406, %v2476
    %v2478 = vpop.f32.mrb[0].mxu0
    %v2479 = vadd.f32 %v2408, %v2478
    %2480 = vdwg.mxu0
    %v2481 = vmax.f32 %v2477, 0.0
    %v2482 = vmax.f32 %v2479, 0.0
    %v2483 = vld [vmem:[%s7] sm:$0xff]
    %v2484 = vld [vmem:[%s7 + $0x8] sm:$0xff]
    %v2485 = vld [vmem:[%s7 + $0x10] sm:$0xff]
    %v2486 = vld [vmem:[%s7 + $0x18] sm:$0xff]
    %v2487 = vld [vmem:[%s7 + $0x20] sm:$0xff]
    %v2488 = vld [vmem:[%s7 + $0x28] sm:$0xff]
    %v2489 = vld [vmem:[%s7 + $0x30] sm:$0xff]
    %v2490 = vld [vmem:[%s7 + $0x38] sm:$0xff]
    %v2491 = vld [vmem:[%s7 + $0x40] sm:$0xff]
    %v2492 = vld [vmem:[%s7 + $0x48] sm:$0xff]
    %v2493 = vld [vmem:[%s7 + $0x50] sm:$0xff]
    %v2494 = vld [vmem:[%s7 + $0x58] sm:$0xff]
    %v2495 = vld [vmem:[%s7 + $0x60] sm:$0xff]
    %v2496 = vld [vmem:[%s7 + $0x68] sm:$0xff]
    %v2497 = vld [vmem:[%s7 + $0x70] sm:$0xff]
    %v2498 = vld [vmem:[%s7 + $0x78] sm:$0xff]
    %v2499 = vld [vmem:[%s7 + $0x80] sm:$0xff]
    %v2500 = vld [vmem:[%s7 + $0x88] sm:$0xff]
    %v2501 = vld [vmem:[%s7 + $0x90] sm:$0xff]
    %v2502 = vld [vmem:[%s7 + $0x98] sm:$0xff]
    %v2503 = vld [vmem:[%s7 + $0xa0] sm:$0xff]
    %v2504 = vld [vmem:[%s7 + $0xa8] sm:$0xff]
    %v2505 = vld [vmem:[%s7 + $0xb0] sm:$0xff]
    %v2506 = vld [vmem:[%s7 + $0xb8] sm:$0xff]
    %v2507 = vld [vmem:[%s7 + $0xc0] sm:$0xff]
    %v2508 = vld [vmem:[%s7 + $0xc8] sm:$0xff]
    %v2509 = vld [vmem:[%s7 + $0xd0] sm:$0xff]
    %v2510 = vld [vmem:[%s7 + $0xd8] sm:$0xff]
    %v2511 = vld [vmem:[%s7 + $0xe0] sm:$0xff]
    %v2512 = vld [vmem:[%s7 + $0xe8] sm:$0xff]
    %v2513 = vld [vmem:[%s7 + $0xf0] sm:$0xff]
    %v2514 = vld [vmem:[%s7 + $0xf8] sm:$0xff]
    %v2515 = vld [vmem:[%s8] sm:$0x1]
    %v2517 = vlaneseq
    %v2518 = vshrl.u32 %v2517, 7
    %v2519 = vsub.s32 0, %v2518
    %v2520 = vrot.slane %v2515, %v2519
    %2522 = vmatprep.subr.mxu0 0.0
    %2523 = vmatpush1.msra.mxu0 %v2483
    %2524 = vmatprep.subr.mxu0 0.0
    %2525 = vmatpush1.msra.mxu0 %v2484
    %2526 = vmatprep.subr.mxu0 0.0
    %2527 = vmatpush1.msra.mxu0 %v2485
    %2528 = vmatprep.subr.mxu0 0.0
    %2529 = vmatpush1.msra.mxu0 %v2486
    %2530 = vmatprep.subr.mxu0 0.0
    %2531 = vmatpush1.msra.mxu0 %v2487
    %2532 = vmatprep.subr.mxu0 0.0
    %2533 = vmatpush1.msra.mxu0 %v2488
    %2534 = vmatprep.subr.mxu0 0.0
    %2535 = vmatpush1.msra.mxu0 %v2489
    %2536 = vmatprep.subr.mxu0 0.0
    %2537 = vmatpush1.msra.mxu0 %v2490
    %2538 = vmatprep.subr.mxu0 0.0
    %2539 = vmatpush1.msra.mxu0 %v2491
    %2540 = vmatprep.subr.mxu0 0.0
    %2541 = vmatpush1.msra.mxu0 %v2492
    %2542 = vmatprep.subr.mxu0 0.0
    %2543 = vmatpush1.msra.mxu0 %v2493
    %2544 = vmatprep.subr.mxu0 0.0
    %2545 = vmatpush1.msra.mxu0 %v2494
    %2546 = vmatprep.subr.mxu0 0.0
    %2547 = vmatpush1.msra.mxu0 %v2495
    %2548 = vmatprep.subr.mxu0 0.0
    %2549 = vmatpush1.msra.mxu0 %v2496
    %2550 = vmatprep.subr.mxu0 0.0
    %2551 = vmatpush1.msra.mxu0 %v2497
    %2552 = vmatprep.subr.mxu0 0.0
    %2553 = vmatpush1.msra.mxu0 %v2498
    %2554 = vmatprep.subr.mxu0 0.0
    %2555 = vmatpush1.msra.mxu0 %v2499
    %2556 = vmatprep.subr.mxu0 0.0
    %2557 = vmatpush1.msra.mxu0 %v2500
    %2558 = vmatprep.subr.mxu0 0.0
    %2559 = vmatpush1.msra.mxu0 %v2501
    %2560 = vmatprep.subr.mxu0 0.0
    %2561 = vmatpush1.msra.mxu0 %v2502
    %2562 = vmatprep.subr.mxu0 0.0
    %2563 = vmatpush1.msra.mxu0 %v2503
    %2564 = vmatprep.subr.mxu0 0.0
    %2565 = vmatpush1.msra.mxu0 %v2504
    %2566 = vmatprep.subr.mxu0 0.0
    %2567 = vmatpush1.msra.mxu0 %v2505
    %2568 = vmatprep.subr.mxu0 0.0
    %2569 = vmatpush1.msra.mxu0 %v2506
    %2570 = vmatprep.subr.mxu0 0.0
    %2571 = vmatpush1.msra.mxu0 %v2507
    %2572 = vmatprep.subr.mxu0 0.0
    %2573 = vmatpush1.msra.mxu0 %v2508
    %2574 = vmatprep.subr.mxu0 0.0
    %2575 = vmatpush1.msra.mxu0 %v2509
    %2576 = vmatprep.subr.mxu0 0.0
    %2577 = vmatpush1.msra.mxu0 %v2510
    %2578 = vmatprep.subr.mxu0 0.0
    %2579 = vmatpush1.msra.mxu0 %v2511
    %2580 = vmatprep.subr.mxu0 0.0
    %2581 = vmatpush1.msra.mxu0 %v2512
    %2582 = vmatprep.subr.mxu0 0.0
    %2583 = vmatpush1.msra.mxu0 %v2513
    %2584 = vmatprep.subr.mxu0 0.0
    %2585 = vmatpush1.msra.mxu0 %v2514
    %2586 = vmatprep.mubr.f32.mxu0 %v2482
    %2587 = vmatmul.mubr.f32.gmra.mrb[0].mxu0 %v2481
    %v2588 = vpop.f32.mrb[0].mxu0
    %v2589 = vadd.f32 %v2520, %v2588
    %v2590 = vpop.f32.mrb[0].mxu0
    %2591 = vdwg.mxu0
    %v2592 = vmax.f32 %v2589, 0.0
    %v2593 = vld [vmem:[%s9] sm:$0xff]
    %v2594 = vld [vmem:[%s9 + $0x8] sm:$0xff]
    %v2595 = vld [vmem:[%s9 + $0x10] sm:$0xff]
    %v2596 = vld [vmem:[%s9 + $0x18] sm:$0xff]
    %v2597 = vld [vmem:[%s9 + $0x20] sm:$0xff]
    %v2598 = vld [vmem:[%s9 + $0x28] sm:$0xff]
    %v2599 = vld [vmem:[%s9 + $0x30] sm:$0xff]
    %v2600 = vld [vmem:[%s9 + $0x38] sm:$0xff]
    %v2601 = vld [vmem:[%s9 + $0x40] sm:$0xff]
    %v2602 = vld [vmem:[%s9 + $0x48] sm:$0xff]
    %v2603 = vld [vmem:[%s9 + $0x50] sm:$0xff]
    %v2604 = vld [vmem:[%s9 + $0x58] sm:$0xff]
    %v2605 = vld [vmem:[%s9 + $0x60] sm:$0xff]
    %v2606 = vld [vmem:[%s9 + $0x68] sm:$0xff]
    %v2607 = vld [vmem:[%s9 + $0x70] sm:$0xff]
    %v2608 = vld [vmem:[%s9 + $0x78] sm:$0xff]
    %v2609 = vld [vmem:[%s10] sm:$0x1]
    %v2611 = vlaneseq
    %v2612 = vshrl.u32 %v2611, 7
    %v2613 = vsub.s32 0, %v2612
    %v2614 = vrot.slane %v2609, %v2613
    %2616 = vmatprep.subr.mxu0 0.0
    %2617 = vmatpush1.msra.mxu0 %v2593
    %2618 = vmatprep.subr.mxu0 0.0
    %2619 = vmatpush1.msra.mxu0 %v2594
    %2620 = vmatprep.subr.mxu0 0.0
    %2621 = vmatpush1.msra.mxu0 %v2595
    %2622 = vmatprep.subr.mxu0 0.0
    %2623 = vmatpush1.msra.mxu0 %v2596
    %2624 = vmatprep.subr.mxu0 0.0
    %2625 = vmatpush1.msra.mxu0 %v2597
    %2626 = vmatprep.subr.mxu0 0.0
    %2627 = vmatpush1.msra.mxu0 %v2598
    %2628 = vmatprep.subr.mxu0 0.0
    %2629 = vmatpush1.msra.mxu0 %v2599
    %2630 = vmatprep.subr.mxu0 0.0
    %2631 = vmatpush1.msra.mxu0 %v2600
    %2632 = vmatprep.subr.mxu0 0.0
    %2633 = vmatpush1.msra.mxu0 %v2601
    %2634 = vmatprep.subr.mxu0 0.0
    %2635 = vmatpush1.msra.mxu0 %v2602
    %2636 = vmatprep.subr.mxu0 0.0
    %2637 = vmatpush1.msra.mxu0 %v2603
    %2638 = vmatprep.subr.mxu0 0.0
    %2639 = vmatpush1.msra.mxu0 %v2604
    %2640 = vmatprep.subr.mxu0 0.0
    %2641 = vmatpush1.msra.mxu0 %v2605
    %2642 = vmatprep.subr.mxu0 0.0
    %2643 = vmatpush1.msra.mxu0 %v2606
    %2644 = vmatprep.subr.mxu0 0.0
    %2645 = vmatpush1.msra.mxu0 %v2607
    %2646 = vmatprep.subr.mxu0 0.0
    %2647 = vmatpush1.msra.mxu0 %v2608
    %2648 = vmatprep.subr.mxu0 0.0
    %2649 = vmatpush1.msra.mxu0 0.0
    %2650 = vmatprep.subr.mxu0 0.0
    %2651 = vmatpush1.msra.mxu0 0.0
    %2652 = vmatprep.subr.mxu0 0.0
    %2653 = vmatpush1.msra.mxu0 0.0
    %2654 = vmatprep.subr.mxu0 0.0
    %2655 = vmatpush1.msra.mxu0 0.0
    %2656 = vmatprep.subr.mxu0 0.0
    %2657 = vmatpush1.msra.mxu0 0.0
    %2658 = vmatprep.subr.mxu0 0.0
    %2659 = vmatpush1.msra.mxu0 0.0
    %2660 = vmatprep.subr.mxu0 0.0
    %2661 = vmatpush1.msra.mxu0 0.0
    %2662 = vmatprep.subr.mxu0 0.0
    %2663 = vmatpush1.msra.mxu0 0.0
    %2664 = vmatprep.subr.mxu0 0.0
    %2665 = vmatpush1.msra.mxu0 0.0
    %2666 = vmatprep.subr.mxu0 0.0
    %2667 = vmatpush1.msra.mxu0 0.0
    %2668 = vmatprep.subr.mxu0 0.0
    %2669 = vmatpush1.msra.mxu0 0.0
    %2670 = vmatprep.subr.mxu0 0.0
    %2671 = vmatpush1.msra.mxu0 0.0
    %2672 = vmatprep.subr.mxu0 0.0
    %2673 = vmatpush1.msra.mxu0 0.0
    %2674 = vmatprep.subr.mxu0 0.0
    %2675 = vmatpush1.msra.mxu0 0.0
    %2676 = vmatprep.subr.mxu0 0.0
    %2677 = vmatpush1.msra.mxu0 0.0
    %2678 = vmatprep.subr.mxu0 0.0
    %2679 = vmatpush1.msra.mxu0 0.0
    %2680 = vmatprep.mubr.f32.mxu0 0.0
    %2681 = vmatmul.mubr.f32.gmra.mrb[0].mxu0 %v2592
    %v2682 = vpop.f32.mrb[0].mxu0
    %v2683 = vadd.f32 %v2614, %v2682
    %v2684 = vpop.f32.mrb[0].mxu0
    %2685 = vdwg.mxu0
    %2686 = vst [vmem:[#allocation11] sm:$0x3] %v2683
    // Predicated region
    $region58: #{_lenet_logits.1} parent=1 // pred_check
      _
    $region59: #{_lenet_logits.1} parent=1 // pred_check_branch
      %2688 = sbr.rel (0) target = $region61
    $region60: #{_lenet_logits.1} parent=1 // pred_region
      %s2690 = ssub.s32 32, 32
      %2691 = vsyncadd [#allocation7], %s2690
      %s2693 = sshll.u32 [#allocation11], 4
      %s2694 = int_to_ptr.vmem [resolvable:$true] %s2693
      %2696 = dma.vmem_to_hbm [thread:$0]  %s2694, 32, %s11, [#allocation7]
    $region61: #{_lenet_logits.1} parent=1 // pred_fallthru
      _
    // Predicated region
    $region62: #{_lenet_logits.1} parent=1 // pred_check
      _
    $region63: #{_lenet_logits.1} parent=1 // pred_check_branch
      %2698 = sbr.rel (0) target = $region65
    $region64: #{_lenet_logits.1} parent=1 // pred_region
      %2699 = dma.done [#allocation7], 32
    $region65: #{_lenet_logits.1} parent=1 // pred_fallthru
      _
    %2700 = vsyncpa [#allocation6], 1
    %2701 = vsyncpa [#allocation9], 1
    %2702 = vsyncpa [#allocation7], 1

</llo_original>
